<compile_context>
chip_gen: v7x
topology: tpu7x:2x2x1
jax: 0.10.0
libtpu: 0.0.40
codegen_flags: <defaults>
</compile_context>

<pallas_src>
import functools

import jax
import jax.numpy as jnp
from jax.experimental import pallas as pl
from jax.experimental.pallas import tpu as pltpu

LANE = 128
_HIGHEST = jax.lax.Precision.HIGHEST   # fp32 contract precision on the MXU


def _round_up(n, m):
    return ((n + m - 1) // m) * m


def deep_ritz_kernel(x_ref,
                     w1_ref, b1_ref,
                     w2_ref, b2_ref,
                     w3_ref, b3_ref,
                     w4_ref, b4_ref,
                     w5_ref, b5_ref,
                     out_ref,
                     xpad_ref):
    # x_ref:   (TB, IS)  f32 (true input width, no HBM padding)
    # wN_ref:  f32 lane-padded transposed weights; bN_ref: f32 (1, HP)/(1, OS)
    # out_ref: (TB, OS)  f32 (narrow, un-padded store)
    # xpad_ref: VMEM scratch (TB, HP) f32, used to lane-pad x exactly on the VPU.
    x = x_ref[...]                                              # (TB, IS) f32

    # Exact lane-pad of x to HP lanes: zero scratch, masked-store x into the
    # first IS lanes, read back.  Pure VPU / store path -> residual add stays
    # bit-exact f32, and no MXU op / extra HBM stream is needed for it.
    xpad_ref[...] = jnp.zeros_like(xpad_ref)
    xpad_ref[:, :x.shape[1]] = x
    xp = xpad_ref[...]                                          # (TB, HP)

    def lin(v, w_ref, b_ref):
        # f32 MXU matmul with fp32 contract precision + f32 bias add.
        return (jnp.dot(v, w_ref[...], preferred_element_type=jnp.float32,
                        precision=_HIGHEST)
                + b_ref[...])

    def act(v):                                                 # ReLU(v)^3
        r = jnp.maximum(v, 0.0)
        return r * r * r

    h = act(lin(x, w1_ref, b1_ref))          # act(fc1(x))
    y = act(lin(h, w2_ref, b2_ref)) + xp     # act(fc2(.)) ; y[:, :IS] += x
    z = act(lin(y, w3_ref, b3_ref))          # act(fc3(y))
    z = act(lin(z, w4_ref, b4_ref))          # act(fc4(.))
    y = z + y                                # residual
    out_ref[...] = lin(y, w5_ref, b5_ref).astype(out_ref.dtype)   # fc5


def prepare_params(params, *, input_size, hidden_size, output_size):
    """Zero-pad hidden dims to a lane multiple ONCE per param set (f32 kept)."""
    HP = _round_up(hidden_size, LANE)

    def pad_w(w, rows, cols):
        out = jnp.zeros((rows, cols), jnp.float32)
        return out.at[:w.shape[0], :w.shape[1]].set(w.astype(jnp.float32))

    def pad_b(b, cols):
        return jnp.zeros((1, cols), jnp.float32).at[:, :b.shape[1]].set(b)

    return {
        "w1": pad_w(params["w1"], input_size, HP), "b1": pad_b(params["b1"], HP),
        "w2": pad_w(params["w2"], HP, HP),         "b2": pad_b(params["b2"], HP),
        "w3": pad_w(params["w3"], HP, HP),         "b3": pad_b(params["b3"], HP),
        "w4": pad_w(params["w4"], HP, HP),         "b4": pad_b(params["b4"], HP),
        # fc5 keeps its true (narrow) output width -> narrow output store.
        "w5": pad_w(params["w5"], HP, output_size),
        "b5": pad_b(params["b5"], output_size),
    }


def deep_ritz_forward(x, prep, *, input_size, hidden_size, output_size,
                      batch_tile=None):
    """x: (B, input_size) f32.  prep: output of prepare_params."""
    B, IS = x.shape
    assert IS == input_size
    HP = prep["w2"].shape[0]
    OS = output_size

    if batch_tile is None:
        if B > 512:
            batch_tile = 512            # amortize ~0.35us/step grid overhead
        elif B >= 16 and B % 16 == 0:
            batch_tile = B // 2         # >= 2 grid steps so both v7x TCs work
        else:
            batch_tile = B
    grid = (pl.cdiv(B, batch_tile),)    # tail tile OK: rows are independent

    const = lambda shape: pl.BlockSpec(shape, lambda i: (0, 0))   # resident blocks

    flops = 2 * B * (IS * HP + 3 * HP * HP + HP * OS)
    bytes_accessed = int(x.size * 4 + B * OS * 4
                         + sum(int(v.size) * v.dtype.itemsize for v in prep.values()))
    cost = pl.CostEstimate(flops=flops, transcendentals=0,
                           bytes_accessed=bytes_accessed)

    return pl.pallas_call(
        deep_ritz_kernel,
        out_shape=jax.ShapeDtypeStruct((B, OS), jnp.float32),
        grid=grid,
        in_specs=[
            pl.BlockSpec((batch_tile, IS), lambda i: (i, 0)),   # x
            const((IS, HP)), const((1, HP)),                    # w1, b1
            const((HP, HP)), const((1, HP)),                    # w2, b2
            const((HP, HP)), const((1, HP)),                    # w3, b3
            const((HP, HP)), const((1, HP)),                    # w4, b4
            const((HP, OS)), const((1, OS)),                    # w5, b5
        ],
        out_specs=pl.BlockSpec((batch_tile, OS), lambda i: (i, 0)),
        scratch_shapes=[pltpu.VMEM((batch_tile, HP), jnp.float32)],  # lane-pad of x
        compiler_params=pltpu.CompilerParams(
            dimension_semantics=("parallel",)),
        cost_estimate=cost,
    )(x,
      prep["w1"], prep["b1"],
      prep["w2"], prep["b2"],
      prep["w3"], prep["b3"],
      prep["w4"], prep["b4"],
      prep["w5"], prep["b5"])


def init_params(key, input_size, hidden_size, output_size):
    """Deterministic synthetic init. Weights stored TRANSPOSED: (in, out)."""
    ks = jax.random.split(key, 10)

    def lin_init(kw, kb, fan_in, fan_out):
        bound = 1.0 / jnp.sqrt(fan_in)
        w = jax.random.uniform(kw, (fan_in, fan_out), jnp.float32, -bound, bound)
        b = jax.random.uniform(kb, (1, fan_out), jnp.float32, -bound, bound)
        return w, b

    p = {}
    p["w1"], p["b1"] = lin_init(ks[0], ks[1], input_size, hidden_size)
    p["w2"], p["b2"] = lin_init(ks[2], ks[3], hidden_size, hidden_size)
    p["w3"], p["b3"] = lin_init(ks[4], ks[5], hidden_size, hidden_size)
    p["w4"], p["b4"] = lin_init(ks[6], ks[7], hidden_size, hidden_size)
    p["w5"], p["b5"] = lin_init(ks[8], ks[9], hidden_size, output_size)
    return p


def deep_ritz_ref(x, params, *, input_size):
    """Pure-JAX f32 reference mirroring the PyTorch forward exactly.
    precision=HIGHEST so XLA does not silently drop the reference to bf16."""
    act = lambda v: jnp.maximum(v, 0.0) ** 3
    lin = lambda v, w, b: jnp.dot(v, w, precision=_HIGHEST) + b
    y = act(lin(act(lin(x, params["w1"], params["b1"])),
                params["w2"], params["b2"]))
    y = y.at[:, :input_size].add(x)
    y = act(lin(act(lin(y, params["w3"], params["b3"])),
                params["w4"], params["b4"])) + y
    return lin(y, params["w5"], params["b5"])


if __name__ == "__main__":
    input_size, hidden_size, output_size = 8, 32, 4
    batch = 16

    key = jax.random.PRNGKey(0)
    k_x, k_p = jax.random.split(key)
    x = jax.random.normal(k_x, (batch, input_size), jnp.float32)
    params = init_params(k_p, input_size, hidden_size, output_size)

    # Pad weights once (hoisted out of the forward pass).
    prep = prepare_params(params, input_size=input_size,
                          hidden_size=hidden_size, output_size=output_size)

    fwd = jax.jit(functools.partial(deep_ritz_forward,
                                    input_size=input_size,
                                    hidden_size=hidden_size,
                                    output_size=output_size))
    out = jax.block_until_ready(fwd(x, prep))

    ref = deep_ritz_ref(x, params, input_size=input_size)
    assert out.shape == (batch, output_size)
    # Both sides are full-f32 now; observed error is ~1e-6 (assert kept loose).
    rel_err = float(jnp.max(jnp.abs(out - ref)) / (jnp.max(jnp.abs(ref)) + 1e-8))
    assert rel_err < 5e-2, f"mismatch vs reference, rel_err={rel_err}"
    print("KERNEL_OK")
</pallas_src>

<mosaic_0001>
module attributes {stable_mosaic.version = 11 : i64} {
  func.func @deep_ritz_kernel(%arg0: i32, %arg1: memref<8x8xf32, #tpu.memory_space<vmem>>, %arg2: memref<8x128xf32, #tpu.memory_space<vmem>>, %arg3: memref<1x128xf32, #tpu.memory_space<vmem>>, %arg4: memref<128x128xf32, #tpu.memory_space<vmem>>, %arg5: memref<1x128xf32, #tpu.memory_space<vmem>>, %arg6: memref<128x128xf32, #tpu.memory_space<vmem>>, %arg7: memref<1x128xf32, #tpu.memory_space<vmem>>, %arg8: memref<128x128xf32, #tpu.memory_space<vmem>>, %arg9: memref<1x128xf32, #tpu.memory_space<vmem>>, %arg10: memref<128x4xf32, #tpu.memory_space<vmem>>, %arg11: memref<1x4xf32, #tpu.memory_space<vmem>>, %arg12: memref<8x4xf32, #tpu.memory_space<vmem>>, %arg13: memref<8x128xf32, #tpu.memory_space<vmem>>) attributes {dimension_semantics = [#tpu.dimension_semantics<parallel>], iteration_bounds = array<i64: 2>, scalar_prefetch = 0 : i64, scratch_operands = 1 : i64, tpu.core_type = #tpu.core_type<tc>, window_params = [{transform_indices = @transform_0, window_bounds = array<i64: 8, 8>}, {pipeline_mode = #tpu.pipeline_mode<synchronous>, transform_indices = @transform_1, window_bounds = array<i64: 8, 128>}, {pipeline_mode = #tpu.pipeline_mode<synchronous>, transform_indices = @transform_2, window_bounds = array<i64: 1, 128>}, {pipeline_mode = #tpu.pipeline_mode<synchronous>, transform_indices = @transform_3, window_bounds = array<i64: 128, 128>}, {pipeline_mode = #tpu.pipeline_mode<synchronous>, transform_indices = @transform_4, window_bounds = array<i64: 1, 128>}, {pipeline_mode = #tpu.pipeline_mode<synchronous>, transform_indices = @transform_5, window_bounds = array<i64: 128, 128>}, {pipeline_mode = #tpu.pipeline_mode<synchronous>, transform_indices = @transform_6, window_bounds = array<i64: 1, 128>}, {pipeline_mode = #tpu.pipeline_mode<synchronous>, transform_indices = @transform_7, window_bounds = array<i64: 128, 128>}, {pipeline_mode = #tpu.pipeline_mode<synchronous>, transform_indices = @transform_8, window_bounds = array<i64: 1, 128>}, {pipeline_mode = #tpu.pipeline_mode<synchronous>, transform_indices = @transform_9, window_bounds = array<i64: 128, 4>}, {pipeline_mode = #tpu.pipeline_mode<synchronous>, transform_indices = @transform_10, window_bounds = array<i64: 1, 4>}, {transform_indices = @transform_11, window_bounds = array<i64: 8, 4>}]} {
    %c0 = arith.constant 0 : index
    %c0_0 = arith.constant 0 : index
    %0 = vector.load %arg1[%c0, %c0_0] : memref<8x8xf32, #tpu.memory_space<vmem>>, vector<8x8xf32>
    %cst = arith.constant 0.000000e+00 : f32
    %1 = vector.broadcast %cst : f32 to vector<8x128xf32>
    %c0_1 = arith.constant 0 : index
    %c0_2 = arith.constant 0 : index
    %2 = vector.load %arg13[%c0_1, %c0_2] : memref<8x128xf32, #tpu.memory_space<vmem>>, vector<8x128xf32>
    tpu.vector_store %arg13[%c0_1, %c0_2], %1 {strides = array<i32>} : memref<8x128xf32, #tpu.memory_space<vmem>>, vector<8x128xf32>,
    %c0_3 = arith.constant 0 : index
    %c0_4 = arith.constant 0 : index
    %3 = vector.load %arg13[%c0_3, %c0_4] : memref<8x128xf32, #tpu.memory_space<vmem>>, vector<8x8xf32>
    tpu.vector_store %arg13[%c0_3, %c0_4], %0 {strides = array<i32>} : memref<8x128xf32, #tpu.memory_space<vmem>>, vector<8x8xf32>,
    %c0_5 = arith.constant 0 : index
    %c0_6 = arith.constant 0 : index
    %4 = vector.load %arg13[%c0_5, %c0_6] : memref<8x128xf32, #tpu.memory_space<vmem>>, vector<8x128xf32>
    %c0_7 = arith.constant 0 : index
    %c0_8 = arith.constant 0 : index
    %5 = vector.load %arg2[%c0_7, %c0_8] : memref<8x128xf32, #tpu.memory_space<vmem>>, vector<8x128xf32>
    %cst_9 = arith.constant dense<0.000000e+00> : vector<8x128xf32>
    %6 = tpu.matmul %0, %5, %cst_9 {dimension_numbers = #tpu.dot_dimension_numbers<[1], [0], [0], [1], [0, 0, 1, 1], [], []>, precision = #tpu.contract_precision<fp32>} : vector<8x8xf32>, vector<8x128xf32>, vector<8x128xf32> -> vector<8x128xf32>
    %c0_10 = arith.constant 0 : index
    %c0_11 = arith.constant 0 : index
    %7 = vector.load %arg3[%c0_10, %c0_11] : memref<1x128xf32, #tpu.memory_space<vmem>>, vector<1x128xf32>
    %8 = vector.broadcast %7 : vector<1x128xf32> to vector<8x128xf32>
    %9 = arith.addf %6, %8 : vector<8x128xf32>
    %cst_12 = arith.constant 0.000000e+00 : f32
    %10 = vector.broadcast %cst_12 : f32 to vector<8x128xf32>
    %11 = arith.maximumf %9, %10 : vector<8x128xf32>
    %12 = arith.mulf %11, %11 : vector<8x128xf32>
    %13 = arith.mulf %12, %11 : vector<8x128xf32>
    %c0_13 = arith.constant 0 : index
    %c0_14 = arith.constant 0 : index
    %14 = vector.load %arg4[%c0_13, %c0_14] : memref<128x128xf32, #tpu.memory_space<vmem>>, vector<128x128xf32>
    %cst_15 = arith.constant dense<0.000000e+00> : vector<8x128xf32>
    %15 = tpu.matmul %13, %14, %cst_15 {dimension_numbers = #tpu.dot_dimension_numbers<[1], [0], [0], [1], [0, 0, 1, 1], [], []>, precision = #tpu.contract_precision<fp32>} : vector<8x128xf32>, vector<128x128xf32>, vector<8x128xf32> -> vector<8x128xf32>
    %c0_16 = arith.constant 0 : index
    %c0_17 = arith.constant 0 : index
    %16 = vector.load %arg5[%c0_16, %c0_17] : memref<1x128xf32, #tpu.memory_space<vmem>>, vector<1x128xf32>
    %17 = vector.broadcast %16 : vector<1x128xf32> to vector<8x128xf32>
    %18 = arith.addf %15, %17 : vector<8x128xf32>
    %cst_18 = arith.constant 0.000000e+00 : f32
    %19 = vector.broadcast %cst_18 : f32 to vector<8x128xf32>
    %20 = arith.maximumf %18, %19 : vector<8x128xf32>
    %21 = arith.mulf %20, %20 : vector<8x128xf32>
    %22 = arith.mulf %21, %20 : vector<8x128xf32>
    %23 = arith.addf %22, %4 : vector<8x128xf32>
    %c0_19 = arith.constant 0 : index
    %c0_20 = arith.constant 0 : index
    %24 = vector.load %arg6[%c0_19, %c0_20] : memref<128x128xf32, #tpu.memory_space<vmem>>, vector<128x128xf32>
    %cst_21 = arith.constant dense<0.000000e+00> : vector<8x128xf32>
    %25 = tpu.matmul %23, %24, %cst_21 {dimension_numbers = #tpu.dot_dimension_numbers<[1], [0], [0], [1], [0, 0, 1, 1], [], []>, precision = #tpu.contract_precision<fp32>} : vector<8x128xf32>, vector<128x128xf32>, vector<8x128xf32> -> vector<8x128xf32>
    %c0_22 = arith.constant 0 : index
    %c0_23 = arith.constant 0 : index
    %26 = vector.load %arg7[%c0_22, %c0_23] : memref<1x128xf32, #tpu.memory_space<vmem>>, vector<1x128xf32>
    %27 = vector.broadcast %26 : vector<1x128xf32> to vector<8x128xf32>
    %28 = arith.addf %25, %27 : vector<8x128xf32>
    %cst_24 = arith.constant 0.000000e+00 : f32
    %29 = vector.broadcast %cst_24 : f32 to vector<8x128xf32>
    %30 = arith.maximumf %28, %29 : vector<8x128xf32>
    %31 = arith.mulf %30, %30 : vector<8x128xf32>
    %32 = arith.mulf %31, %30 : vector<8x128xf32>
    %c0_25 = arith.constant 0 : index
    %c0_26 = arith.constant 0 : index
    %33 = vector.load %arg8[%c0_25, %c0_26] : memref<128x128xf32, #tpu.memory_space<vmem>>, vector<128x128xf32>
    %cst_27 = arith.constant dense<0.000000e+00> : vector<8x128xf32>
    %34 = tpu.matmul %32, %33, %cst_27 {dimension_numbers = #tpu.dot_dimension_numbers<[1], [0], [0], [1], [0, 0, 1, 1], [], []>, precision = #tpu.contract_precision<fp32>} : vector<8x128xf32>, vector<128x128xf32>, vector<8x128xf32> -> vector<8x128xf32>
    %c0_28 = arith.constant 0 : index
    %c0_29 = arith.constant 0 : index
    %35 = vector.load %arg9[%c0_28, %c0_29] : memref<1x128xf32, #tpu.memory_space<vmem>>, vector<1x128xf32>
    %36 = vector.broadcast %35 : vector<1x128xf32> to vector<8x128xf32>
    %37 = arith.addf %34, %36 : vector<8x128xf32>
    %cst_30 = arith.constant 0.000000e+00 : f32
    %38 = vector.broadcast %cst_30 : f32 to vector<8x128xf32>
    %39 = arith.maximumf %37, %38 : vector<8x128xf32>
    %40 = arith.mulf %39, %39 : vector<8x128xf32>
    %41 = arith.mulf %40, %39 : vector<8x128xf32>
    %42 = arith.addf %41, %23 : vector<8x128xf32>
    %c0_31 = arith.constant 0 : index
    %c0_32 = arith.constant 0 : index
    %43 = vector.load %arg10[%c0_31, %c0_32] : memref<128x4xf32, #tpu.memory_space<vmem>>, vector<128x4xf32>
    %cst_33 = arith.constant dense<0.000000e+00> : vector<8x4xf32>
    %44 = tpu.matmul %42, %43, %cst_33 {dimension_numbers = #tpu.dot_dimension_numbers<[1], [0], [0], [1], [0, 0, 1, 1], [], []>, precision = #tpu.contract_precision<fp32>} : vector<8x128xf32>, vector<128x4xf32>, vector<8x4xf32> -> vector<8x4xf32>
    %c0_34 = arith.constant 0 : index
    %c0_35 = arith.constant 0 : index
    %45 = vector.load %arg11[%c0_34, %c0_35] : memref<1x4xf32, #tpu.memory_space<vmem>>, vector<1x4xf32>
    %46 = vector.broadcast %45 : vector<1x4xf32> to vector<8x4xf32>
    %47 = arith.addf %44, %46 : vector<8x4xf32>
    %c0_36 = arith.constant 0 : index
    %c0_37 = arith.constant 0 : index
    %48 = vector.load %arg12[%c0_36, %c0_37] : memref<8x4xf32, #tpu.memory_space<vmem>>, vector<8x4xf32>
    tpu.vector_store %arg12[%c0_36, %c0_37], %47 {strides = array<i32>} : memref<8x4xf32, #tpu.memory_space<vmem>>, vector<8x4xf32>,
    return
  }
  func.func @transform_0(%arg0: i32) -> (i32, i32) {
    %c0_i32 = arith.constant 0 : i32
    %c0_i32_0 = arith.constant 0 : i32
    return %arg0, %c0_i32 : i32, i32
  }
  func.func @transform_1(%arg0: i32) -> (i32, i32) {
    %c0_i32 = arith.constant 0 : i32
    %c0_i32_0 = arith.constant 0 : i32
    %c0_i32_1 = arith.constant 0 : i32
    return %c0_i32, %c0_i32_0 : i32, i32
  }
  func.func @transform_2(%arg0: i32) -> (i32, i32) {
    %c0_i32 = arith.constant 0 : i32
    %c0_i32_0 = arith.constant 0 : i32
    %c0_i32_1 = arith.constant 0 : i32
    return %c0_i32, %c0_i32_0 : i32, i32
  }
  func.func @transform_3(%arg0: i32) -> (i32, i32) {
    %c0_i32 = arith.constant 0 : i32
    %c0_i32_0 = arith.constant 0 : i32
    %c0_i32_1 = arith.constant 0 : i32
    return %c0_i32, %c0_i32_0 : i32, i32
  }
  func.func @transform_4(%arg0: i32) -> (i32, i32) {
    %c0_i32 = arith.constant 0 : i32
    %c0_i32_0 = arith.constant 0 : i32
    %c0_i32_1 = arith.constant 0 : i32
    return %c0_i32, %c0_i32_0 : i32, i32
  }
  func.func @transform_5(%arg0: i32) -> (i32, i32) {
    %c0_i32 = arith.constant 0 : i32
    %c0_i32_0 = arith.constant 0 : i32
    %c0_i32_1 = arith.constant 0 : i32
    return %c0_i32, %c0_i32_0 : i32, i32
  }
  func.func @transform_6(%arg0: i32) -> (i32, i32) {
    %c0_i32 = arith.constant 0 : i32
    %c0_i32_0 = arith.constant 0 : i32
    %c0_i32_1 = arith.constant 0 : i32
    return %c0_i32, %c0_i32_0 : i32, i32
  }
  func.func @transform_7(%arg0: i32) -> (i32, i32) {
    %c0_i32 = arith.constant 0 : i32
    %c0_i32_0 = arith.constant 0 : i32
    %c0_i32_1 = arith.constant 0 : i32
    return %c0_i32, %c0_i32_0 : i32, i32
  }
  func.func @transform_8(%arg0: i32) -> (i32, i32) {
    %c0_i32 = arith.constant 0 : i32
    %c0_i32_0 = arith.constant 0 : i32
    %c0_i32_1 = arith.constant 0 : i32
    return %c0_i32, %c0_i32_0 : i32, i32
  }
  func.func @transform_9(%arg0: i32) -> (i32, i32) {
    %c0_i32 = arith.constant 0 : i32
    %c0_i32_0 = arith.constant 0 : i32
    %c0_i32_1 = arith.constant 0 : i32
    return %c0_i32, %c0_i32_0 : i32, i32
  }
  func.func @transform_10(%arg0: i32) -> (i32, i32) {
    %c0_i32 = arith.constant 0 : i32
    %c0_i32_0 = arith.constant 0 : i32
    %c0_i32_1 = arith.constant 0 : i32
    return %c0_i32, %c0_i32_0 : i32, i32
  }
  func.func @transform_11(%arg0: i32) -> (i32, i32) {
    %c0_i32 = arith.constant 0 : i32
    %c0_i32_0 = arith.constant 0 : i32
    return %arg0, %c0_i32 : i32, i32
  }
}

</mosaic_0001>

<llo_original>
// kernel: deep_ritz_forward.1
$region0: #{deep_ritz_forward.1}
  #allocation0 [shape = 'u32[]', space=smem, size = 0x4, offset = 0x4, fixed_abs, tag = 'smem constant byte address 0x4 - core index']
  #allocation1 [shape = 'u32[144,128]{1,0:T(1,128)}', space=vmem, size = 0x12000, scoped, tag = 'internal scratch']
  #allocation2 [shape = 'f32[8,128]{1,0:T(8,128)}', space=vmem, size = 0x1000, scoped, tag = 'scratch operand']
  %s0 = inlined_call_operand.vmem [shape: f32[16,8], index: 0, kind: input, shape index: {}]
  %s1 = inlined_call_operand.vmem [shape: f32[8,128], index: 1, kind: input, shape index: {}]
  %s2 = inlined_call_operand.vmem [shape: f32[1,128], index: 2, kind: input, shape index: {}]
  %s3 = inlined_call_operand.vmem [shape: f32[128,128], index: 3, kind: input, shape index: {}]
  %s4 = inlined_call_operand.vmem [shape: f32[1,128], index: 4, kind: input, shape index: {}]
  %s5 = inlined_call_operand.hbm [shape: f32[128,128], index: 5, kind: input, shape index: {}]
  %s6 = inlined_call_operand.vmem [shape: f32[1,128], index: 6, kind: input, shape index: {}]
  %s7 = inlined_call_operand.hbm [shape: f32[128,128], index: 7, kind: input, shape index: {}]
  %s8 = inlined_call_operand.vmem [shape: f32[1,128], index: 8, kind: input, shape index: {}]
  %s9 = inlined_call_operand.vmem [shape: f32[128,4], index: 9, kind: input, shape index: {}]
  %s10 = inlined_call_operand.vmem [shape: f32[1,4], index: 10, kind: input, shape index: {}]
  %s11 = inlined_call_operand.vmem [shape: f32[16,4], index: 11, kind: output, shape index: {}]
  %s12 = sld [smem:[#allocation0]]
  $region85: #{deep_ritz_forward.1} parent=0
    _
  %s14 = ssub.s32 1, %s12
  %s15 = scalar_select 0, %s14, %s12
  $region1: #{deep_ritz_forward.1} parent=0
    #allocation3 [shape = 'u8[65536]{0}', space=vmem, size = 0x10000, scoped, tag = 'input window, operand 5, single buffered']
    #allocation4 [shape = 's32[2]{0}', space=sflag, size = 0x8, scoped, tag = 'scoped memory for deep_ritz_forward.1']
    #allocation5 [shape = 'u8[65536]{0}', space=vmem, size = 0x10000, scoped, tag = 'input window, operand 7, single buffered']
    #allocation6 [shape = 's32[1]{0}', space=sflag, size = 0x4, scoped, tag = 'scoped memory for deep_ritz_forward.1']
    %16 = vsyncpa [#allocation4], 0
    %17 = vsyncpa [#allocation6], 0
    loop: start=0, step=1, limit=4
    $region2: #{deep_ritz_forward.1} parent=1 // loop_pre_header
      _
    $region3: #{deep_ritz_forward.1} parent=1 // loop_header
      %s19 = sphi 0, %s23
      %p20 = scmp.ge.s32.totalorder %s19, 4
      %s29 = sphi 0, %s31
      %s32 = sphi 0, %s29
      %s33 = sphi 0, %s32
      %s49 = sphi 0, %s33
      %s53 = sphi 0, %s53
      %s55 = sphi 0, %s53
      %s56 = sphi 0, %s55
      %s70 = sphi 0, %s56
      %s74 = sphi 0, %s74
      %s76 = sphi 0, %s74
      %s77 = sphi 0, %s76
      %s91 = sphi 0, %s77
      %s95 = sphi 0, %s95
      %s97 = sphi 0, %s95
      %s98 = sphi 0, %s97
      %s112 = sphi 0, %s98
      %s116 = sphi 0, %s116
      %s118 = sphi 0, %s116
      %s119 = sphi 0, %s118
      %s133 = sphi 0, %s119
      %s137 = sphi 0, %s137
      %s139 = sphi 0, %s137
      %s140 = sphi 0, %s139
      %s154 = sphi 0, %s140
      %s158 = sphi 0, %s158
      %s160 = sphi 0, %s158
      %s161 = sphi 0, %s160
      %s175 = sphi 0, %s161
      %s179 = sphi 0, %s179
      %s181 = sphi 0, %s179
      %s182 = sphi 0, %s181
      %s196 = sphi 0, %s182
      %s200 = sphi 0, %s200
      %s202 = sphi 0, %s200
      %s203 = sphi 0, %s202
      %s217 = sphi 0, %s203
      %s221 = sphi 0, %s221
      %s223 = sphi 0, %s221
      %s224 = sphi 0, %s223
      %s238 = sphi 0, %s224
      %s242 = sphi 0, %s242
      %s244 = sphi 0, %s242
      %s245 = sphi 0, %s244
      %s259 = sphi 0, %s245
      %s265 = sphi 0, %s267
      %s268 = sphi 0, %s265
      %s269 = sphi 0, %s268
      %s285 = sphi 0, %s269
    $region4: #{deep_ritz_forward.1} parent=1 // loop_header_branch
      %22 = sbr.rel (%p20) target = $region8
    $region5: #{deep_ritz_forward.1} parent=1 // loop_body
      %s24 = ssub.s32 %s19, 1
      %s25 = ssub.s32 %s19, 2
      %s26 = sadd.s32 %s19, 1
      %s27 = ssub.s32 %s19, %s26
      %p28 = scmp.eq.s32.totalorder %s27, 0
      %s30 = sadd.s32 %s29, 1
      %s31 = scalar_select %p28, %s29, %s30
      %p34 = pneg %p28
      %p35 = scmp.eq.s32.totalorder %s19, 1
      %p36 = por %p34, %p35
      %p37 = scmp.ne.s32.totalorder %s29, %s32
      %p38 = scmp.eq.s32.totalorder %s19, 0
      %p39 = por %p37, %p38
      %p40 = scmp.ne.s32.totalorder %s29, %s32
      %p41 = scmp.eq.s32.totalorder %s24, 1
      %p42 = por %p40, %p41
      %p43 = scmp.ne.s32.totalorder %s32, %s33
      %p44 = scmp.eq.s32.totalorder %s24, 0
      %p45 = por %p43, %p44
      %p46 = scmp.ne.s32.totalorder %s32, %s33
      %p47 = scmp.eq.s32.totalorder %s25, 1
      %p48 = por %p46, %p47
      %p50 = scmp.ne.s32.totalorder %s33, %s49
      %p51 = scmp.eq.s32.totalorder %s25, 0
      %p52 = por %p50, %p51
      %s54 = sadd.s32 %s53, 1
      %p57 = scmp.eq.s32.totalorder %s19, 1
      %p58 = scmp.ne.s32.totalorder %s53, %s55
      %p59 = scmp.eq.s32.totalorder %s19, 0
      %p60 = por %p58, %p59
      %p61 = scmp.ne.s32.totalorder %s53, %s55
      %p62 = scmp.eq.s32.totalorder %s24, 1
      %p63 = por %p61, %p62
      %p64 = scmp.ne.s32.totalorder %s55, %s56
      %p65 = scmp.eq.s32.totalorder %s24, 0
      %p66 = por %p64, %p65
      %p67 = scmp.ne.s32.totalorder %s55, %s56
      %p68 = scmp.eq.s32.totalorder %s25, 1
      %p69 = por %p67, %p68
      %p71 = scmp.ne.s32.totalorder %s56, %s70
      %p72 = scmp.eq.s32.totalorder %s25, 0
      %p73 = por %p71, %p72
      %s75 = sadd.s32 %s74, 1
      %p78 = scmp.eq.s32.totalorder %s19, 1
      %p79 = scmp.ne.s32.totalorder %s74, %s76
      %p80 = scmp.eq.s32.totalorder %s19, 0
      %p81 = por %p79, %p80
      %p82 = scmp.ne.s32.totalorder %s74, %s76
      %p83 = scmp.eq.s32.totalorder %s24, 1
      %p84 = por %p82, %p83
      %p85 = scmp.ne.s32.totalorder %s76, %s77
      %p86 = scmp.eq.s32.totalorder %s24, 0
      %p87 = por %p85, %p86
      %p88 = scmp.ne.s32.totalorder %s76, %s77
      %p89 = scmp.eq.s32.totalorder %s25, 1
      %p90 = por %p88, %p89
      %p92 = scmp.ne.s32.totalorder %s77, %s91
      %p93 = scmp.eq.s32.totalorder %s25, 0
      %p94 = por %p92, %p93
      %s96 = sadd.s32 %s95, 1
      %p99 = scmp.eq.s32.totalorder %s19, 1
      %p100 = scmp.ne.s32.totalorder %s95, %s97
      %p101 = scmp.eq.s32.totalorder %s19, 0
      %p102 = por %p100, %p101
      %p103 = scmp.ne.s32.totalorder %s95, %s97
      %p104 = scmp.eq.s32.totalorder %s24, 1
      %p105 = por %p103, %p104
      %p106 = scmp.ne.s32.totalorder %s97, %s98
      %p107 = scmp.eq.s32.totalorder %s24, 0
      %p108 = por %p106, %p107
      %p109 = scmp.ne.s32.totalorder %s97, %s98
      %p110 = scmp.eq.s32.totalorder %s25, 1
      %p111 = por %p109, %p110
      %p113 = scmp.ne.s32.totalorder %s98, %s112
      %p114 = scmp.eq.s32.totalorder %s25, 0
      %p115 = por %p113, %p114
      %s117 = sadd.s32 %s116, 1
      %p120 = scmp.eq.s32.totalorder %s19, 1
      %p121 = scmp.ne.s32.totalorder %s116, %s118
      %p122 = scmp.eq.s32.totalorder %s19, 0
      %p123 = por %p121, %p122
      %p124 = scmp.ne.s32.totalorder %s116, %s118
      %p125 = scmp.eq.s32.totalorder %s24, 1
      %p126 = por %p124, %p125
      %p127 = scmp.ne.s32.totalorder %s118, %s119
      %p128 = scmp.eq.s32.totalorder %s24, 0
      %p129 = por %p127, %p128
      %p130 = scmp.ne.s32.totalorder %s118, %s119
      %p131 = scmp.eq.s32.totalorder %s25, 1
      %p132 = por %p130, %p131
      %p134 = scmp.ne.s32.totalorder %s119, %s133
      %p135 = scmp.eq.s32.totalorder %s25, 0
      %p136 = por %p134, %p135
      %s138 = sadd.s32 %s137, 1
      %p141 = scmp.eq.s32.totalorder %s19, 1
      %p142 = scmp.ne.s32.totalorder %s137, %s139
      %p143 = scmp.eq.s32.totalorder %s19, 0
      %p144 = por %p142, %p143
      %p145 = scmp.ne.s32.totalorder %s137, %s139
      %p146 = scmp.eq.s32.totalorder %s24, 1
      %p147 = por %p145, %p146
      %p148 = scmp.ne.s32.totalorder %s139, %s140
      %p149 = scmp.eq.s32.totalorder %s24, 0
      %p150 = por %p148, %p149
      %p151 = scmp.ne.s32.totalorder %s139, %s140
      %p152 = scmp.eq.s32.totalorder %s25, 1
      %p153 = por %p151, %p152
      %p155 = scmp.ne.s32.totalorder %s140, %s154
      %p156 = scmp.eq.s32.totalorder %s25, 0
      %p157 = por %p155, %p156
      %s159 = sadd.s32 %s158, 1
      %p162 = scmp.eq.s32.totalorder %s19, 1
      %p163 = scmp.ne.s32.totalorder %s158, %s160
      %p164 = scmp.eq.s32.totalorder %s19, 0
      %p165 = por %p163, %p164
      %p166 = scmp.ne.s32.totalorder %s158, %s160
      %p167 = scmp.eq.s32.totalorder %s24, 1
      %p168 = por %p166, %p167
      %p169 = scmp.ne.s32.totalorder %s160, %s161
      %p170 = scmp.eq.s32.totalorder %s24, 0
      %p171 = por %p169, %p170
      %p172 = scmp.ne.s32.totalorder %s160, %s161
      %p173 = scmp.eq.s32.totalorder %s25, 1
      %p174 = por %p172, %p173
      %p176 = scmp.ne.s32.totalorder %s161, %s175
      %p177 = scmp.eq.s32.totalorder %s25, 0
      %p178 = por %p176, %p177
      %s180 = sadd.s32 %s179, 1
      %p183 = scmp.eq.s32.totalorder %s19, 1
      %p184 = scmp.ne.s32.totalorder %s179, %s181
      %p185 = scmp.eq.s32.totalorder %s19, 0
      %p186 = por %p184, %p185
      %p187 = scmp.ne.s32.totalorder %s179, %s181
      %p188 = scmp.eq.s32.totalorder %s24, 1
      %p189 = por %p187, %p188
      %p190 = scmp.ne.s32.totalorder %s181, %s182
      %p191 = scmp.eq.s32.totalorder %s24, 0
      %p192 = por %p190, %p191
      %p193 = scmp.ne.s32.totalorder %s181, %s182
      %p194 = scmp.eq.s32.totalorder %s25, 1
      %p195 = por %p193, %p194
      %p197 = scmp.ne.s32.totalorder %s182, %s196
      %p198 = scmp.eq.s32.totalorder %s25, 0
      %p199 = por %p197, %p198
      %s201 = sadd.s32 %s200, 1
      %p204 = scmp.eq.s32.totalorder %s19, 1
      %p205 = scmp.ne.s32.totalorder %s200, %s202
      %p206 = scmp.eq.s32.totalorder %s19, 0
      %p207 = por %p205, %p206
      %p208 = scmp.ne.s32.totalorder %s200, %s202
      %p209 = scmp.eq.s32.totalorder %s24, 1
      %p210 = por %p208, %p209
      %p211 = scmp.ne.s32.totalorder %s202, %s203
      %p212 = scmp.eq.s32.totalorder %s24, 0
      %p213 = por %p211, %p212
      %p214 = scmp.ne.s32.totalorder %s202, %s203
      %p215 = scmp.eq.s32.totalorder %s25, 1
      %p216 = por %p214, %p215
      %p218 = scmp.ne.s32.totalorder %s203, %s217
      %p219 = scmp.eq.s32.totalorder %s25, 0
      %p220 = por %p218, %p219
      %s222 = sadd.s32 %s221, 1
      %p225 = scmp.eq.s32.totalorder %s19, 1
      %p226 = scmp.ne.s32.totalorder %s221, %s223
      %p227 = scmp.eq.s32.totalorder %s19, 0
      %p228 = por %p226, %p227
      %p229 = scmp.ne.s32.totalorder %s221, %s223
      %p230 = scmp.eq.s32.totalorder %s24, 1
      %p231 = por %p229, %p230
      %p232 = scmp.ne.s32.totalorder %s223, %s224
      %p233 = scmp.eq.s32.totalorder %s24, 0
      %p234 = por %p232, %p233
      %p235 = scmp.ne.s32.totalorder %s223, %s224
      %p236 = scmp.eq.s32.totalorder %s25, 1
      %p237 = por %p235, %p236
      %p239 = scmp.ne.s32.totalorder %s224, %s238
      %p240 = scmp.eq.s32.totalorder %s25, 0
      %p241 = por %p239, %p240
      %s243 = sadd.s32 %s242, 1
      %p246 = scmp.eq.s32.totalorder %s19, 1
      %p247 = scmp.ne.s32.totalorder %s242, %s244
      %p248 = scmp.eq.s32.totalorder %s19, 0
      %p249 = por %p247, %p248
      %p250 = scmp.ne.s32.totalorder %s242, %s244
      %p251 = scmp.eq.s32.totalorder %s24, 1
      %p252 = por %p250, %p251
      %p253 = scmp.ne.s32.totalorder %s244, %s245
      %p254 = scmp.eq.s32.totalorder %s24, 0
      %p255 = por %p253, %p254
      %p256 = scmp.ne.s32.totalorder %s244, %s245
      %p257 = scmp.eq.s32.totalorder %s25, 1
      %p258 = por %p256, %p257
      %p260 = scmp.ne.s32.totalorder %s245, %s259
      %p261 = scmp.eq.s32.totalorder %s25, 0
      %p262 = por %p260, %p261
      %s263 = ssub.s32 %s19, %s26
      %p264 = scmp.eq.s32.totalorder %s263, 0
      %s266 = sadd.s32 %s265, 1
      %s267 = scalar_select %p264, %s265, %s266
      %p270 = pneg %p264
      %p271 = scmp.eq.s32.totalorder %s19, 1
      %p272 = por %p270, %p271
      %p273 = scmp.ne.s32.totalorder %s265, %s268
      %p274 = scmp.eq.s32.totalorder %s19, 0
      %p275 = por %p273, %p274
      %p276 = scmp.ne.s32.totalorder %s265, %s268
      %p277 = scmp.eq.s32.totalorder %s24, 1
      %p278 = por %p276, %p277
      %p279 = scmp.ne.s32.totalorder %s268, %s269
      %p280 = scmp.eq.s32.totalorder %s24, 0
      %p281 = por %p279, %p280
      %p282 = scmp.ne.s32.totalorder %s268, %s269
      %p283 = scmp.eq.s32.totalorder %s25, 1
      %p284 = por %p282, %p283
      %p286 = scmp.ne.s32.totalorder %s269, %s285
      %p287 = scmp.eq.s32.totalorder %s25, 0
      %p288 = por %p286, %p287
      %p289 = scmp.le.s32.totalorder 1, %s19
      %p290 = scmp.lt.s32.totalorder %s19, 3
      %p291 = pnand %p289, %p290
      %p292 = pneg %p291
      // Predicated region
      $region9: #{deep_ritz_forward.1} parent=5 // pred_check
        _
      $region10: #{deep_ritz_forward.1} parent=5 // pred_check_branch
        %294 = sbr.rel (%p291) target = $region12
      $region11: #{deep_ritz_forward.1} parent=5 // pred_region
        %s295 = ssub.s32 %s19, 1
        // Predicated region
        $region13: #{deep_ritz_forward.1} parent=11 // pred_check
          %p296 = pneg %p66
        $region14: #{deep_ritz_forward.1} parent=11 // pred_check_branch
          %298 = sbr.rel (%p296) target = $region16
        $region15: #{deep_ritz_forward.1} parent=11 // pred_region
          _
        $region16: #{deep_ritz_forward.1} parent=11 // pred_fallthru
          _
        // Predicated region
        $region17: #{deep_ritz_forward.1} parent=11 // pred_check
          %p299 = pneg %p87
        $region18: #{deep_ritz_forward.1} parent=11 // pred_check_branch
          %301 = sbr.rel (%p299) target = $region20
        $region19: #{deep_ritz_forward.1} parent=11 // pred_region
          _
        $region20: #{deep_ritz_forward.1} parent=11 // pred_fallthru
          _
        // Predicated region
        $region21: #{deep_ritz_forward.1} parent=11 // pred_check
          %p302 = pneg %p108
        $region22: #{deep_ritz_forward.1} parent=11 // pred_check_branch
          %304 = sbr.rel (%p302) target = $region24
        $region23: #{deep_ritz_forward.1} parent=11 // pred_region
          _
        $region24: #{deep_ritz_forward.1} parent=11 // pred_fallthru
          _
        // Predicated region
        $region25: #{deep_ritz_forward.1} parent=11 // pred_check
          %p305 = pneg %p129
        $region26: #{deep_ritz_forward.1} parent=11 // pred_check_branch
          %307 = sbr.rel (%p305) target = $region28
        $region27: #{deep_ritz_forward.1} parent=11 // pred_region
          _
        $region28: #{deep_ritz_forward.1} parent=11 // pred_fallthru
          _
        // Predicated region
        $region29: #{deep_ritz_forward.1} parent=11 // pred_check
          %p308 = pneg %p150
        $region30: #{deep_ritz_forward.1} parent=11 // pred_check_branch
          %310 = sbr.rel (%p308) target = $region32
        $region31: #{deep_ritz_forward.1} parent=11 // pred_region
          %s312 = ssub.s32 2048, 2048
          %313 = vsyncadd [#allocation4], %s312
          %s314 = sshll.u32 [#allocation3], 4
          %s315 = int_to_ptr.vmem [resolvable:$true] %s314
          %320 = dma.hbm_to_vmem [thread:$0]  %s5, 2048, %s315, [#allocation4], 128, 128, 8
        $region32: #{deep_ritz_forward.1} parent=11 // pred_fallthru
          _
        // Predicated region
        $region33: #{deep_ritz_forward.1} parent=11 // pred_check
          %p321 = pneg %p171
        $region34: #{deep_ritz_forward.1} parent=11 // pred_check_branch
          %323 = sbr.rel (%p321) target = $region36
        $region35: #{deep_ritz_forward.1} parent=11 // pred_region
          _
        $region36: #{deep_ritz_forward.1} parent=11 // pred_fallthru
          _
        // Predicated region
        $region37: #{deep_ritz_forward.1} parent=11 // pred_check
          %p324 = pneg %p192
        $region38: #{deep_ritz_forward.1} parent=11 // pred_check_branch
          %326 = sbr.rel (%p324) target = $region40
        $region39: #{deep_ritz_forward.1} parent=11 // pred_region
          %s328 = ssub.s32 2048, 2048
          %329 = vsyncadd [#allocation6], %s328
          %s330 = sshll.u32 [#allocation5], 4
          %s331 = int_to_ptr.vmem [resolvable:$true] %s330
          %336 = dma.hbm_to_vmem [thread:$0]  %s7, 2048, %s331, [#allocation6], 128, 128, 8
        $region40: #{deep_ritz_forward.1} parent=11 // pred_fallthru
          _
        // Predicated region
        $region41: #{deep_ritz_forward.1} parent=11 // pred_check
          %p337 = pneg %p213
        $region42: #{deep_ritz_forward.1} parent=11 // pred_check_branch
          %339 = sbr.rel (%p337) target = $region44
        $region43: #{deep_ritz_forward.1} parent=11 // pred_region
          _
        $region44: #{deep_ritz_forward.1} parent=11 // pred_fallthru
          _
        // Predicated region
        $region45: #{deep_ritz_forward.1} parent=11 // pred_check
          %p340 = pneg %p234
        $region46: #{deep_ritz_forward.1} parent=11 // pred_check_branch
          %342 = sbr.rel (%p340) target = $region48
        $region47: #{deep_ritz_forward.1} parent=11 // pred_region
          _
        $region48: #{deep_ritz_forward.1} parent=11 // pred_fallthru
          _
        // Predicated region
        $region49: #{deep_ritz_forward.1} parent=11 // pred_check
          %p343 = pneg %p255
        $region50: #{deep_ritz_forward.1} parent=11 // pred_check_branch
          %345 = sbr.rel (%p343) target = $region52
        $region51: #{deep_ritz_forward.1} parent=11 // pred_region
          _
        $region52: #{deep_ritz_forward.1} parent=11 // pred_fallthru
          _
      $region12: #{deep_ritz_forward.1} parent=5 // pred_fallthru
        _
      %p346 = scmp.lt.s32.totalorder %s19, 2
      // Predicated region
      $region53: #{deep_ritz_forward.1} parent=5 // pred_check
        %p347 = pneg %p346
      $region54: #{deep_ritz_forward.1} parent=5 // pred_check_branch
        %349 = sbr.rel (%p347) target = $region56
      $region55: #{deep_ritz_forward.1} parent=5 // pred_region
        // Predicated region
        $region57: #{deep_ritz_forward.1} parent=55 // pred_check
          %p350 = pneg %p39
        $region58: #{deep_ritz_forward.1} parent=55 // pred_check_branch
          %352 = sbr.rel (%p350) target = $region60
        $region59: #{deep_ritz_forward.1} parent=55 // pred_region
          %p353 = scmp.lt.s32.totalorder %s19, 1
          %s354 = scalar_select %p353, %s19, 1
          %s355 = smul.addr %s354, 8
          %s356 = scalar_lea.vmem %s0, %s355
        $region60: #{deep_ritz_forward.1} parent=55 // pred_fallthru
          _
      $region56: #{deep_ritz_forward.1} parent=5 // pred_fallthru
        _
      %p357 = scmp.le.s32.totalorder 1, %s19
      %p358 = scmp.lt.s32.totalorder %s19, 3
      %p359 = pnand %p357, %p358
      %p360 = pneg %p359
      // Predicated region
      $region61: #{deep_ritz_forward.1} parent=5 // pred_check
        _
      $region62: #{deep_ritz_forward.1} parent=5 // pred_check_branch
        %362 = sbr.rel (%p359) target = $region64
      $region63: #{deep_ritz_forward.1} parent=5 // pred_region
        %s363 = ssub.s32 %s19, 1
        // Predicated region
        $region65: #{deep_ritz_forward.1} parent=63 // pred_check
          %p364 = pneg %p150
        $region66: #{deep_ritz_forward.1} parent=63 // pred_check_branch
          %366 = sbr.rel (%p364) target = $region68
        $region67: #{deep_ritz_forward.1} parent=63 // pred_region
          %367 = dma.done [#allocation4], 2048
        $region68: #{deep_ritz_forward.1} parent=63 // pred_fallthru
          _
        // Predicated region
        $region69: #{deep_ritz_forward.1} parent=63 // pred_check
          %p368 = pneg %p192
        $region70: #{deep_ritz_forward.1} parent=63 // pred_check_branch
          %370 = sbr.rel (%p368) target = $region72
        $region71: #{deep_ritz_forward.1} parent=63 // pred_region
          %371 = dma.done [#allocation6], 2048
        $region72: #{deep_ritz_forward.1} parent=63 // pred_fallthru
          _
        %p372 = scmp.lt.s32.totalorder %s24, 1
        %s373 = scalar_select %p372, %s24, 1
        %s374 = smul.addr %s373, 8
        %s375 = scalar_lea.vmem %s0, %s374
        %p376 = pneg %p45
        %p377 = pneg %p42
        %p378 = pneg %p66
        %p379 = pneg %p63
        %p380 = pneg %p87
        %p381 = pneg %p84
        %p382 = pneg %p108
        %p383 = pneg %p105
        %p384 = pneg %p129
        %p385 = pneg %p126
        %p386 = pneg %p150
        %p387 = pneg %p147
        %p388 = pneg %p171
        %p389 = pneg %p168
        %p390 = pneg %p192
        %p391 = pneg %p189
        %p392 = pneg %p213
        %p393 = pneg %p210
        %p394 = pneg %p234
        %p395 = pneg %p231
        %p396 = pneg %p255
        %p397 = pneg %p252
        %p398 = pneg %p281
        %p399 = pneg %p278
        %p400 = scmp.lt.s32.totalorder %s24, 1
        %s401 = scalar_select %p400, %s24, 1
        %s402 = smul.addr %s401, 8
        %s403 = scalar_lea.vmem %s11, %s402
        %p404 = scmp.lt.s32.totalorder %s24, 1
        %s405 = scalar_select %p404, %s24, 1
        %s406 = smul.addr %s405, 8
        %s407 = scalar_lea.vmem %s0, %s406
        %p408 = scmp.lt.s32.totalorder %s24, 1
        %s409 = scalar_select %p408, %s24, 1
        %s410 = smul.addr %s409, 8
        %s411 = scalar_lea.vmem %s11, %s410
        %v412 = vld [vmem:[%s407] sm:$0xff]
        %413 = vst [vmem:[#allocation2] sm:$0xff] 0.0
        %vm414 = vcmask 64512
        %415 = vst.msk [vmem:[#allocation2] sm:$0xff] %vm414, %v412
        %v416 = vld [vmem:[#allocation2] sm:$0xff]
        %v417 = vld [vmem:[%s1] sm:$0xff]
        %v418 = vld [vmem:[%s2] sm:$0x1]
        %v420 = vlaneseq
        %v421 = vshrl.u32 %v420, 7
        %v422 = vsub.s32 0, %v421
        %v423 = vrot.slane %v418, %v422
        %v426 = vsel %vm414, %v412, 0
        %428 = vmatprep.subr.mxu0 0.0
        %v429 = vand.u32 %v417, 4294901760
        %430 = vmatpush1.msra.mxu0 %v429
        %431 = vmatprep.subr.mxu0 0.0
        %432 = vmatpush1.msra.mxu0 0.0
        %433 = vmatprep.subr.mxu0 0.0
        %434 = vmatpush1.msra.mxu0 0.0
        %435 = vmatprep.subr.mxu0 0.0
        %436 = vmatpush1.msra.mxu0 0.0
        %437 = vmatprep.subr.mxu0 0.0
        %438 = vmatpush1.msra.mxu0 0.0
        %439 = vmatprep.subr.mxu0 0.0
        %440 = vmatpush1.msra.mxu0 0.0
        %441 = vmatprep.subr.mxu0 0.0
        %442 = vmatpush1.msra.mxu0 0.0
        %443 = vmatprep.subr.mxu0 0.0
        %444 = vmatpush1.msra.mxu0 0.0
        %445 = vmatprep.subr.mxu0 0.0
        %446 = vmatpush1.msra.mxu0 0.0
        %447 = vmatprep.subr.mxu0 0.0
        %448 = vmatpush1.msra.mxu0 0.0
        %449 = vmatprep.subr.mxu0 0.0
        %450 = vmatpush1.msra.mxu0 0.0
        %451 = vmatprep.subr.mxu0 0.0
        %452 = vmatpush1.msra.mxu0 0.0
        %453 = vmatprep.subr.mxu0 0.0
        %454 = vmatpush1.msra.mxu0 0.0
        %455 = vmatprep.subr.mxu0 0.0
        %456 = vmatpush1.msra.mxu0 0.0
        %457 = vmatprep.subr.mxu0 0.0
        %458 = vmatpush1.msra.mxu0 0.0
        %459 = vmatprep.subr.mxu0 0.0
        %460 = vmatpush1.msra.mxu0 0.0
        %461 = vmatprep.subr.mxu0 0.0
        %462 = vmatpush1.msra.mxu0 0.0
        %463 = vmatprep.subr.mxu0 0.0
        %464 = vmatpush1.msra.mxu0 0.0
        %465 = vmatprep.subr.mxu0 0.0
        %466 = vmatpush1.msra.mxu0 0.0
        %467 = vmatprep.subr.mxu0 0.0
        %468 = vmatpush1.msra.mxu0 0.0
        %469 = vmatprep.subr.mxu0 0.0
        %470 = vmatpush1.msra.mxu0 0.0
        %471 = vmatprep.subr.mxu0 0.0
        %472 = vmatpush1.msra.mxu0 0.0
        %473 = vmatprep.subr.mxu0 0.0
        %474 = vmatpush1.msra.mxu0 0.0
        %475 = vmatprep.subr.mxu0 0.0
        %476 = vmatpush1.msra.mxu0 0.0
        %477 = vmatprep.subr.mxu0 0.0
        %478 = vmatpush1.msra.mxu0 0.0
        %479 = vmatprep.subr.mxu0 0.0
        %480 = vmatpush1.msra.mxu0 0.0
        %481 = vmatprep.subr.mxu0 0.0
        %482 = vmatpush1.msra.mxu0 0.0
        %483 = vmatprep.subr.mxu0 0.0
        %484 = vmatpush1.msra.mxu0 0.0
        %485 = vmatprep.subr.mxu0 0.0
        %486 = vmatpush1.msra.mxu0 0.0
        %487 = vmatprep.subr.mxu0 0.0
        %488 = vmatpush1.msra.mxu0 0.0
        %489 = vmatprep.subr.mxu0 0.0
        %490 = vmatpush1.msra.mxu0 0.0
        %491 = vmatprep.subr.mxu0 0.0
        %492 = vmatpush1.msra.mxu0 0.0
        %493 = vmatprep.mubr.f32.mxu0 0.0
        %v494 = vand.u32 %v426, 4294901760
        %v495 = vsub.f32 %v426, %v494
        %v496 = vand.u32 %v495, 4294901760
        %v497 = vsub.f32 %v495, %v496
        %v498 = vand.u32 %v497, 4294901760
        %499 = vmatmul.mubr.f32.gmra.mrb[0].mxu0 %v498
        %v500 = vpop.f32.mrb[0].mxu0
        %v501 = vadd.f32 %v423, %v500
        %v502 = vpop.f32.mrb[0].mxu0
        %503 = vdwg.mxu0
        %504 = vmatprep.subr.mxu0 0.0
        %v505 = vand.u32 %v417, 4294901760
        %v506 = vsub.f32 %v417, %v505
        %v507 = vand.u32 %v506, 4294901760
        %v508 = vsub.f32 %v506, %v507
        %v509 = vand.u32 %v508, 4294901760
        %510 = vmatpush1.msra.mxu0 %v509
        %511 = vmatprep.subr.mxu0 0.0
        %512 = vmatpush1.msra.mxu0 0.0
        %513 = vmatprep.subr.mxu0 0.0
        %514 = vmatpush1.msra.mxu0 0.0
        %515 = vmatprep.subr.mxu0 0.0
        %516 = vmatpush1.msra.mxu0 0.0
        %517 = vmatprep.subr.mxu0 0.0
        %518 = vmatpush1.msra.mxu0 0.0
        %519 = vmatprep.subr.mxu0 0.0
        %520 = vmatpush1.msra.mxu0 0.0
        %521 = vmatprep.subr.mxu0 0.0
        %522 = vmatpush1.msra.mxu0 0.0
        %523 = vmatprep.subr.mxu0 0.0
        %524 = vmatpush1.msra.mxu0 0.0
        %525 = vmatprep.subr.mxu0 0.0
        %526 = vmatpush1.msra.mxu0 0.0
        %527 = vmatprep.subr.mxu0 0.0
        %528 = vmatpush1.msra.mxu0 0.0
        %529 = vmatprep.subr.mxu0 0.0
        %530 = vmatpush1.msra.mxu0 0.0
        %531 = vmatprep.subr.mxu0 0.0
        %532 = vmatpush1.msra.mxu0 0.0
        %533 = vmatprep.subr.mxu0 0.0
        %534 = vmatpush1.msra.mxu0 0.0
        %535 = vmatprep.subr.mxu0 0.0
        %536 = vmatpush1.msra.mxu0 0.0
        %537 = vmatprep.subr.mxu0 0.0
        %538 = vmatpush1.msra.mxu0 0.0
        %539 = vmatprep.subr.mxu0 0.0
        %540 = vmatpush1.msra.mxu0 0.0
        %541 = vmatprep.subr.mxu0 0.0
        %542 = vmatpush1.msra.mxu0 0.0
        %543 = vmatprep.subr.mxu0 0.0
        %544 = vmatpush1.msra.mxu0 0.0
        %545 = vmatprep.subr.mxu0 0.0
        %546 = vmatpush1.msra.mxu0 0.0
        %547 = vmatprep.subr.mxu0 0.0
        %548 = vmatpush1.msra.mxu0 0.0
        %549 = vmatprep.subr.mxu0 0.0
        %550 = vmatpush1.msra.mxu0 0.0
        %551 = vmatprep.subr.mxu0 0.0
        %552 = vmatpush1.msra.mxu0 0.0
        %553 = vmatprep.subr.mxu0 0.0
        %554 = vmatpush1.msra.mxu0 0.0
        %555 = vmatprep.subr.mxu0 0.0
        %556 = vmatpush1.msra.mxu0 0.0
        %557 = vmatprep.subr.mxu0 0.0
        %558 = vmatpush1.msra.mxu0 0.0
        %559 = vmatprep.subr.mxu0 0.0
        %560 = vmatpush1.msra.mxu0 0.0
        %561 = vmatprep.subr.mxu0 0.0
        %562 = vmatpush1.msra.mxu0 0.0
        %563 = vmatprep.subr.mxu0 0.0
        %564 = vmatpush1.msra.mxu0 0.0
        %565 = vmatprep.subr.mxu0 0.0
        %566 = vmatpush1.msra.mxu0 0.0
        %567 = vmatprep.subr.mxu0 0.0
        %568 = vmatpush1.msra.mxu0 0.0
        %569 = vmatprep.subr.mxu0 0.0
        %570 = vmatpush1.msra.mxu0 0.0
        %571 = vmatprep.subr.mxu0 0.0
        %572 = vmatpush1.msra.mxu0 0.0
        %573 = vmatprep.mubr.f32.mxu0 0.0
        %v574 = vand.u32 %v426, 4294901760
        %575 = vmatmul.mubr.f32.gmra.mrb[0].mxu0 %v574
        %v576 = vpop.f32.mrb[0].mxu0
        %v577 = vadd.f32 %v501, %v576
        %v578 = vpop.f32.mrb[0].mxu0
        %579 = vdwg.mxu0
        %580 = vmatprep.subr.mxu0 0.0
        %v581 = vand.u32 %v417, 4294901760
        %v582 = vsub.f32 %v417, %v581
        %583 = vmatpush1.msra.mxu0 %v582
        %584 = vmatprep.subr.mxu0 0.0
        %585 = vmatpush1.msra.mxu0 0.0
        %586 = vmatprep.subr.mxu0 0.0
        %587 = vmatpush1.msra.mxu0 0.0
        %588 = vmatprep.subr.mxu0 0.0
        %589 = vmatpush1.msra.mxu0 0.0
        %590 = vmatprep.subr.mxu0 0.0
        %591 = vmatpush1.msra.mxu0 0.0
        %592 = vmatprep.subr.mxu0 0.0
        %593 = vmatpush1.msra.mxu0 0.0
        %594 = vmatprep.subr.mxu0 0.0
        %595 = vmatpush1.msra.mxu0 0.0
        %596 = vmatprep.subr.mxu0 0.0
        %597 = vmatpush1.msra.mxu0 0.0
        %598 = vmatprep.subr.mxu0 0.0
        %599 = vmatpush1.msra.mxu0 0.0
        %600 = vmatprep.subr.mxu0 0.0
        %601 = vmatpush1.msra.mxu0 0.0
        %602 = vmatprep.subr.mxu0 0.0
        %603 = vmatpush1.msra.mxu0 0.0
        %604 = vmatprep.subr.mxu0 0.0
        %605 = vmatpush1.msra.mxu0 0.0
        %606 = vmatprep.subr.mxu0 0.0
        %607 = vmatpush1.msra.mxu0 0.0
        %608 = vmatprep.subr.mxu0 0.0
        %609 = vmatpush1.msra.mxu0 0.0
        %610 = vmatprep.subr.mxu0 0.0
        %611 = vmatpush1.msra.mxu0 0.0
        %612 = vmatprep.subr.mxu0 0.0
        %613 = vmatpush1.msra.mxu0 0.0
        %614 = vmatprep.subr.mxu0 0.0
        %615 = vmatpush1.msra.mxu0 0.0
        %616 = vmatprep.subr.mxu0 0.0
        %617 = vmatpush1.msra.mxu0 0.0
        %618 = vmatprep.subr.mxu0 0.0
        %619 = vmatpush1.msra.mxu0 0.0
        %620 = vmatprep.subr.mxu0 0.0
        %621 = vmatpush1.msra.mxu0 0.0
        %622 = vmatprep.subr.mxu0 0.0
        %623 = vmatpush1.msra.mxu0 0.0
        %624 = vmatprep.subr.mxu0 0.0
        %625 = vmatpush1.msra.mxu0 0.0
        %626 = vmatprep.subr.mxu0 0.0
        %627 = vmatpush1.msra.mxu0 0.0
        %628 = vmatprep.subr.mxu0 0.0
        %629 = vmatpush1.msra.mxu0 0.0
        %630 = vmatprep.subr.mxu0 0.0
        %631 = vmatpush1.msra.mxu0 0.0
        %632 = vmatprep.subr.mxu0 0.0
        %633 = vmatpush1.msra.mxu0 0.0
        %634 = vmatprep.subr.mxu0 0.0
        %635 = vmatpush1.msra.mxu0 0.0
        %636 = vmatprep.subr.mxu0 0.0
        %637 = vmatpush1.msra.mxu0 0.0
        %638 = vmatprep.subr.mxu0 0.0
        %639 = vmatpush1.msra.mxu0 0.0
        %640 = vmatprep.subr.mxu0 0.0
        %641 = vmatpush1.msra.mxu0 0.0
        %642 = vmatprep.subr.mxu0 0.0
        %643 = vmatpush1.msra.mxu0 0.0
        %644 = vmatprep.subr.mxu0 0.0
        %645 = vmatpush1.msra.mxu0 0.0
        %646 = vmatprep.mubr.f32.mxu0 0.0
        %v647 = vand.u32 %v426, 4294901760
        %v648 = vsub.f32 %v426, %v647
        %649 = vmatmul.mubr.f32.gmra.mrb[0].mxu0 %v648
        %v650 = vpop.f32.mrb[0].mxu0
        %v651 = vadd.f32 %v577, %v650
        %v652 = vpop.f32.mrb[0].mxu0
        %653 = vdwg.mxu0
        %654 = vmatprep.subr.mxu0 0.0
        %v655 = vand.u32 %v417, 4294901760
        %656 = vmatpush1.msra.mxu0 %v655
        %657 = vmatprep.subr.mxu0 0.0
        %658 = vmatpush1.msra.mxu0 0.0
        %659 = vmatprep.subr.mxu0 0.0
        %660 = vmatpush1.msra.mxu0 0.0
        %661 = vmatprep.subr.mxu0 0.0
        %662 = vmatpush1.msra.mxu0 0.0
        %663 = vmatprep.subr.mxu0 0.0
        %664 = vmatpush1.msra.mxu0 0.0
        %665 = vmatprep.subr.mxu0 0.0
        %666 = vmatpush1.msra.mxu0 0.0
        %667 = vmatprep.subr.mxu0 0.0
        %668 = vmatpush1.msra.mxu0 0.0
        %669 = vmatprep.subr.mxu0 0.0
        %670 = vmatpush1.msra.mxu0 0.0
        %671 = vmatprep.subr.mxu0 0.0
        %672 = vmatpush1.msra.mxu0 0.0
        %673 = vmatprep.subr.mxu0 0.0
        %674 = vmatpush1.msra.mxu0 0.0
        %675 = vmatprep.subr.mxu0 0.0
        %676 = vmatpush1.msra.mxu0 0.0
        %677 = vmatprep.subr.mxu0 0.0
        %678 = vmatpush1.msra.mxu0 0.0
        %679 = vmatprep.subr.mxu0 0.0
        %680 = vmatpush1.msra.mxu0 0.0
        %681 = vmatprep.subr.mxu0 0.0
        %682 = vmatpush1.msra.mxu0 0.0
        %683 = vmatprep.subr.mxu0 0.0
        %684 = vmatpush1.msra.mxu0 0.0
        %685 = vmatprep.subr.mxu0 0.0
        %686 = vmatpush1.msra.mxu0 0.0
        %687 = vmatprep.subr.mxu0 0.0
        %688 = vmatpush1.msra.mxu0 0.0
        %689 = vmatprep.subr.mxu0 0.0
        %690 = vmatpush1.msra.mxu0 0.0
        %691 = vmatprep.subr.mxu0 0.0
        %692 = vmatpush1.msra.mxu0 0.0
        %693 = vmatprep.subr.mxu0 0.0
        %694 = vmatpush1.msra.mxu0 0.0
        %695 = vmatprep.subr.mxu0 0.0
        %696 = vmatpush1.msra.mxu0 0.0
        %697 = vmatprep.subr.mxu0 0.0
        %698 = vmatpush1.msra.mxu0 0.0
        %699 = vmatprep.subr.mxu0 0.0
        %700 = vmatpush1.msra.mxu0 0.0
        %701 = vmatprep.subr.mxu0 0.0
        %702 = vmatpush1.msra.mxu0 0.0
        %703 = vmatprep.subr.mxu0 0.0
        %704 = vmatpush1.msra.mxu0 0.0
        %705 = vmatprep.subr.mxu0 0.0
        %706 = vmatpush1.msra.mxu0 0.0
        %707 = vmatprep.subr.mxu0 0.0
        %708 = vmatpush1.msra.mxu0 0.0
        %709 = vmatprep.subr.mxu0 0.0
        %710 = vmatpush1.msra.mxu0 0.0
        %711 = vmatprep.subr.mxu0 0.0
        %712 = vmatpush1.msra.mxu0 0.0
        %713 = vmatprep.subr.mxu0 0.0
        %714 = vmatpush1.msra.mxu0 0.0
        %715 = vmatprep.subr.mxu0 0.0
        %716 = vmatpush1.msra.mxu0 0.0
        %717 = vmatprep.subr.mxu0 0.0
        %718 = vmatpush1.msra.mxu0 0.0
        %719 = vmatprep.mubr.f32.mxu0 0.0
        %v720 = vand.u32 %v426, 4294901760
        %v721 = vsub.f32 %v426, %v720
        %v722 = vand.u32 %v721, 4294901760
        %723 = vmatmul.mubr.f32.gmra.mrb[0].mxu0 %v722
        %v724 = vpop.f32.mrb[0].mxu0
        %v725 = vadd.f32 %v651, %v724
        %v726 = vpop.f32.mrb[0].mxu0
        %727 = vdwg.mxu0
        %728 = vmatprep.subr.mxu0 0.0
        %v729 = vand.u32 %v417, 4294901760
        %v730 = vsub.f32 %v417, %v729
        %v731 = vand.u32 %v730, 4294901760
        %732 = vmatpush1.msra.mxu0 %v731
        %733 = vmatprep.subr.mxu0 0.0
        %734 = vmatpush1.msra.mxu0 0.0
        %735 = vmatprep.subr.mxu0 0.0
        %736 = vmatpush1.msra.mxu0 0.0
        %737 = vmatprep.subr.mxu0 0.0
        %738 = vmatpush1.msra.mxu0 0.0
        %739 = vmatprep.subr.mxu0 0.0
        %740 = vmatpush1.msra.mxu0 0.0
        %741 = vmatprep.subr.mxu0 0.0
        %742 = vmatpush1.msra.mxu0 0.0
        %743 = vmatprep.subr.mxu0 0.0
        %744 = vmatpush1.msra.mxu0 0.0
        %745 = vmatprep.subr.mxu0 0.0
        %746 = vmatpush1.msra.mxu0 0.0
        %747 = vmatprep.subr.mxu0 0.0
        %748 = vmatpush1.msra.mxu0 0.0
        %749 = vmatprep.subr.mxu0 0.0
        %750 = vmatpush1.msra.mxu0 0.0
        %751 = vmatprep.subr.mxu0 0.0
        %752 = vmatpush1.msra.mxu0 0.0
        %753 = vmatprep.subr.mxu0 0.0
        %754 = vmatpush1.msra.mxu0 0.0
        %755 = vmatprep.subr.mxu0 0.0
        %756 = vmatpush1.msra.mxu0 0.0
        %757 = vmatprep.subr.mxu0 0.0
        %758 = vmatpush1.msra.mxu0 0.0
        %759 = vmatprep.subr.mxu0 0.0
        %760 = vmatpush1.msra.mxu0 0.0
        %761 = vmatprep.subr.mxu0 0.0
        %762 = vmatpush1.msra.mxu0 0.0
        %763 = vmatprep.subr.mxu0 0.0
        %764 = vmatpush1.msra.mxu0 0.0
        %765 = vmatprep.subr.mxu0 0.0
        %766 = vmatpush1.msra.mxu0 0.0
        %767 = vmatprep.subr.mxu0 0.0
        %768 = vmatpush1.msra.mxu0 0.0
        %769 = vmatprep.subr.mxu0 0.0
        %770 = vmatpush1.msra.mxu0 0.0
        %771 = vmatprep.subr.mxu0 0.0
        %772 = vmatpush1.msra.mxu0 0.0
        %773 = vmatprep.subr.mxu0 0.0
        %774 = vmatpush1.msra.mxu0 0.0
        %775 = vmatprep.subr.mxu0 0.0
        %776 = vmatpush1.msra.mxu0 0.0
        %777 = vmatprep.subr.mxu0 0.0
        %778 = vmatpush1.msra.mxu0 0.0
        %779 = vmatprep.subr.mxu0 0.0
        %780 = vmatpush1.msra.mxu0 0.0
        %781 = vmatprep.subr.mxu0 0.0
        %782 = vmatpush1.msra.mxu0 0.0
        %783 = vmatprep.subr.mxu0 0.0
        %784 = vmatpush1.msra.mxu0 0.0
        %785 = vmatprep.subr.mxu0 0.0
        %786 = vmatpush1.msra.mxu0 0.0
        %787 = vmatprep.subr.mxu0 0.0
        %788 = vmatpush1.msra.mxu0 0.0
        %789 = vmatprep.subr.mxu0 0.0
        %790 = vmatpush1.msra.mxu0 0.0
        %791 = vmatprep.subr.mxu0 0.0
        %792 = vmatpush1.msra.mxu0 0.0
        %793 = vmatprep.subr.mxu0 0.0
        %794 = vmatpush1.msra.mxu0 0.0
        %795 = vmatprep.mubr.f32.mxu0 0.0
        %v796 = vand.u32 %v426, 4294901760
        %797 = vmatmul.mubr.f32.gmra.mrb[0].mxu0 %v796
        %v798 = vpop.f32.mrb[0].mxu0
        %v799 = vadd.f32 %v725, %v798
        %v800 = vpop.f32.mrb[0].mxu0
        %801 = vdwg.mxu0
        %802 = vmatprep.subr.mxu0 0.0
        %v803 = vand.u32 %v417, 4294901760
        %804 = vmatpush1.msra.mxu0 %v803
        %805 = vmatprep.subr.mxu0 0.0
        %806 = vmatpush1.msra.mxu0 0.0
        %807 = vmatprep.subr.mxu0 0.0
        %808 = vmatpush1.msra.mxu0 0.0
        %809 = vmatprep.subr.mxu0 0.0
        %810 = vmatpush1.msra.mxu0 0.0
        %811 = vmatprep.subr.mxu0 0.0
        %812 = vmatpush1.msra.mxu0 0.0
        %813 = vmatprep.subr.mxu0 0.0
        %814 = vmatpush1.msra.mxu0 0.0
        %815 = vmatprep.subr.mxu0 0.0
        %816 = vmatpush1.msra.mxu0 0.0
        %817 = vmatprep.subr.mxu0 0.0
        %818 = vmatpush1.msra.mxu0 0.0
        %819 = vmatprep.subr.mxu0 0.0
        %820 = vmatpush1.msra.mxu0 0.0
        %821 = vmatprep.subr.mxu0 0.0
        %822 = vmatpush1.msra.mxu0 0.0
        %823 = vmatprep.subr.mxu0 0.0
        %824 = vmatpush1.msra.mxu0 0.0
        %825 = vmatprep.subr.mxu0 0.0
        %826 = vmatpush1.msra.mxu0 0.0
        %827 = vmatprep.subr.mxu0 0.0
        %828 = vmatpush1.msra.mxu0 0.0
        %829 = vmatprep.subr.mxu0 0.0
        %830 = vmatpush1.msra.mxu0 0.0
        %831 = vmatprep.subr.mxu0 0.0
        %832 = vmatpush1.msra.mxu0 0.0
        %833 = vmatprep.subr.mxu0 0.0
        %834 = vmatpush1.msra.mxu0 0.0
        %835 = vmatprep.subr.mxu0 0.0
        %836 = vmatpush1.msra.mxu0 0.0
        %837 = vmatprep.subr.mxu0 0.0
        %838 = vmatpush1.msra.mxu0 0.0
        %839 = vmatprep.subr.mxu0 0.0
        %840 = vmatpush1.msra.mxu0 0.0
        %841 = vmatprep.subr.mxu0 0.0
        %842 = vmatpush1.msra.mxu0 0.0
        %843 = vmatprep.subr.mxu0 0.0
        %844 = vmatpush1.msra.mxu0 0.0
        %845 = vmatprep.subr.mxu0 0.0
        %846 = vmatpush1.msra.mxu0 0.0
        %847 = vmatprep.subr.mxu0 0.0
        %848 = vmatpush1.msra.mxu0 0.0
        %849 = vmatprep.subr.mxu0 0.0
        %850 = vmatpush1.msra.mxu0 0.0
        %851 = vmatprep.subr.mxu0 0.0
        %852 = vmatpush1.msra.mxu0 0.0
        %853 = vmatprep.subr.mxu0 0.0
        %854 = vmatpush1.msra.mxu0 0.0
        %855 = vmatprep.subr.mxu0 0.0
        %856 = vmatpush1.msra.mxu0 0.0
        %857 = vmatprep.subr.mxu0 0.0
        %858 = vmatpush1.msra.mxu0 0.0
        %859 = vmatprep.subr.mxu0 0.0
        %860 = vmatpush1.msra.mxu0 0.0
        %861 = vmatprep.subr.mxu0 0.0
        %862 = vmatpush1.msra.mxu0 0.0
        %863 = vmatprep.subr.mxu0 0.0
        %864 = vmatpush1.msra.mxu0 0.0
        %865 = vmatprep.subr.mxu0 0.0
        %866 = vmatpush1.msra.mxu0 0.0
        %867 = vmatprep.mubr.f32.mxu0 0.0
        %v868 = vand.u32 %v426, 4294901760
        %869 = vmatmul.mubr.f32.gmra.mrb[0].mxu0 %v868
        %v870 = vpop.f32.mrb[0].mxu0
        %v871 = vadd.f32 %v799, %v870
        %v872 = vpop.f32.mrb[0].mxu0
        %873 = vdwg.mxu0
        %v874 = vmax.f32 %v871, 0.0
        %v875 = vmul.f32 %v874, %v874
        %v876 = vmul.f32 %v875, %v874
        %v877 = vld [vmem:[%s3] sm:$0xff]
        %v878 = vld [vmem:[%s3 + $0x8] sm:$0xff]
        %v879 = vld [vmem:[%s3 + $0x10] sm:$0xff]
        %v880 = vld [vmem:[%s3 + $0x18] sm:$0xff]
        %v881 = vld [vmem:[%s3 + $0x20] sm:$0xff]
        %v882 = vld [vmem:[%s3 + $0x28] sm:$0xff]
        %v883 = vld [vmem:[%s3 + $0x30] sm:$0xff]
        %v884 = vld [vmem:[%s3 + $0x38] sm:$0xff]
        %v885 = vld [vmem:[%s3 + $0x40] sm:$0xff]
        %v886 = vld [vmem:[%s3 + $0x48] sm:$0xff]
        %v887 = vld [vmem:[%s3 + $0x50] sm:$0xff]
        %v888 = vld [vmem:[%s3 + $0x58] sm:$0xff]
        %v889 = vld [vmem:[%s3 + $0x60] sm:$0xff]
        %v890 = vld [vmem:[%s3 + $0x68] sm:$0xff]
        %v891 = vld [vmem:[%s3 + $0x70] sm:$0xff]
        %v892 = vld [vmem:[%s3 + $0x78] sm:$0xff]
        %v893 = vld [vmem:[%s4] sm:$0x1]
        %v895 = vlaneseq
        %v896 = vshrl.u32 %v895, 7
        %v897 = vsub.s32 0, %v896
        %v898 = vrot.slane %v893, %v897
        %900 = vmatprep.subr.mxu0 0.0
        %v901 = vand.u32 %v877, 4294901760
        %902 = vmatpush1.msra.mxu0 %v901
        %903 = vmatprep.subr.mxu0 0.0
        %v904 = vand.u32 %v878, 4294901760
        %905 = vmatpush1.msra.mxu0 %v904
        %906 = vmatprep.subr.mxu0 0.0
        %v907 = vand.u32 %v879, 4294901760
        %908 = vmatpush1.msra.mxu0 %v907
        %909 = vmatprep.subr.mxu0 0.0
        %v910 = vand.u32 %v880, 4294901760
        %911 = vmatpush1.msra.mxu0 %v910
        %912 = vmatprep.subr.mxu0 0.0
        %v913 = vand.u32 %v881, 4294901760
        %914 = vmatpush1.msra.mxu0 %v913
        %915 = vmatprep.subr.mxu0 0.0
        %v916 = vand.u32 %v882, 4294901760
        %917 = vmatpush1.msra.mxu0 %v916
        %918 = vmatprep.subr.mxu0 0.0
        %v919 = vand.u32 %v883, 4294901760
        %920 = vmatpush1.msra.mxu0 %v919
        %921 = vmatprep.subr.mxu0 0.0
        %v922 = vand.u32 %v884, 4294901760
        %923 = vmatpush1.msra.mxu0 %v922
        %924 = vmatprep.subr.mxu0 0.0
        %v925 = vand.u32 %v885, 4294901760
        %926 = vmatpush1.msra.mxu0 %v925
        %927 = vmatprep.subr.mxu0 0.0
        %v928 = vand.u32 %v886, 4294901760
        %929 = vmatpush1.msra.mxu0 %v928
        %930 = vmatprep.subr.mxu0 0.0
        %v931 = vand.u32 %v887, 4294901760
        %932 = vmatpush1.msra.mxu0 %v931
        %933 = vmatprep.subr.mxu0 0.0
        %v934 = vand.u32 %v888, 4294901760
        %935 = vmatpush1.msra.mxu0 %v934
        %936 = vmatprep.subr.mxu0 0.0
        %v937 = vand.u32 %v889, 4294901760
        %938 = vmatpush1.msra.mxu0 %v937
        %939 = vmatprep.subr.mxu0 0.0
        %v940 = vand.u32 %v890, 4294901760
        %941 = vmatpush1.msra.mxu0 %v940
        %942 = vmatprep.subr.mxu0 0.0
        %v943 = vand.u32 %v891, 4294901760
        %944 = vmatpush1.msra.mxu0 %v943
        %945 = vmatprep.subr.mxu0 0.0
        %v946 = vand.u32 %v892, 4294901760
        %947 = vmatpush1.msra.mxu0 %v946
        %948 = vmatprep.subr.mxu0 0.0
        %949 = vmatpush1.msra.mxu0 0.0
        %950 = vmatprep.subr.mxu0 0.0
        %951 = vmatpush1.msra.mxu0 0.0
        %952 = vmatprep.subr.mxu0 0.0
        %953 = vmatpush1.msra.mxu0 0.0
        %954 = vmatprep.subr.mxu0 0.0
        %955 = vmatpush1.msra.mxu0 0.0
        %956 = vmatprep.subr.mxu0 0.0
        %957 = vmatpush1.msra.mxu0 0.0
        %958 = vmatprep.subr.mxu0 0.0
        %959 = vmatpush1.msra.mxu0 0.0
        %960 = vmatprep.subr.mxu0 0.0
        %961 = vmatpush1.msra.mxu0 0.0
        %962 = vmatprep.subr.mxu0 0.0
        %963 = vmatpush1.msra.mxu0 0.0
        %964 = vmatprep.subr.mxu0 0.0
        %965 = vmatpush1.msra.mxu0 0.0
        %966 = vmatprep.subr.mxu0 0.0
        %967 = vmatpush1.msra.mxu0 0.0
        %968 = vmatprep.subr.mxu0 0.0
        %969 = vmatpush1.msra.mxu0 0.0
        %970 = vmatprep.subr.mxu0 0.0
        %971 = vmatpush1.msra.mxu0 0.0
        %972 = vmatprep.subr.mxu0 0.0
        %973 = vmatpush1.msra.mxu0 0.0
        %974 = vmatprep.subr.mxu0 0.0
        %975 = vmatpush1.msra.mxu0 0.0
        %976 = vmatprep.subr.mxu0 0.0
        %977 = vmatpush1.msra.mxu0 0.0
        %978 = vmatprep.subr.mxu0 0.0
        %979 = vmatpush1.msra.mxu0 0.0
        %980 = vmatprep.mubr.f32.mxu0 0.0
        %v981 = vand.u32 %v876, 4294901760
        %v982 = vsub.f32 %v876, %v981
        %v983 = vand.u32 %v982, 4294901760
        %v984 = vsub.f32 %v982, %v983
        %v985 = vand.u32 %v984, 4294901760
        %986 = vmatmul.mubr.f32.gmra.mrb[0].mxu0 %v985
        %v987 = vpop.f32.mrb[0].mxu0
        %v988 = vadd.f32 %v898, %v987
        %v989 = vpop.f32.mrb[0].mxu0
        %990 = vdwg.mxu0
        %991 = vmatprep.subr.mxu0 0.0
        %v992 = vand.u32 %v877, 4294901760
        %v993 = vsub.f32 %v877, %v992
        %v994 = vand.u32 %v993, 4294901760
        %v995 = vsub.f32 %v993, %v994
        %v996 = vand.u32 %v995, 4294901760
        %997 = vmatpush1.msra.mxu0 %v996
        %998 = vmatprep.subr.mxu0 0.0
        %v999 = vand.u32 %v878, 4294901760
        %v1000 = vsub.f32 %v878, %v999
        %v1001 = vand.u32 %v1000, 4294901760
        %v1002 = vsub.f32 %v1000, %v1001
        %v1003 = vand.u32 %v1002, 4294901760
        %1004 = vmatpush1.msra.mxu0 %v1003
        %1005 = vmatprep.subr.mxu0 0.0
        %v1006 = vand.u32 %v879, 4294901760
        %v1007 = vsub.f32 %v879, %v1006
        %v1008 = vand.u32 %v1007, 4294901760
        %v1009 = vsub.f32 %v1007, %v1008
        %v1010 = vand.u32 %v1009, 4294901760
        %1011 = vmatpush1.msra.mxu0 %v1010
        %1012 = vmatprep.subr.mxu0 0.0
        %v1013 = vand.u32 %v880, 4294901760
        %v1014 = vsub.f32 %v880, %v1013
        %v1015 = vand.u32 %v1014, 4294901760
        %v1016 = vsub.f32 %v1014, %v1015
        %v1017 = vand.u32 %v1016, 4294901760
        %1018 = vmatpush1.msra.mxu0 %v1017
        %1019 = vmatprep.subr.mxu0 0.0
        %v1020 = vand.u32 %v881, 4294901760
        %v1021 = vsub.f32 %v881, %v1020
        %v1022 = vand.u32 %v1021, 4294901760
        %v1023 = vsub.f32 %v1021, %v1022
        %v1024 = vand.u32 %v1023, 4294901760
        %1025 = vmatpush1.msra.mxu0 %v1024
        %1026 = vmatprep.subr.mxu0 0.0
        %v1027 = vand.u32 %v882, 4294901760
        %v1028 = vsub.f32 %v882, %v1027
        %v1029 = vand.u32 %v1028, 4294901760
        %v1030 = vsub.f32 %v1028, %v1029
        %v1031 = vand.u32 %v1030, 4294901760
        %1032 = vmatpush1.msra.mxu0 %v1031
        %1033 = vmatprep.subr.mxu0 0.0
        %v1034 = vand.u32 %v883, 4294901760
        %v1035 = vsub.f32 %v883, %v1034
        %v1036 = vand.u32 %v1035, 4294901760
        %v1037 = vsub.f32 %v1035, %v1036
        %v1038 = vand.u32 %v1037, 4294901760
        %1039 = vmatpush1.msra.mxu0 %v1038
        %1040 = vmatprep.subr.mxu0 0.0
        %v1041 = vand.u32 %v884, 4294901760
        %v1042 = vsub.f32 %v884, %v1041
        %v1043 = vand.u32 %v1042, 4294901760
        %v1044 = vsub.f32 %v1042, %v1043
        %v1045 = vand.u32 %v1044, 4294901760
        %1046 = vmatpush1.msra.mxu0 %v1045
        %1047 = vmatprep.subr.mxu0 0.0
        %v1048 = vand.u32 %v885, 4294901760
        %v1049 = vsub.f32 %v885, %v1048
        %v1050 = vand.u32 %v1049, 4294901760
        %v1051 = vsub.f32 %v1049, %v1050
        %v1052 = vand.u32 %v1051, 4294901760
        %1053 = vmatpush1.msra.mxu0 %v1052
        %1054 = vmatprep.subr.mxu0 0.0
        %v1055 = vand.u32 %v886, 4294901760
        %v1056 = vsub.f32 %v886, %v1055
        %v1057 = vand.u32 %v1056, 4294901760
        %v1058 = vsub.f32 %v1056, %v1057
        %v1059 = vand.u32 %v1058, 4294901760
        %1060 = vmatpush1.msra.mxu0 %v1059
        %1061 = vmatprep.subr.mxu0 0.0
        %v1062 = vand.u32 %v887, 4294901760
        %v1063 = vsub.f32 %v887, %v1062
        %v1064 = vand.u32 %v1063, 4294901760
        %v1065 = vsub.f32 %v1063, %v1064
        %v1066 = vand.u32 %v1065, 4294901760
        %1067 = vmatpush1.msra.mxu0 %v1066
        %1068 = vmatprep.subr.mxu0 0.0
        %v1069 = vand.u32 %v888, 4294901760
        %v1070 = vsub.f32 %v888, %v1069
        %v1071 = vand.u32 %v1070, 4294901760
        %v1072 = vsub.f32 %v1070, %v1071
        %v1073 = vand.u32 %v1072, 4294901760
        %1074 = vmatpush1.msra.mxu0 %v1073
        %1075 = vmatprep.subr.mxu0 0.0
        %v1076 = vand.u32 %v889, 4294901760
        %v1077 = vsub.f32 %v889, %v1076
        %v1078 = vand.u32 %v1077, 4294901760
        %v1079 = vsub.f32 %v1077, %v1078
        %v1080 = vand.u32 %v1079, 4294901760
        %1081 = vmatpush1.msra.mxu0 %v1080
        %1082 = vmatprep.subr.mxu0 0.0
        %v1083 = vand.u32 %v890, 4294901760
        %v1084 = vsub.f32 %v890, %v1083
        %v1085 = vand.u32 %v1084, 4294901760
        %v1086 = vsub.f32 %v1084, %v1085
        %v1087 = vand.u32 %v1086, 4294901760
        %1088 = vmatpush1.msra.mxu0 %v1087
        %1089 = vmatprep.subr.mxu0 0.0
        %v1090 = vand.u32 %v891, 4294901760
        %v1091 = vsub.f32 %v891, %v1090
        %v1092 = vand.u32 %v1091, 4294901760
        %v1093 = vsub.f32 %v1091, %v1092
        %v1094 = vand.u32 %v1093, 4294901760
        %1095 = vmatpush1.msra.mxu0 %v1094
        %1096 = vmatprep.subr.mxu0 0.0
        %v1097 = vand.u32 %v892, 4294901760
        %v1098 = vsub.f32 %v892, %v1097
        %v1099 = vand.u32 %v1098, 4294901760
        %v1100 = vsub.f32 %v1098, %v1099
        %v1101 = vand.u32 %v1100, 4294901760
        %1102 = vmatpush1.msra.mxu0 %v1101
        %1103 = vmatprep.subr.mxu0 0.0
        %1104 = vmatpush1.msra.mxu0 0.0
        %1105 = vmatprep.subr.mxu0 0.0
        %1106 = vmatpush1.msra.mxu0 0.0
        %1107 = vmatprep.subr.mxu0 0.0
        %1108 = vmatpush1.msra.mxu0 0.0
        %1109 = vmatprep.subr.mxu0 0.0
        %1110 = vmatpush1.msra.mxu0 0.0
        %1111 = vmatprep.subr.mxu0 0.0
        %1112 = vmatpush1.msra.mxu0 0.0
        %1113 = vmatprep.subr.mxu0 0.0
        %1114 = vmatpush1.msra.mxu0 0.0
        %1115 = vmatprep.subr.mxu0 0.0
        %1116 = vmatpush1.msra.mxu0 0.0
        %1117 = vmatprep.subr.mxu0 0.0
        %1118 = vmatpush1.msra.mxu0 0.0
        %1119 = vmatprep.subr.mxu0 0.0
        %1120 = vmatpush1.msra.mxu0 0.0
        %1121 = vmatprep.subr.mxu0 0.0
        %1122 = vmatpush1.msra.mxu0 0.0
        %1123 = vmatprep.subr.mxu0 0.0
        %1124 = vmatpush1.msra.mxu0 0.0
        %1125 = vmatprep.subr.mxu0 0.0
        %1126 = vmatpush1.msra.mxu0 0.0
        %1127 = vmatprep.subr.mxu0 0.0
        %1128 = vmatpush1.msra.mxu0 0.0
        %1129 = vmatprep.subr.mxu0 0.0
        %1130 = vmatpush1.msra.mxu0 0.0
        %1131 = vmatprep.subr.mxu0 0.0
        %1132 = vmatpush1.msra.mxu0 0.0
        %1133 = vmatprep.subr.mxu0 0.0
        %1134 = vmatpush1.msra.mxu0 0.0
        %1135 = vmatprep.mubr.f32.mxu0 0.0
        %v1136 = vand.u32 %v876, 4294901760
        %1137 = vmatmul.mubr.f32.gmra.mrb[0].mxu0 %v1136
        %v1138 = vpop.f32.mrb[0].mxu0
        %v1139 = vadd.f32 %v988, %v1138
        %v1140 = vpop.f32.mrb[0].mxu0
        %1141 = vdwg.mxu0
        %1142 = vmatprep.subr.mxu0 0.0
        %v1143 = vand.u32 %v877, 4294901760
        %v1144 = vsub.f32 %v877, %v1143
        %1145 = vmatpush1.msra.mxu0 %v1144
        %1146 = vmatprep.subr.mxu0 0.0
        %v1147 = vand.u32 %v878, 4294901760
        %v1148 = vsub.f32 %v878, %v1147
        %1149 = vmatpush1.msra.mxu0 %v1148
        %1150 = vmatprep.subr.mxu0 0.0
        %v1151 = vand.u32 %v879, 4294901760
        %v1152 = vsub.f32 %v879, %v1151
        %1153 = vmatpush1.msra.mxu0 %v1152
        %1154 = vmatprep.subr.mxu0 0.0
        %v1155 = vand.u32 %v880, 4294901760
        %v1156 = vsub.f32 %v880, %v1155
        %1157 = vmatpush1.msra.mxu0 %v1156
        %1158 = vmatprep.subr.mxu0 0.0
        %v1159 = vand.u32 %v881, 4294901760
        %v1160 = vsub.f32 %v881, %v1159
        %1161 = vmatpush1.msra.mxu0 %v1160
        %1162 = vmatprep.subr.mxu0 0.0
        %v1163 = vand.u32 %v882, 4294901760
        %v1164 = vsub.f32 %v882, %v1163
        %1165 = vmatpush1.msra.mxu0 %v1164
        %1166 = vmatprep.subr.mxu0 0.0
        %v1167 = vand.u32 %v883, 4294901760
        %v1168 = vsub.f32 %v883, %v1167
        %1169 = vmatpush1.msra.mxu0 %v1168
        %1170 = vmatprep.subr.mxu0 0.0
        %v1171 = vand.u32 %v884, 4294901760
        %v1172 = vsub.f32 %v884, %v1171
        %1173 = vmatpush1.msra.mxu0 %v1172
        %1174 = vmatprep.subr.mxu0 0.0
        %v1175 = vand.u32 %v885, 4294901760
        %v1176 = vsub.f32 %v885, %v1175
        %1177 = vmatpush1.msra.mxu0 %v1176
        %1178 = vmatprep.subr.mxu0 0.0
        %v1179 = vand.u32 %v886, 4294901760
        %v1180 = vsub.f32 %v886, %v1179
        %1181 = vmatpush1.msra.mxu0 %v1180
        %1182 = vmatprep.subr.mxu0 0.0
        %v1183 = vand.u32 %v887, 4294901760
        %v1184 = vsub.f32 %v887, %v1183
        %1185 = vmatpush1.msra.mxu0 %v1184
        %1186 = vmatprep.subr.mxu0 0.0
        %v1187 = vand.u32 %v888, 4294901760
        %v1188 = vsub.f32 %v888, %v1187
        %1189 = vmatpush1.msra.mxu0 %v1188
        %1190 = vmatprep.subr.mxu0 0.0
        %v1191 = vand.u32 %v889, 4294901760
        %v1192 = vsub.f32 %v889, %v1191
        %1193 = vmatpush1.msra.mxu0 %v1192
        %1194 = vmatprep.subr.mxu0 0.0
        %v1195 = vand.u32 %v890, 4294901760
        %v1196 = vsub.f32 %v890, %v1195
        %1197 = vmatpush1.msra.mxu0 %v1196
        %1198 = vmatprep.subr.mxu0 0.0
        %v1199 = vand.u32 %v891, 4294901760
        %v1200 = vsub.f32 %v891, %v1199
        %1201 = vmatpush1.msra.mxu0 %v1200
        %1202 = vmatprep.subr.mxu0 0.0
        %v1203 = vand.u32 %v892, 4294901760
        %v1204 = vsub.f32 %v892, %v1203
        %1205 = vmatpush1.msra.mxu0 %v1204
        %1206 = vmatprep.subr.mxu0 0.0
        %1207 = vmatpush1.msra.mxu0 0.0
        %1208 = vmatprep.subr.mxu0 0.0
        %1209 = vmatpush1.msra.mxu0 0.0
        %1210 = vmatprep.subr.mxu0 0.0
        %1211 = vmatpush1.msra.mxu0 0.0
        %1212 = vmatprep.subr.mxu0 0.0
        %1213 = vmatpush1.msra.mxu0 0.0
        %1214 = vmatprep.subr.mxu0 0.0
        %1215 = vmatpush1.msra.mxu0 0.0
        %1216 = vmatprep.subr.mxu0 0.0
        %1217 = vmatpush1.msra.mxu0 0.0
        %1218 = vmatprep.subr.mxu0 0.0
        %1219 = vmatpush1.msra.mxu0 0.0
        %1220 = vmatprep.subr.mxu0 0.0
        %1221 = vmatpush1.msra.mxu0 0.0
        %1222 = vmatprep.subr.mxu0 0.0
        %1223 = vmatpush1.msra.mxu0 0.0
        %1224 = vmatprep.subr.mxu0 0.0
        %1225 = vmatpush1.msra.mxu0 0.0
        %1226 = vmatprep.subr.mxu0 0.0
        %1227 = vmatpush1.msra.mxu0 0.0
        %1228 = vmatprep.subr.mxu0 0.0
        %1229 = vmatpush1.msra.mxu0 0.0
        %1230 = vmatprep.subr.mxu0 0.0
        %1231 = vmatpush1.msra.mxu0 0.0
        %1232 = vmatprep.subr.mxu0 0.0
        %1233 = vmatpush1.msra.mxu0 0.0
        %1234 = vmatprep.subr.mxu0 0.0
        %1235 = vmatpush1.msra.mxu0 0.0
        %1236 = vmatprep.subr.mxu0 0.0
        %1237 = vmatpush1.msra.mxu0 0.0
        %1238 = vmatprep.mubr.f32.mxu0 0.0
        %v1239 = vand.u32 %v876, 4294901760
        %v1240 = vsub.f32 %v876, %v1239
        %1241 = vmatmul.mubr.f32.gmra.mrb[0].mxu0 %v1240
        %v1242 = vpop.f32.mrb[0].mxu0
        %v1243 = vadd.f32 %v1139, %v1242
        %v1244 = vpop.f32.mrb[0].mxu0
        %1245 = vdwg.mxu0
        %1246 = vmatprep.subr.mxu0 0.0
        %v1247 = vand.u32 %v877, 4294901760
        %1248 = vmatpush1.msra.mxu0 %v1247
        %1249 = vmatprep.subr.mxu0 0.0
        %v1250 = vand.u32 %v878, 4294901760
        %1251 = vmatpush1.msra.mxu0 %v1250
        %1252 = vmatprep.subr.mxu0 0.0
        %v1253 = vand.u32 %v879, 4294901760
        %1254 = vmatpush1.msra.mxu0 %v1253
        %1255 = vmatprep.subr.mxu0 0.0
        %v1256 = vand.u32 %v880, 4294901760
        %1257 = vmatpush1.msra.mxu0 %v1256
        %1258 = vmatprep.subr.mxu0 0.0
        %v1259 = vand.u32 %v881, 4294901760
        %1260 = vmatpush1.msra.mxu0 %v1259
        %1261 = vmatprep.subr.mxu0 0.0
        %v1262 = vand.u32 %v882, 4294901760
        %1263 = vmatpush1.msra.mxu0 %v1262
        %1264 = vmatprep.subr.mxu0 0.0
        %v1265 = vand.u32 %v883, 4294901760
        %1266 = vmatpush1.msra.mxu0 %v1265
        %1267 = vmatprep.subr.mxu0 0.0
        %v1268 = vand.u32 %v884, 4294901760
        %1269 = vmatpush1.msra.mxu0 %v1268
        %1270 = vmatprep.subr.mxu0 0.0
        %v1271 = vand.u32 %v885, 4294901760
        %1272 = vmatpush1.msra.mxu0 %v1271
        %1273 = vmatprep.subr.mxu0 0.0
        %v1274 = vand.u32 %v886, 4294901760
        %1275 = vmatpush1.msra.mxu0 %v1274
        %1276 = vmatprep.subr.mxu0 0.0
        %v1277 = vand.u32 %v887, 4294901760
        %1278 = vmatpush1.msra.mxu0 %v1277
        %1279 = vmatprep.subr.mxu0 0.0
        %v1280 = vand.u32 %v888, 4294901760
        %1281 = vmatpush1.msra.mxu0 %v1280
        %1282 = vmatprep.subr.mxu0 0.0
        %v1283 = vand.u32 %v889, 4294901760
        %1284 = vmatpush1.msra.mxu0 %v1283
        %1285 = vmatprep.subr.mxu0 0.0
        %v1286 = vand.u32 %v890, 4294901760
        %1287 = vmatpush1.msra.mxu0 %v1286
        %1288 = vmatprep.subr.mxu0 0.0
        %v1289 = vand.u32 %v891, 4294901760
        %1290 = vmatpush1.msra.mxu0 %v1289
        %1291 = vmatprep.subr.mxu0 0.0
        %v1292 = vand.u32 %v892, 4294901760
        %1293 = vmatpush1.msra.mxu0 %v1292
        %1294 = vmatprep.subr.mxu0 0.0
        %1295 = vmatpush1.msra.mxu0 0.0
        %1296 = vmatprep.subr.mxu0 0.0
        %1297 = vmatpush1.msra.mxu0 0.0
        %1298 = vmatprep.subr.mxu0 0.0
        %1299 = vmatpush1.msra.mxu0 0.0
        %1300 = vmatprep.subr.mxu0 0.0
        %1301 = vmatpush1.msra.mxu0 0.0
        %1302 = vmatprep.subr.mxu0 0.0
        %1303 = vmatpush1.msra.mxu0 0.0
        %1304 = vmatprep.subr.mxu0 0.0
        %1305 = vmatpush1.msra.mxu0 0.0
        %1306 = vmatprep.subr.mxu0 0.0
        %1307 = vmatpush1.msra.mxu0 0.0
        %1308 = vmatprep.subr.mxu0 0.0
        %1309 = vmatpush1.msra.mxu0 0.0
        %1310 = vmatprep.subr.mxu0 0.0
        %1311 = vmatpush1.msra.mxu0 0.0
        %1312 = vmatprep.subr.mxu0 0.0
        %1313 = vmatpush1.msra.mxu0 0.0
        %1314 = vmatprep.subr.mxu0 0.0
        %1315 = vmatpush1.msra.mxu0 0.0
        %1316 = vmatprep.subr.mxu0 0.0
        %1317 = vmatpush1.msra.mxu0 0.0
        %1318 = vmatprep.subr.mxu0 0.0
        %1319 = vmatpush1.msra.mxu0 0.0
        %1320 = vmatprep.subr.mxu0 0.0
        %1321 = vmatpush1.msra.mxu0 0.0
        %1322 = vmatprep.subr.mxu0 0.0
        %1323 = vmatpush1.msra.mxu0 0.0
        %1324 = vmatprep.subr.mxu0 0.0
        %1325 = vmatpush1.msra.mxu0 0.0
        %1326 = vmatprep.mubr.f32.mxu0 0.0
        %v1327 = vand.u32 %v876, 4294901760
        %v1328 = vsub.f32 %v876, %v1327
        %v1329 = vand.u32 %v1328, 4294901760
        %1330 = vmatmul.mubr.f32.gmra.mrb[0].mxu0 %v1329
        %v1331 = vpop.f32.mrb[0].mxu0
        %v1332 = vadd.f32 %v1243, %v1331
        %v1333 = vpop.f32.mrb[0].mxu0
        %1334 = vdwg.mxu0
        %1335 = vmatprep.subr.mxu0 0.0
        %v1336 = vand.u32 %v877, 4294901760
        %v1337 = vsub.f32 %v877, %v1336
        %v1338 = vand.u32 %v1337, 4294901760
        %1339 = vmatpush1.msra.mxu0 %v1338
        %1340 = vmatprep.subr.mxu0 0.0
        %v1341 = vand.u32 %v878, 4294901760
        %v1342 = vsub.f32 %v878, %v1341
        %v1343 = vand.u32 %v1342, 4294901760
        %1344 = vmatpush1.msra.mxu0 %v1343
        %1345 = vmatprep.subr.mxu0 0.0
        %v1346 = vand.u32 %v879, 4294901760
        %v1347 = vsub.f32 %v879, %v1346
        %v1348 = vand.u32 %v1347, 4294901760
        %1349 = vmatpush1.msra.mxu0 %v1348
        %1350 = vmatprep.subr.mxu0 0.0
        %v1351 = vand.u32 %v880, 4294901760
        %v1352 = vsub.f32 %v880, %v1351
        %v1353 = vand.u32 %v1352, 4294901760
        %1354 = vmatpush1.msra.mxu0 %v1353
        %1355 = vmatprep.subr.mxu0 0.0
        %v1356 = vand.u32 %v881, 4294901760
        %v1357 = vsub.f32 %v881, %v1356
        %v1358 = vand.u32 %v1357, 4294901760
        %1359 = vmatpush1.msra.mxu0 %v1358
        %1360 = vmatprep.subr.mxu0 0.0
        %v1361 = vand.u32 %v882, 4294901760
        %v1362 = vsub.f32 %v882, %v1361
        %v1363 = vand.u32 %v1362, 4294901760
        %1364 = vmatpush1.msra.mxu0 %v1363
        %1365 = vmatprep.subr.mxu0 0.0
        %v1366 = vand.u32 %v883, 4294901760
        %v1367 = vsub.f32 %v883, %v1366
        %v1368 = vand.u32 %v1367, 4294901760
        %1369 = vmatpush1.msra.mxu0 %v1368
        %1370 = vmatprep.subr.mxu0 0.0
        %v1371 = vand.u32 %v884, 4294901760
        %v1372 = vsub.f32 %v884, %v1371
        %v1373 = vand.u32 %v1372, 4294901760
        %1374 = vmatpush1.msra.mxu0 %v1373
        %1375 = vmatprep.subr.mxu0 0.0
        %v1376 = vand.u32 %v885, 4294901760
        %v1377 = vsub.f32 %v885, %v1376
        %v1378 = vand.u32 %v1377, 4294901760
        %1379 = vmatpush1.msra.mxu0 %v1378
        %1380 = vmatprep.subr.mxu0 0.0
        %v1381 = vand.u32 %v886, 4294901760
        %v1382 = vsub.f32 %v886, %v1381
        %v1383 = vand.u32 %v1382, 4294901760
        %1384 = vmatpush1.msra.mxu0 %v1383
        %1385 = vmatprep.subr.mxu0 0.0
        %v1386 = vand.u32 %v887, 4294901760
        %v1387 = vsub.f32 %v887, %v1386
        %v1388 = vand.u32 %v1387, 4294901760
        %1389 = vmatpush1.msra.mxu0 %v1388
        %1390 = vmatprep.subr.mxu0 0.0
        %v1391 = vand.u32 %v888, 4294901760
        %v1392 = vsub.f32 %v888, %v1391
        %v1393 = vand.u32 %v1392, 4294901760
        %1394 = vmatpush1.msra.mxu0 %v1393
        %1395 = vmatprep.subr.mxu0 0.0
        %v1396 = vand.u32 %v889, 4294901760
        %v1397 = vsub.f32 %v889, %v1396
        %v1398 = vand.u32 %v1397, 4294901760
        %1399 = vmatpush1.msra.mxu0 %v1398
        %1400 = vmatprep.subr.mxu0 0.0
        %v1401 = vand.u32 %v890, 4294901760
        %v1402 = vsub.f32 %v890, %v1401
        %v1403 = vand.u32 %v1402, 4294901760
        %1404 = vmatpush1.msra.mxu0 %v1403
        %1405 = vmatprep.subr.mxu0 0.0
        %v1406 = vand.u32 %v891, 4294901760
        %v1407 = vsub.f32 %v891, %v1406
        %v1408 = vand.u32 %v1407, 4294901760
        %1409 = vmatpush1.msra.mxu0 %v1408
        %1410 = vmatprep.subr.mxu0 0.0
        %v1411 = vand.u32 %v892, 4294901760
        %v1412 = vsub.f32 %v892, %v1411
        %v1413 = vand.u32 %v1412, 4294901760
        %1414 = vmatpush1.msra.mxu0 %v1413
        %1415 = vmatprep.subr.mxu0 0.0
        %1416 = vmatpush1.msra.mxu0 0.0
        %1417 = vmatprep.subr.mxu0 0.0
        %1418 = vmatpush1.msra.mxu0 0.0
        %1419 = vmatprep.subr.mxu0 0.0
        %1420 = vmatpush1.msra.mxu0 0.0
        %1421 = vmatprep.subr.mxu0 0.0
        %1422 = vmatpush1.msra.mxu0 0.0
        %1423 = vmatprep.subr.mxu0 0.0
        %1424 = vmatpush1.msra.mxu0 0.0
        %1425 = vmatprep.subr.mxu0 0.0
        %1426 = vmatpush1.msra.mxu0 0.0
        %1427 = vmatprep.subr.mxu0 0.0
        %1428 = vmatpush1.msra.mxu0 0.0
        %1429 = vmatprep.subr.mxu0 0.0
        %1430 = vmatpush1.msra.mxu0 0.0
        %1431 = vmatprep.subr.mxu0 0.0
        %1432 = vmatpush1.msra.mxu0 0.0
        %1433 = vmatprep.subr.mxu0 0.0
        %1434 = vmatpush1.msra.mxu0 0.0
        %1435 = vmatprep.subr.mxu0 0.0
        %1436 = vmatpush1.msra.mxu0 0.0
        %1437 = vmatprep.subr.mxu0 0.0
        %1438 = vmatpush1.msra.mxu0 0.0
        %1439 = vmatprep.subr.mxu0 0.0
        %1440 = vmatpush1.msra.mxu0 0.0
        %1441 = vmatprep.subr.mxu0 0.0
        %1442 = vmatpush1.msra.mxu0 0.0
        %1443 = vmatprep.subr.mxu0 0.0
        %1444 = vmatpush1.msra.mxu0 0.0
        %1445 = vmatprep.subr.mxu0 0.0
        %1446 = vmatpush1.msra.mxu0 0.0
        %1447 = vmatprep.mubr.f32.mxu0 0.0
        %v1448 = vand.u32 %v876, 4294901760
        %1449 = vmatmul.mubr.f32.gmra.mrb[0].mxu0 %v1448
        %v1450 = vpop.f32.mrb[0].mxu0
        %v1451 = vadd.f32 %v1332, %v1450
        %v1452 = vpop.f32.mrb[0].mxu0
        %1453 = vdwg.mxu0
        %1454 = vmatprep.subr.mxu0 0.0
        %v1455 = vand.u32 %v877, 4294901760
        %1456 = vmatpush1.msra.mxu0 %v1455
        %1457 = vmatprep.subr.mxu0 0.0
        %v1458 = vand.u32 %v878, 4294901760
        %1459 = vmatpush1.msra.mxu0 %v1458
        %1460 = vmatprep.subr.mxu0 0.0
        %v1461 = vand.u32 %v879, 4294901760
        %1462 = vmatpush1.msra.mxu0 %v1461
        %1463 = vmatprep.subr.mxu0 0.0
        %v1464 = vand.u32 %v880, 4294901760
        %1465 = vmatpush1.msra.mxu0 %v1464
        %1466 = vmatprep.subr.mxu0 0.0
        %v1467 = vand.u32 %v881, 4294901760
        %1468 = vmatpush1.msra.mxu0 %v1467
        %1469 = vmatprep.subr.mxu0 0.0
        %v1470 = vand.u32 %v882, 4294901760
        %1471 = vmatpush1.msra.mxu0 %v1470
        %1472 = vmatprep.subr.mxu0 0.0
        %v1473 = vand.u32 %v883, 4294901760
        %1474 = vmatpush1.msra.mxu0 %v1473
        %1475 = vmatprep.subr.mxu0 0.0
        %v1476 = vand.u32 %v884, 4294901760
        %1477 = vmatpush1.msra.mxu0 %v1476
        %1478 = vmatprep.subr.mxu0 0.0
        %v1479 = vand.u32 %v885, 4294901760
        %1480 = vmatpush1.msra.mxu0 %v1479
        %1481 = vmatprep.subr.mxu0 0.0
        %v1482 = vand.u32 %v886, 4294901760
        %1483 = vmatpush1.msra.mxu0 %v1482
        %1484 = vmatprep.subr.mxu0 0.0
        %v1485 = vand.u32 %v887, 4294901760
        %1486 = vmatpush1.msra.mxu0 %v1485
        %1487 = vmatprep.subr.mxu0 0.0
        %v1488 = vand.u32 %v888, 4294901760
        %1489 = vmatpush1.msra.mxu0 %v1488
        %1490 = vmatprep.subr.mxu0 0.0
        %v1491 = vand.u32 %v889, 4294901760
        %1492 = vmatpush1.msra.mxu0 %v1491
        %1493 = vmatprep.subr.mxu0 0.0
        %v1494 = vand.u32 %v890, 4294901760
        %1495 = vmatpush1.msra.mxu0 %v1494
        %1496 = vmatprep.subr.mxu0 0.0
        %v1497 = vand.u32 %v891, 4294901760
        %1498 = vmatpush1.msra.mxu0 %v1497
        %1499 = vmatprep.subr.mxu0 0.0
        %v1500 = vand.u32 %v892, 4294901760
        %1501 = vmatpush1.msra.mxu0 %v1500
        %1502 = vmatprep.subr.mxu0 0.0
        %1503 = vmatpush1.msra.mxu0 0.0
        %1504 = vmatprep.subr.mxu0 0.0
        %1505 = vmatpush1.msra.mxu0 0.0
        %1506 = vmatprep.subr.mxu0 0.0
        %1507 = vmatpush1.msra.mxu0 0.0
        %1508 = vmatprep.subr.mxu0 0.0
        %1509 = vmatpush1.msra.mxu0 0.0
        %1510 = vmatprep.subr.mxu0 0.0
        %1511 = vmatpush1.msra.mxu0 0.0
        %1512 = vmatprep.subr.mxu0 0.0
        %1513 = vmatpush1.msra.mxu0 0.0
        %1514 = vmatprep.subr.mxu0 0.0
        %1515 = vmatpush1.msra.mxu0 0.0
        %1516 = vmatprep.subr.mxu0 0.0
        %1517 = vmatpush1.msra.mxu0 0.0
        %1518 = vmatprep.subr.mxu0 0.0
        %1519 = vmatpush1.msra.mxu0 0.0
        %1520 = vmatprep.subr.mxu0 0.0
        %1521 = vmatpush1.msra.mxu0 0.0
        %1522 = vmatprep.subr.mxu0 0.0
        %1523 = vmatpush1.msra.mxu0 0.0
        %1524 = vmatprep.subr.mxu0 0.0
        %1525 = vmatpush1.msra.mxu0 0.0
        %1526 = vmatprep.subr.mxu0 0.0
        %1527 = vmatpush1.msra.mxu0 0.0
        %1528 = vmatprep.subr.mxu0 0.0
        %1529 = vmatpush1.msra.mxu0 0.0
        %1530 = vmatprep.subr.mxu0 0.0
        %1531 = vmatpush1.msra.mxu0 0.0
        %1532 = vmatprep.subr.mxu0 0.0
        %1533 = vmatpush1.msra.mxu0 0.0
        %1534 = vmatprep.mubr.f32.mxu0 0.0
        %v1535 = vand.u32 %v876, 4294901760
        %1536 = vmatmul.mubr.f32.gmra.mrb[0].mxu0 %v1535
        %v1537 = vpop.f32.mrb[0].mxu0
        %v1538 = vadd.f32 %v1451, %v1537
        %v1539 = vpop.f32.mrb[0].mxu0
        %1540 = vdwg.mxu0
        %v1541 = vmax.f32 %v1538, 0.0
        %v1542 = vmul.f32 %v1541, %v1541
        %v1543 = vmul.f32 %v1542, %v1541
        %v1544 = vadd.f32 %v1543, %v416
        %v1545 = vld [vmem:[#allocation3] sm:$0xff]
        %v1546 = vld [vmem:[#allocation3 + $0x8] sm:$0xff]
        %v1547 = vld [vmem:[#allocation3 + $0x10] sm:$0xff]
        %v1548 = vld [vmem:[#allocation3 + $0x18] sm:$0xff]
        %v1549 = vld [vmem:[#allocation3 + $0x20] sm:$0xff]
        %v1550 = vld [vmem:[#allocation3 + $0x28] sm:$0xff]
        %v1551 = vld [vmem:[#allocation3 + $0x30] sm:$0xff]
        %v1552 = vld [vmem:[#allocation3 + $0x38] sm:$0xff]
        %v1553 = vld [vmem:[#allocation3 + $0x40] sm:$0xff]
        %v1554 = vld [vmem:[#allocation3 + $0x48] sm:$0xff]
        %v1555 = vld [vmem:[#allocation3 + $0x50] sm:$0xff]
        %v1556 = vld [vmem:[#allocation3 + $0x58] sm:$0xff]
        %v1557 = vld [vmem:[#allocation3 + $0x60] sm:$0xff]
        %v1558 = vld [vmem:[#allocation3 + $0x68] sm:$0xff]
        %v1559 = vld [vmem:[#allocation3 + $0x70] sm:$0xff]
        %v1560 = vld [vmem:[#allocation3 + $0x78] sm:$0xff]
        %v1561 = vld [vmem:[%s6] sm:$0x1]
        %v1563 = vlaneseq
        %v1564 = vshrl.u32 %v1563, 7
        %v1565 = vsub.s32 0, %v1564
        %v1566 = vrot.slane %v1561, %v1565
        %1568 = vmatprep.subr.mxu0 0.0
        %v1569 = vand.u32 %v1545, 4294901760
        %1570 = vmatpush1.msra.mxu0 %v1569
        %1571 = vmatprep.subr.mxu0 0.0
        %v1572 = vand.u32 %v1546, 4294901760
        %1573 = vmatpush1.msra.mxu0 %v1572
        %1574 = vmatprep.subr.mxu0 0.0
        %v1575 = vand.u32 %v1547, 4294901760
        %1576 = vmatpush1.msra.mxu0 %v1575
        %1577 = vmatprep.subr.mxu0 0.0
        %v1578 = vand.u32 %v1548, 4294901760
        %1579 = vmatpush1.msra.mxu0 %v1578
        %1580 = vmatprep.subr.mxu0 0.0
        %v1581 = vand.u32 %v1549, 4294901760
        %1582 = vmatpush1.msra.mxu0 %v1581
        %1583 = vmatprep.subr.mxu0 0.0
        %v1584 = vand.u32 %v1550, 4294901760
        %1585 = vmatpush1.msra.mxu0 %v1584
        %1586 = vmatprep.subr.mxu0 0.0
        %v1587 = vand.u32 %v1551, 4294901760
        %1588 = vmatpush1.msra.mxu0 %v1587
        %1589 = vmatprep.subr.mxu0 0.0
        %v1590 = vand.u32 %v1552, 4294901760
        %1591 = vmatpush1.msra.mxu0 %v1590
        %1592 = vmatprep.subr.mxu0 0.0
        %v1593 = vand.u32 %v1553, 4294901760
        %1594 = vmatpush1.msra.mxu0 %v1593
        %1595 = vmatprep.subr.mxu0 0.0
        %v1596 = vand.u32 %v1554, 4294901760
        %1597 = vmatpush1.msra.mxu0 %v1596
        %1598 = vmatprep.subr.mxu0 0.0
        %v1599 = vand.u32 %v1555, 4294901760
        %1600 = vmatpush1.msra.mxu0 %v1599
        %1601 = vmatprep.subr.mxu0 0.0
        %v1602 = vand.u32 %v1556, 4294901760
        %1603 = vmatpush1.msra.mxu0 %v1602
        %1604 = vmatprep.subr.mxu0 0.0
        %v1605 = vand.u32 %v1557, 4294901760
        %1606 = vmatpush1.msra.mxu0 %v1605
        %1607 = vmatprep.subr.mxu0 0.0
        %v1608 = vand.u32 %v1558, 4294901760
        %1609 = vmatpush1.msra.mxu0 %v1608
        %1610 = vmatprep.subr.mxu0 0.0
        %v1611 = vand.u32 %v1559, 4294901760
        %1612 = vmatpush1.msra.mxu0 %v1611
        %1613 = vmatprep.subr.mxu0 0.0
        %v1614 = vand.u32 %v1560, 4294901760
        %1615 = vmatpush1.msra.mxu0 %v1614
        %1616 = vmatprep.subr.mxu0 0.0
        %1617 = vmatpush1.msra.mxu0 0.0
        %1618 = vmatprep.subr.mxu0 0.0
        %1619 = vmatpush1.msra.mxu0 0.0
        %1620 = vmatprep.subr.mxu0 0.0
        %1621 = vmatpush1.msra.mxu0 0.0
        %1622 = vmatprep.subr.mxu0 0.0
        %1623 = vmatpush1.msra.mxu0 0.0
        %1624 = vmatprep.subr.mxu0 0.0
        %1625 = vmatpush1.msra.mxu0 0.0
        %1626 = vmatprep.subr.mxu0 0.0
        %1627 = vmatpush1.msra.mxu0 0.0
        %1628 = vmatprep.subr.mxu0 0.0
        %1629 = vmatpush1.msra.mxu0 0.0
        %1630 = vmatprep.subr.mxu0 0.0
        %1631 = vmatpush1.msra.mxu0 0.0
        %1632 = vmatprep.subr.mxu0 0.0
        %1633 = vmatpush1.msra.mxu0 0.0
        %1634 = vmatprep.subr.mxu0 0.0
        %1635 = vmatpush1.msra.mxu0 0.0
        %1636 = vmatprep.subr.mxu0 0.0
        %1637 = vmatpush1.msra.mxu0 0.0
        %1638 = vmatprep.subr.mxu0 0.0
        %1639 = vmatpush1.msra.mxu0 0.0
        %1640 = vmatprep.subr.mxu0 0.0
        %1641 = vmatpush1.msra.mxu0 0.0
        %1642 = vmatprep.subr.mxu0 0.0
        %1643 = vmatpush1.msra.mxu0 0.0
        %1644 = vmatprep.subr.mxu0 0.0
        %1645 = vmatpush1.msra.mxu0 0.0
        %1646 = vmatprep.subr.mxu0 0.0
        %1647 = vmatpush1.msra.mxu0 0.0
        %1648 = vmatprep.mubr.f32.mxu0 0.0
        %v1649 = vand.u32 %v1544, 4294901760
        %v1650 = vsub.f32 %v1544, %v1649
        %v1651 = vand.u32 %v1650, 4294901760
        %v1652 = vsub.f32 %v1650, %v1651
        %v1653 = vand.u32 %v1652, 4294901760
        %1654 = vmatmul.mubr.f32.gmra.mrb[0].mxu0 %v1653
        %v1655 = vpop.f32.mrb[0].mxu0
        %v1656 = vadd.f32 %v1566, %v1655
        %v1657 = vpop.f32.mrb[0].mxu0
        %1658 = vdwg.mxu0
        %1659 = vmatprep.subr.mxu0 0.0
        %v1660 = vand.u32 %v1545, 4294901760
        %v1661 = vsub.f32 %v1545, %v1660
        %v1662 = vand.u32 %v1661, 4294901760
        %v1663 = vsub.f32 %v1661, %v1662
        %v1664 = vand.u32 %v1663, 4294901760
        %1665 = vmatpush1.msra.mxu0 %v1664
        %1666 = vmatprep.subr.mxu0 0.0
        %v1667 = vand.u32 %v1546, 4294901760
        %v1668 = vsub.f32 %v1546, %v1667
        %v1669 = vand.u32 %v1668, 4294901760
        %v1670 = vsub.f32 %v1668, %v1669
        %v1671 = vand.u32 %v1670, 4294901760
        %1672 = vmatpush1.msra.mxu0 %v1671
        %1673 = vmatprep.subr.mxu0 0.0
        %v1674 = vand.u32 %v1547, 4294901760
        %v1675 = vsub.f32 %v1547, %v1674
        %v1676 = vand.u32 %v1675, 4294901760
        %v1677 = vsub.f32 %v1675, %v1676
        %v1678 = vand.u32 %v1677, 4294901760
        %1679 = vmatpush1.msra.mxu0 %v1678
        %1680 = vmatprep.subr.mxu0 0.0
        %v1681 = vand.u32 %v1548, 4294901760
        %v1682 = vsub.f32 %v1548, %v1681
        %v1683 = vand.u32 %v1682, 4294901760
        %v1684 = vsub.f32 %v1682, %v1683
        %v1685 = vand.u32 %v1684, 4294901760
        %1686 = vmatpush1.msra.mxu0 %v1685
        %1687 = vmatprep.subr.mxu0 0.0
        %v1688 = vand.u32 %v1549, 4294901760
        %v1689 = vsub.f32 %v1549, %v1688
        %v1690 = vand.u32 %v1689, 4294901760
        %v1691 = vsub.f32 %v1689, %v1690
        %v1692 = vand.u32 %v1691, 4294901760
        %1693 = vmatpush1.msra.mxu0 %v1692
        %1694 = vmatprep.subr.mxu0 0.0
        %v1695 = vand.u32 %v1550, 4294901760
        %v1696 = vsub.f32 %v1550, %v1695
        %v1697 = vand.u32 %v1696, 4294901760
        %v1698 = vsub.f32 %v1696, %v1697
        %v1699 = vand.u32 %v1698, 4294901760
        %1700 = vmatpush1.msra.mxu0 %v1699
        %1701 = vmatprep.subr.mxu0 0.0
        %v1702 = vand.u32 %v1551, 4294901760
        %v1703 = vsub.f32 %v1551, %v1702
        %v1704 = vand.u32 %v1703, 4294901760
        %v1705 = vsub.f32 %v1703, %v1704
        %v1706 = vand.u32 %v1705, 4294901760
        %1707 = vmatpush1.msra.mxu0 %v1706
        %1708 = vmatprep.subr.mxu0 0.0
        %v1709 = vand.u32 %v1552, 4294901760
        %v1710 = vsub.f32 %v1552, %v1709
        %v1711 = vand.u32 %v1710, 4294901760
        %v1712 = vsub.f32 %v1710, %v1711
        %v1713 = vand.u32 %v1712, 4294901760
        %1714 = vmatpush1.msra.mxu0 %v1713
        %1715 = vmatprep.subr.mxu0 0.0
        %v1716 = vand.u32 %v1553, 4294901760
        %v1717 = vsub.f32 %v1553, %v1716
        %v1718 = vand.u32 %v1717, 4294901760
        %v1719 = vsub.f32 %v1717, %v1718
        %v1720 = vand.u32 %v1719, 4294901760
        %1721 = vmatpush1.msra.mxu0 %v1720
        %1722 = vmatprep.subr.mxu0 0.0
        %v1723 = vand.u32 %v1554, 4294901760
        %v1724 = vsub.f32 %v1554, %v1723
        %v1725 = vand.u32 %v1724, 4294901760
        %v1726 = vsub.f32 %v1724, %v1725
        %v1727 = vand.u32 %v1726, 4294901760
        %1728 = vmatpush1.msra.mxu0 %v1727
        %1729 = vmatprep.subr.mxu0 0.0
        %v1730 = vand.u32 %v1555, 4294901760
        %v1731 = vsub.f32 %v1555, %v1730
        %v1732 = vand.u32 %v1731, 4294901760
        %v1733 = vsub.f32 %v1731, %v1732
        %v1734 = vand.u32 %v1733, 4294901760
        %1735 = vmatpush1.msra.mxu0 %v1734
        %1736 = vmatprep.subr.mxu0 0.0
        %v1737 = vand.u32 %v1556, 4294901760
        %v1738 = vsub.f32 %v1556, %v1737
        %v1739 = vand.u32 %v1738, 4294901760
        %v1740 = vsub.f32 %v1738, %v1739
        %v1741 = vand.u32 %v1740, 4294901760
        %1742 = vmatpush1.msra.mxu0 %v1741
        %1743 = vmatprep.subr.mxu0 0.0
        %v1744 = vand.u32 %v1557, 4294901760
        %v1745 = vsub.f32 %v1557, %v1744
        %v1746 = vand.u32 %v1745, 4294901760
        %v1747 = vsub.f32 %v1745, %v1746
        %v1748 = vand.u32 %v1747, 4294901760
        %1749 = vmatpush1.msra.mxu0 %v1748
        %1750 = vmatprep.subr.mxu0 0.0
        %v1751 = vand.u32 %v1558, 4294901760
        %v1752 = vsub.f32 %v1558, %v1751
        %v1753 = vand.u32 %v1752, 4294901760
        %v1754 = vsub.f32 %v1752, %v1753
        %v1755 = vand.u32 %v1754, 4294901760
        %1756 = vmatpush1.msra.mxu0 %v1755
        %1757 = vmatprep.subr.mxu0 0.0
        %v1758 = vand.u32 %v1559, 4294901760
        %v1759 = vsub.f32 %v1559, %v1758
        %v1760 = vand.u32 %v1759, 4294901760
        %v1761 = vsub.f32 %v1759, %v1760
        %v1762 = vand.u32 %v1761, 4294901760
        %1763 = vmatpush1.msra.mxu0 %v1762
        %1764 = vmatprep.subr.mxu0 0.0
        %v1765 = vand.u32 %v1560, 4294901760
        %v1766 = vsub.f32 %v1560, %v1765
        %v1767 = vand.u32 %v1766, 4294901760
        %v1768 = vsub.f32 %v1766, %v1767
        %v1769 = vand.u32 %v1768, 4294901760
        %1770 = vmatpush1.msra.mxu0 %v1769
        %1771 = vmatprep.subr.mxu0 0.0
        %1772 = vmatpush1.msra.mxu0 0.0
        %1773 = vmatprep.subr.mxu0 0.0
        %1774 = vmatpush1.msra.mxu0 0.0
        %1775 = vmatprep.subr.mxu0 0.0
        %1776 = vmatpush1.msra.mxu0 0.0
        %1777 = vmatprep.subr.mxu0 0.0
        %1778 = vmatpush1.msra.mxu0 0.0
        %1779 = vmatprep.subr.mxu0 0.0
        %1780 = vmatpush1.msra.mxu0 0.0
        %1781 = vmatprep.subr.mxu0 0.0
        %1782 = vmatpush1.msra.mxu0 0.0
        %1783 = vmatprep.subr.mxu0 0.0
        %1784 = vmatpush1.msra.mxu0 0.0
        %1785 = vmatprep.subr.mxu0 0.0
        %1786 = vmatpush1.msra.mxu0 0.0
        %1787 = vmatprep.subr.mxu0 0.0
        %1788 = vmatpush1.msra.mxu0 0.0
        %1789 = vmatprep.subr.mxu0 0.0
        %1790 = vmatpush1.msra.mxu0 0.0
        %1791 = vmatprep.subr.mxu0 0.0
        %1792 = vmatpush1.msra.mxu0 0.0
        %1793 = vmatprep.subr.mxu0 0.0
        %1794 = vmatpush1.msra.mxu0 0.0
        %1795 = vmatprep.subr.mxu0 0.0
        %1796 = vmatpush1.msra.mxu0 0.0
        %1797 = vmatprep.subr.mxu0 0.0
        %1798 = vmatpush1.msra.mxu0 0.0
        %1799 = vmatprep.subr.mxu0 0.0
        %1800 = vmatpush1.msra.mxu0 0.0
        %1801 = vmatprep.subr.mxu0 0.0
        %1802 = vmatpush1.msra.mxu0 0.0
        %1803 = vmatprep.mubr.f32.mxu0 0.0
        %v1804 = vand.u32 %v1544, 4294901760
        %1805 = vmatmul.mubr.f32.gmra.mrb[0].mxu0 %v1804
        %v1806 = vpop.f32.mrb[0].mxu0
        %v1807 = vadd.f32 %v1656, %v1806
        %v1808 = vpop.f32.mrb[0].mxu0
        %1809 = vdwg.mxu0
        %1810 = vmatprep.subr.mxu0 0.0
        %v1811 = vand.u32 %v1545, 4294901760
        %v1812 = vsub.f32 %v1545, %v1811
        %1813 = vmatpush1.msra.mxu0 %v1812
        %1814 = vmatprep.subr.mxu0 0.0
        %v1815 = vand.u32 %v1546, 4294901760
        %v1816 = vsub.f32 %v1546, %v1815
        %1817 = vmatpush1.msra.mxu0 %v1816
        %1818 = vmatprep.subr.mxu0 0.0
        %v1819 = vand.u32 %v1547, 4294901760
        %v1820 = vsub.f32 %v1547, %v1819
        %1821 = vmatpush1.msra.mxu0 %v1820
        %1822 = vmatprep.subr.mxu0 0.0
        %v1823 = vand.u32 %v1548, 4294901760
        %v1824 = vsub.f32 %v1548, %v1823
        %1825 = vmatpush1.msra.mxu0 %v1824
        %1826 = vmatprep.subr.mxu0 0.0
        %v1827 = vand.u32 %v1549, 4294901760
        %v1828 = vsub.f32 %v1549, %v1827
        %1829 = vmatpush1.msra.mxu0 %v1828
        %1830 = vmatprep.subr.mxu0 0.0
        %v1831 = vand.u32 %v1550, 4294901760
        %v1832 = vsub.f32 %v1550, %v1831
        %1833 = vmatpush1.msra.mxu0 %v1832
        %1834 = vmatprep.subr.mxu0 0.0
        %v1835 = vand.u32 %v1551, 4294901760
        %v1836 = vsub.f32 %v1551, %v1835
        %1837 = vmatpush1.msra.mxu0 %v1836
        %1838 = vmatprep.subr.mxu0 0.0
        %v1839 = vand.u32 %v1552, 4294901760
        %v1840 = vsub.f32 %v1552, %v1839
        %1841 = vmatpush1.msra.mxu0 %v1840
        %1842 = vmatprep.subr.mxu0 0.0
        %v1843 = vand.u32 %v1553, 4294901760
        %v1844 = vsub.f32 %v1553, %v1843
        %1845 = vmatpush1.msra.mxu0 %v1844
        %1846 = vmatprep.subr.mxu0 0.0
        %v1847 = vand.u32 %v1554, 4294901760
        %v1848 = vsub.f32 %v1554, %v1847
        %1849 = vmatpush1.msra.mxu0 %v1848
        %1850 = vmatprep.subr.mxu0 0.0
        %v1851 = vand.u32 %v1555, 4294901760
        %v1852 = vsub.f32 %v1555, %v1851
        %1853 = vmatpush1.msra.mxu0 %v1852
        %1854 = vmatprep.subr.mxu0 0.0
        %v1855 = vand.u32 %v1556, 4294901760
        %v1856 = vsub.f32 %v1556, %v1855
        %1857 = vmatpush1.msra.mxu0 %v1856
        %1858 = vmatprep.subr.mxu0 0.0
        %v1859 = vand.u32 %v1557, 4294901760
        %v1860 = vsub.f32 %v1557, %v1859
        %1861 = vmatpush1.msra.mxu0 %v1860
        %1862 = vmatprep.subr.mxu0 0.0
        %v1863 = vand.u32 %v1558, 4294901760
        %v1864 = vsub.f32 %v1558, %v1863
        %1865 = vmatpush1.msra.mxu0 %v1864
        %1866 = vmatprep.subr.mxu0 0.0
        %v1867 = vand.u32 %v1559, 4294901760
        %v1868 = vsub.f32 %v1559, %v1867
        %1869 = vmatpush1.msra.mxu0 %v1868
        %1870 = vmatprep.subr.mxu0 0.0
        %v1871 = vand.u32 %v1560, 4294901760
        %v1872 = vsub.f32 %v1560, %v1871
        %1873 = vmatpush1.msra.mxu0 %v1872
        %1874 = vmatprep.subr.mxu0 0.0
        %1875 = vmatpush1.msra.mxu0 0.0
        %1876 = vmatprep.subr.mxu0 0.0
        %1877 = vmatpush1.msra.mxu0 0.0
        %1878 = vmatprep.subr.mxu0 0.0
        %1879 = vmatpush1.msra.mxu0 0.0
        %1880 = vmatprep.subr.mxu0 0.0
        %1881 = vmatpush1.msra.mxu0 0.0
        %1882 = vmatprep.subr.mxu0 0.0
        %1883 = vmatpush1.msra.mxu0 0.0
        %1884 = vmatprep.subr.mxu0 0.0
        %1885 = vmatpush1.msra.mxu0 0.0
        %1886 = vmatprep.subr.mxu0 0.0
        %1887 = vmatpush1.msra.mxu0 0.0
        %1888 = vmatprep.subr.mxu0 0.0
        %1889 = vmatpush1.msra.mxu0 0.0
        %1890 = vmatprep.subr.mxu0 0.0
        %1891 = vmatpush1.msra.mxu0 0.0
        %1892 = vmatprep.subr.mxu0 0.0
        %1893 = vmatpush1.msra.mxu0 0.0
        %1894 = vmatprep.subr.mxu0 0.0
        %1895 = vmatpush1.msra.mxu0 0.0
        %1896 = vmatprep.subr.mxu0 0.0
        %1897 = vmatpush1.msra.mxu0 0.0
        %1898 = vmatprep.subr.mxu0 0.0
        %1899 = vmatpush1.msra.mxu0 0.0
        %1900 = vmatprep.subr.mxu0 0.0
        %1901 = vmatpush1.msra.mxu0 0.0
        %1902 = vmatprep.subr.mxu0 0.0
        %1903 = vmatpush1.msra.mxu0 0.0
        %1904 = vmatprep.subr.mxu0 0.0
        %1905 = vmatpush1.msra.mxu0 0.0
        %1906 = vmatprep.mubr.f32.mxu0 0.0
        %v1907 = vand.u32 %v1544, 4294901760
        %v1908 = vsub.f32 %v1544, %v1907
        %1909 = vmatmul.mubr.f32.gmra.mrb[0].mxu0 %v1908
        %v1910 = vpop.f32.mrb[0].mxu0
        %v1911 = vadd.f32 %v1807, %v1910
        %v1912 = vpop.f32.mrb[0].mxu0
        %1913 = vdwg.mxu0
        %1914 = vmatprep.subr.mxu0 0.0
        %v1915 = vand.u32 %v1545, 4294901760
        %1916 = vmatpush1.msra.mxu0 %v1915
        %1917 = vmatprep.subr.mxu0 0.0
        %v1918 = vand.u32 %v1546, 4294901760
        %1919 = vmatpush1.msra.mxu0 %v1918
        %1920 = vmatprep.subr.mxu0 0.0
        %v1921 = vand.u32 %v1547, 4294901760
        %1922 = vmatpush1.msra.mxu0 %v1921
        %1923 = vmatprep.subr.mxu0 0.0
        %v1924 = vand.u32 %v1548, 4294901760
        %1925 = vmatpush1.msra.mxu0 %v1924
        %1926 = vmatprep.subr.mxu0 0.0
        %v1927 = vand.u32 %v1549, 4294901760
        %1928 = vmatpush1.msra.mxu0 %v1927
        %1929 = vmatprep.subr.mxu0 0.0
        %v1930 = vand.u32 %v1550, 4294901760
        %1931 = vmatpush1.msra.mxu0 %v1930
        %1932 = vmatprep.subr.mxu0 0.0
        %v1933 = vand.u32 %v1551, 4294901760
        %1934 = vmatpush1.msra.mxu0 %v1933
        %1935 = vmatprep.subr.mxu0 0.0
        %v1936 = vand.u32 %v1552, 4294901760
        %1937 = vmatpush1.msra.mxu0 %v1936
        %1938 = vmatprep.subr.mxu0 0.0
        %v1939 = vand.u32 %v1553, 4294901760
        %1940 = vmatpush1.msra.mxu0 %v1939
        %1941 = vmatprep.subr.mxu0 0.0
        %v1942 = vand.u32 %v1554, 4294901760
        %1943 = vmatpush1.msra.mxu0 %v1942
        %1944 = vmatprep.subr.mxu0 0.0
        %v1945 = vand.u32 %v1555, 4294901760
        %1946 = vmatpush1.msra.mxu0 %v1945
        %1947 = vmatprep.subr.mxu0 0.0
        %v1948 = vand.u32 %v1556, 4294901760
        %1949 = vmatpush1.msra.mxu0 %v1948
        %1950 = vmatprep.subr.mxu0 0.0
        %v1951 = vand.u32 %v1557, 4294901760
        %1952 = vmatpush1.msra.mxu0 %v1951
        %1953 = vmatprep.subr.mxu0 0.0
        %v1954 = vand.u32 %v1558, 4294901760
        %1955 = vmatpush1.msra.mxu0 %v1954
        %1956 = vmatprep.subr.mxu0 0.0
        %v1957 = vand.u32 %v1559, 4294901760
        %1958 = vmatpush1.msra.mxu0 %v1957
        %1959 = vmatprep.subr.mxu0 0.0
        %v1960 = vand.u32 %v1560, 4294901760
        %1961 = vmatpush1.msra.mxu0 %v1960
        %1962 = vmatprep.subr.mxu0 0.0
        %1963 = vmatpush1.msra.mxu0 0.0
        %1964 = vmatprep.subr.mxu0 0.0
        %1965 = vmatpush1.msra.mxu0 0.0
        %1966 = vmatprep.subr.mxu0 0.0
        %1967 = vmatpush1.msra.mxu0 0.0
        %1968 = vmatprep.subr.mxu0 0.0
        %1969 = vmatpush1.msra.mxu0 0.0
        %1970 = vmatprep.subr.mxu0 0.0
        %1971 = vmatpush1.msra.mxu0 0.0
        %1972 = vmatprep.subr.mxu0 0.0
        %1973 = vmatpush1.msra.mxu0 0.0
        %1974 = vmatprep.subr.mxu0 0.0
        %1975 = vmatpush1.msra.mxu0 0.0
        %1976 = vmatprep.subr.mxu0 0.0
        %1977 = vmatpush1.msra.mxu0 0.0
        %1978 = vmatprep.subr.mxu0 0.0
        %1979 = vmatpush1.msra.mxu0 0.0
        %1980 = vmatprep.subr.mxu0 0.0
        %1981 = vmatpush1.msra.mxu0 0.0
        %1982 = vmatprep.subr.mxu0 0.0
        %1983 = vmatpush1.msra.mxu0 0.0
        %1984 = vmatprep.subr.mxu0 0.0
        %1985 = vmatpush1.msra.mxu0 0.0
        %1986 = vmatprep.subr.mxu0 0.0
        %1987 = vmatpush1.msra.mxu0 0.0
        %1988 = vmatprep.subr.mxu0 0.0
        %1989 = vmatpush1.msra.mxu0 0.0
        %1990 = vmatprep.subr.mxu0 0.0
        %1991 = vmatpush1.msra.mxu0 0.0
        %1992 = vmatprep.subr.mxu0 0.0
        %1993 = vmatpush1.msra.mxu0 0.0
        %1994 = vmatprep.mubr.f32.mxu0 0.0
        %v1995 = vand.u32 %v1544, 4294901760
        %v1996 = vsub.f32 %v1544, %v1995
        %v1997 = vand.u32 %v1996, 4294901760
        %1998 = vmatmul.mubr.f32.gmra.mrb[0].mxu0 %v1997
        %v1999 = vpop.f32.mrb[0].mxu0
        %v2000 = vadd.f32 %v1911, %v1999
        %v2001 = vpop.f32.mrb[0].mxu0
        %2002 = vdwg.mxu0
        %2003 = vmatprep.subr.mxu0 0.0
        %v2004 = vand.u32 %v1545, 4294901760
        %v2005 = vsub.f32 %v1545, %v2004
        %v2006 = vand.u32 %v2005, 4294901760
        %2007 = vmatpush1.msra.mxu0 %v2006
        %2008 = vmatprep.subr.mxu0 0.0
        %v2009 = vand.u32 %v1546, 4294901760
        %v2010 = vsub.f32 %v1546, %v2009
        %v2011 = vand.u32 %v2010, 4294901760
        %2012 = vmatpush1.msra.mxu0 %v2011
        %2013 = vmatprep.subr.mxu0 0.0
        %v2014 = vand.u32 %v1547, 4294901760
        %v2015 = vsub.f32 %v1547, %v2014
        %v2016 = vand.u32 %v2015, 4294901760
        %2017 = vmatpush1.msra.mxu0 %v2016
        %2018 = vmatprep.subr.mxu0 0.0
        %v2019 = vand.u32 %v1548, 4294901760
        %v2020 = vsub.f32 %v1548, %v2019
        %v2021 = vand.u32 %v2020, 4294901760
        %2022 = vmatpush1.msra.mxu0 %v2021
        %2023 = vmatprep.subr.mxu0 0.0
        %v2024 = vand.u32 %v1549, 4294901760
        %v2025 = vsub.f32 %v1549, %v2024
        %v2026 = vand.u32 %v2025, 4294901760
        %2027 = vmatpush1.msra.mxu0 %v2026
        %2028 = vmatprep.subr.mxu0 0.0
        %v2029 = vand.u32 %v1550, 4294901760
        %v2030 = vsub.f32 %v1550, %v2029
        %v2031 = vand.u32 %v2030, 4294901760
        %2032 = vmatpush1.msra.mxu0 %v2031
        %2033 = vmatprep.subr.mxu0 0.0
        %v2034 = vand.u32 %v1551, 4294901760
        %v2035 = vsub.f32 %v1551, %v2034
        %v2036 = vand.u32 %v2035, 4294901760
        %2037 = vmatpush1.msra.mxu0 %v2036
        %2038 = vmatprep.subr.mxu0 0.0
        %v2039 = vand.u32 %v1552, 4294901760
        %v2040 = vsub.f32 %v1552, %v2039
        %v2041 = vand.u32 %v2040, 4294901760
        %2042 = vmatpush1.msra.mxu0 %v2041
        %2043 = vmatprep.subr.mxu0 0.0
        %v2044 = vand.u32 %v1553, 4294901760
        %v2045 = vsub.f32 %v1553, %v2044
        %v2046 = vand.u32 %v2045, 4294901760
        %2047 = vmatpush1.msra.mxu0 %v2046
        %2048 = vmatprep.subr.mxu0 0.0
        %v2049 = vand.u32 %v1554, 4294901760
        %v2050 = vsub.f32 %v1554, %v2049
        %v2051 = vand.u32 %v2050, 4294901760
        %2052 = vmatpush1.msra.mxu0 %v2051
        %2053 = vmatprep.subr.mxu0 0.0
        %v2054 = vand.u32 %v1555, 4294901760
        %v2055 = vsub.f32 %v1555, %v2054
        %v2056 = vand.u32 %v2055, 4294901760
        %2057 = vmatpush1.msra.mxu0 %v2056
        %2058 = vmatprep.subr.mxu0 0.0
        %v2059 = vand.u32 %v1556, 4294901760
        %v2060 = vsub.f32 %v1556, %v2059
        %v2061 = vand.u32 %v2060, 4294901760
        %2062 = vmatpush1.msra.mxu0 %v2061
        %2063 = vmatprep.subr.mxu0 0.0
        %v2064 = vand.u32 %v1557, 4294901760
        %v2065 = vsub.f32 %v1557, %v2064
        %v2066 = vand.u32 %v2065, 4294901760
        %2067 = vmatpush1.msra.mxu0 %v2066
        %2068 = vmatprep.subr.mxu0 0.0
        %v2069 = vand.u32 %v1558, 4294901760
        %v2070 = vsub.f32 %v1558, %v2069
        %v2071 = vand.u32 %v2070, 4294901760
        %2072 = vmatpush1.msra.mxu0 %v2071
        %2073 = vmatprep.subr.mxu0 0.0
        %v2074 = vand.u32 %v1559, 4294901760
        %v2075 = vsub.f32 %v1559, %v2074
        %v2076 = vand.u32 %v2075, 4294901760
        %2077 = vmatpush1.msra.mxu0 %v2076
        %2078 = vmatprep.subr.mxu0 0.0
        %v2079 = vand.u32 %v1560, 4294901760
        %v2080 = vsub.f32 %v1560, %v2079
        %v2081 = vand.u32 %v2080, 4294901760
        %2082 = vmatpush1.msra.mxu0 %v2081
        %2083 = vmatprep.subr.mxu0 0.0
        %2084 = vmatpush1.msra.mxu0 0.0
        %2085 = vmatprep.subr.mxu0 0.0
        %2086 = vmatpush1.msra.mxu0 0.0
        %2087 = vmatprep.subr.mxu0 0.0
        %2088 = vmatpush1.msra.mxu0 0.0
        %2089 = vmatprep.subr.mxu0 0.0
        %2090 = vmatpush1.msra.mxu0 0.0
        %2091 = vmatprep.subr.mxu0 0.0
        %2092 = vmatpush1.msra.mxu0 0.0
        %2093 = vmatprep.subr.mxu0 0.0
        %2094 = vmatpush1.msra.mxu0 0.0
        %2095 = vmatprep.subr.mxu0 0.0
        %2096 = vmatpush1.msra.mxu0 0.0
        %2097 = vmatprep.subr.mxu0 0.0
        %2098 = vmatpush1.msra.mxu0 0.0
        %2099 = vmatprep.subr.mxu0 0.0
        %2100 = vmatpush1.msra.mxu0 0.0
        %2101 = vmatprep.subr.mxu0 0.0
        %2102 = vmatpush1.msra.mxu0 0.0
        %2103 = vmatprep.subr.mxu0 0.0
        %2104 = vmatpush1.msra.mxu0 0.0
        %2105 = vmatprep.subr.mxu0 0.0
        %2106 = vmatpush1.msra.mxu0 0.0
        %2107 = vmatprep.subr.mxu0 0.0
        %2108 = vmatpush1.msra.mxu0 0.0
        %2109 = vmatprep.subr.mxu0 0.0
        %2110 = vmatpush1.msra.mxu0 0.0
        %2111 = vmatprep.subr.mxu0 0.0
        %2112 = vmatpush1.msra.mxu0 0.0
        %2113 = vmatprep.subr.mxu0 0.0
        %2114 = vmatpush1.msra.mxu0 0.0
        %2115 = vmatprep.mubr.f32.mxu0 0.0
        %v2116 = vand.u32 %v1544, 4294901760
        %2117 = vmatmul.mubr.f32.gmra.mrb[0].mxu0 %v2116
        %v2118 = vpop.f32.mrb[0].mxu0
        %v2119 = vadd.f32 %v2000, %v2118
        %v2120 = vpop.f32.mrb[0].mxu0
        %2121 = vdwg.mxu0
        %2122 = vmatprep.subr.mxu0 0.0
        %v2123 = vand.u32 %v1545, 4294901760
        %2124 = vmatpush1.msra.mxu0 %v2123
        %2125 = vmatprep.subr.mxu0 0.0
        %v2126 = vand.u32 %v1546, 4294901760
        %2127 = vmatpush1.msra.mxu0 %v2126
        %2128 = vmatprep.subr.mxu0 0.0
        %v2129 = vand.u32 %v1547, 4294901760
        %2130 = vmatpush1.msra.mxu0 %v2129
        %2131 = vmatprep.subr.mxu0 0.0
        %v2132 = vand.u32 %v1548, 4294901760
        %2133 = vmatpush1.msra.mxu0 %v2132
        %2134 = vmatprep.subr.mxu0 0.0
        %v2135 = vand.u32 %v1549, 4294901760
        %2136 = vmatpush1.msra.mxu0 %v2135
        %2137 = vmatprep.subr.mxu0 0.0
        %v2138 = vand.u32 %v1550, 4294901760
        %2139 = vmatpush1.msra.mxu0 %v2138
        %2140 = vmatprep.subr.mxu0 0.0
        %v2141 = vand.u32 %v1551, 4294901760
        %2142 = vmatpush1.msra.mxu0 %v2141
        %2143 = vmatprep.subr.mxu0 0.0
        %v2144 = vand.u32 %v1552, 4294901760
        %2145 = vmatpush1.msra.mxu0 %v2144
        %2146 = vmatprep.subr.mxu0 0.0
        %v2147 = vand.u32 %v1553, 4294901760
        %2148 = vmatpush1.msra.mxu0 %v2147
        %2149 = vmatprep.subr.mxu0 0.0
        %v2150 = vand.u32 %v1554, 4294901760
        %2151 = vmatpush1.msra.mxu0 %v2150
        %2152 = vmatprep.subr.mxu0 0.0
        %v2153 = vand.u32 %v1555, 4294901760
        %2154 = vmatpush1.msra.mxu0 %v2153
        %2155 = vmatprep.subr.mxu0 0.0
        %v2156 = vand.u32 %v1556, 4294901760
        %2157 = vmatpush1.msra.mxu0 %v2156
        %2158 = vmatprep.subr.mxu0 0.0
        %v2159 = vand.u32 %v1557, 4294901760
        %2160 = vmatpush1.msra.mxu0 %v2159
        %2161 = vmatprep.subr.mxu0 0.0
        %v2162 = vand.u32 %v1558, 4294901760
        %2163 = vmatpush1.msra.mxu0 %v2162
        %2164 = vmatprep.subr.mxu0 0.0
        %v2165 = vand.u32 %v1559, 4294901760
        %2166 = vmatpush1.msra.mxu0 %v2165
        %2167 = vmatprep.subr.mxu0 0.0
        %v2168 = vand.u32 %v1560, 4294901760
        %2169 = vmatpush1.msra.mxu0 %v2168
        %2170 = vmatprep.subr.mxu0 0.0
        %2171 = vmatpush1.msra.mxu0 0.0
        %2172 = vmatprep.subr.mxu0 0.0
        %2173 = vmatpush1.msra.mxu0 0.0
        %2174 = vmatprep.subr.mxu0 0.0
        %2175 = vmatpush1.msra.mxu0 0.0
        %2176 = vmatprep.subr.mxu0 0.0
        %2177 = vmatpush1.msra.mxu0 0.0
        %2178 = vmatprep.subr.mxu0 0.0
        %2179 = vmatpush1.msra.mxu0 0.0
        %2180 = vmatprep.subr.mxu0 0.0
        %2181 = vmatpush1.msra.mxu0 0.0
        %2182 = vmatprep.subr.mxu0 0.0
        %2183 = vmatpush1.msra.mxu0 0.0
        %2184 = vmatprep.subr.mxu0 0.0
        %2185 = vmatpush1.msra.mxu0 0.0
        %2186 = vmatprep.subr.mxu0 0.0
        %2187 = vmatpush1.msra.mxu0 0.0
        %2188 = vmatprep.subr.mxu0 0.0
        %2189 = vmatpush1.msra.mxu0 0.0
        %2190 = vmatprep.subr.mxu0 0.0
        %2191 = vmatpush1.msra.mxu0 0.0
        %2192 = vmatprep.subr.mxu0 0.0
        %2193 = vmatpush1.msra.mxu0 0.0
        %2194 = vmatprep.subr.mxu0 0.0
        %2195 = vmatpush1.msra.mxu0 0.0
        %2196 = vmatprep.subr.mxu0 0.0
        %2197 = vmatpush1.msra.mxu0 0.0
        %2198 = vmatprep.subr.mxu0 0.0
        %2199 = vmatpush1.msra.mxu0 0.0
        %2200 = vmatprep.subr.mxu0 0.0
        %2201 = vmatpush1.msra.mxu0 0.0
        %2202 = vmatprep.mubr.f32.mxu0 0.0
        %v2203 = vand.u32 %v1544, 4294901760
        %2204 = vmatmul.mubr.f32.gmra.mrb[0].mxu0 %v2203
        %v2205 = vpop.f32.mrb[0].mxu0
        %v2206 = vadd.f32 %v2119, %v2205
        %v2207 = vpop.f32.mrb[0].mxu0
        %2208 = vdwg.mxu0
        %v2209 = vmax.f32 %v2206, 0.0
        %v2210 = vmul.f32 %v2209, %v2209
        %v2211 = vmul.f32 %v2210, %v2209
        %v2212 = vld [vmem:[#allocation5] sm:$0xff]
        %v2213 = vld [vmem:[#allocation5 + $0x8] sm:$0xff]
        %v2214 = vld [vmem:[#allocation5 + $0x10] sm:$0xff]
        %v2215 = vld [vmem:[#allocation5 + $0x18] sm:$0xff]
        %v2216 = vld [vmem:[#allocation5 + $0x20] sm:$0xff]
        %v2217 = vld [vmem:[#allocation5 + $0x28] sm:$0xff]
        %v2218 = vld [vmem:[#allocation5 + $0x30] sm:$0xff]
        %v2219 = vld [vmem:[#allocation5 + $0x38] sm:$0xff]
        %v2220 = vld [vmem:[#allocation5 + $0x40] sm:$0xff]
        %v2221 = vld [vmem:[#allocation5 + $0x48] sm:$0xff]
        %v2222 = vld [vmem:[#allocation5 + $0x50] sm:$0xff]
        %v2223 = vld [vmem:[#allocation5 + $0x58] sm:$0xff]
        %v2224 = vld [vmem:[#allocation5 + $0x60] sm:$0xff]
        %v2225 = vld [vmem:[#allocation5 + $0x68] sm:$0xff]
        %v2226 = vld [vmem:[#allocation5 + $0x70] sm:$0xff]
        %v2227 = vld [vmem:[#allocation5 + $0x78] sm:$0xff]
        %v2228 = vld [vmem:[%s8] sm:$0x1]
        %v2230 = vlaneseq
        %v2231 = vshrl.u32 %v2230, 7
        %v2232 = vsub.s32 0, %v2231
        %v2233 = vrot.slane %v2228, %v2232
        %2235 = vmatprep.subr.mxu0 0.0
        %v2236 = vand.u32 %v2212, 4294901760
        %2237 = vmatpush1.msra.mxu0 %v2236
        %2238 = vmatprep.subr.mxu0 0.0
        %v2239 = vand.u32 %v2213, 4294901760
        %2240 = vmatpush1.msra.mxu0 %v2239
        %2241 = vmatprep.subr.mxu0 0.0
        %v2242 = vand.u32 %v2214, 4294901760
        %2243 = vmatpush1.msra.mxu0 %v2242
        %2244 = vmatprep.subr.mxu0 0.0
        %v2245 = vand.u32 %v2215, 4294901760
        %2246 = vmatpush1.msra.mxu0 %v2245
        %2247 = vmatprep.subr.mxu0 0.0
        %v2248 = vand.u32 %v2216, 4294901760
        %2249 = vmatpush1.msra.mxu0 %v2248
        %2250 = vmatprep.subr.mxu0 0.0
        %v2251 = vand.u32 %v2217, 4294901760
        %2252 = vmatpush1.msra.mxu0 %v2251
        %2253 = vmatprep.subr.mxu0 0.0
        %v2254 = vand.u32 %v2218, 4294901760
        %2255 = vmatpush1.msra.mxu0 %v2254
        %2256 = vmatprep.subr.mxu0 0.0
        %v2257 = vand.u32 %v2219, 4294901760
        %2258 = vmatpush1.msra.mxu0 %v2257
        %2259 = vmatprep.subr.mxu0 0.0
        %v2260 = vand.u32 %v2220, 4294901760
        %2261 = vmatpush1.msra.mxu0 %v2260
        %2262 = vmatprep.subr.mxu0 0.0
        %v2263 = vand.u32 %v2221, 4294901760
        %2264 = vmatpush1.msra.mxu0 %v2263
        %2265 = vmatprep.subr.mxu0 0.0
        %v2266 = vand.u32 %v2222, 4294901760
        %2267 = vmatpush1.msra.mxu0 %v2266
        %2268 = vmatprep.subr.mxu0 0.0
        %v2269 = vand.u32 %v2223, 4294901760
        %2270 = vmatpush1.msra.mxu0 %v2269
        %2271 = vmatprep.subr.mxu0 0.0
        %v2272 = vand.u32 %v2224, 4294901760
        %2273 = vmatpush1.msra.mxu0 %v2272
        %2274 = vmatprep.subr.mxu0 0.0
        %v2275 = vand.u32 %v2225, 4294901760
        %2276 = vmatpush1.msra.mxu0 %v2275
        %2277 = vmatprep.subr.mxu0 0.0
        %v2278 = vand.u32 %v2226, 4294901760
        %2279 = vmatpush1.msra.mxu0 %v2278
        %2280 = vmatprep.subr.mxu0 0.0
        %v2281 = vand.u32 %v2227, 4294901760
        %2282 = vmatpush1.msra.mxu0 %v2281
        %2283 = vmatprep.subr.mxu0 0.0
        %2284 = vmatpush1.msra.mxu0 0.0
        %2285 = vmatprep.subr.mxu0 0.0
        %2286 = vmatpush1.msra.mxu0 0.0
        %2287 = vmatprep.subr.mxu0 0.0
        %2288 = vmatpush1.msra.mxu0 0.0
        %2289 = vmatprep.subr.mxu0 0.0
        %2290 = vmatpush1.msra.mxu0 0.0
        %2291 = vmatprep.subr.mxu0 0.0
        %2292 = vmatpush1.msra.mxu0 0.0
        %2293 = vmatprep.subr.mxu0 0.0
        %2294 = vmatpush1.msra.mxu0 0.0
        %2295 = vmatprep.subr.mxu0 0.0
        %2296 = vmatpush1.msra.mxu0 0.0
        %2297 = vmatprep.subr.mxu0 0.0
        %2298 = vmatpush1.msra.mxu0 0.0
        %2299 = vmatprep.subr.mxu0 0.0
        %2300 = vmatpush1.msra.mxu0 0.0
        %2301 = vmatprep.subr.mxu0 0.0
        %2302 = vmatpush1.msra.mxu0 0.0
        %2303 = vmatprep.subr.mxu0 0.0
        %2304 = vmatpush1.msra.mxu0 0.0
        %2305 = vmatprep.subr.mxu0 0.0
        %2306 = vmatpush1.msra.mxu0 0.0
        %2307 = vmatprep.subr.mxu0 0.0
        %2308 = vmatpush1.msra.mxu0 0.0
        %2309 = vmatprep.subr.mxu0 0.0
        %2310 = vmatpush1.msra.mxu0 0.0
        %2311 = vmatprep.subr.mxu0 0.0
        %2312 = vmatpush1.msra.mxu0 0.0
        %2313 = vmatprep.subr.mxu0 0.0
        %2314 = vmatpush1.msra.mxu0 0.0
        %2315 = vmatprep.mubr.f32.mxu0 0.0
        %v2316 = vand.u32 %v2211, 4294901760
        %v2317 = vsub.f32 %v2211, %v2316
        %v2318 = vand.u32 %v2317, 4294901760
        %v2319 = vsub.f32 %v2317, %v2318
        %v2320 = vand.u32 %v2319, 4294901760
        %2321 = vmatmul.mubr.f32.gmra.mrb[0].mxu0 %v2320
        %v2322 = vpop.f32.mrb[0].mxu0
        %v2323 = vadd.f32 %v2233, %v2322
        %v2324 = vpop.f32.mrb[0].mxu0
        %2325 = vdwg.mxu0
        %2326 = vmatprep.subr.mxu0 0.0
        %v2327 = vand.u32 %v2212, 4294901760
        %v2328 = vsub.f32 %v2212, %v2327
        %v2329 = vand.u32 %v2328, 4294901760
        %v2330 = vsub.f32 %v2328, %v2329
        %v2331 = vand.u32 %v2330, 4294901760
        %2332 = vmatpush1.msra.mxu0 %v2331
        %2333 = vmatprep.subr.mxu0 0.0
        %v2334 = vand.u32 %v2213, 4294901760
        %v2335 = vsub.f32 %v2213, %v2334
        %v2336 = vand.u32 %v2335, 4294901760
        %v2337 = vsub.f32 %v2335, %v2336
        %v2338 = vand.u32 %v2337, 4294901760
        %2339 = vmatpush1.msra.mxu0 %v2338
        %2340 = vmatprep.subr.mxu0 0.0
        %v2341 = vand.u32 %v2214, 4294901760
        %v2342 = vsub.f32 %v2214, %v2341
        %v2343 = vand.u32 %v2342, 4294901760
        %v2344 = vsub.f32 %v2342, %v2343
        %v2345 = vand.u32 %v2344, 4294901760
        %2346 = vmatpush1.msra.mxu0 %v2345
        %2347 = vmatprep.subr.mxu0 0.0
        %v2348 = vand.u32 %v2215, 4294901760
        %v2349 = vsub.f32 %v2215, %v2348
        %v2350 = vand.u32 %v2349, 4294901760
        %v2351 = vsub.f32 %v2349, %v2350
        %v2352 = vand.u32 %v2351, 4294901760
        %2353 = vmatpush1.msra.mxu0 %v2352
        %2354 = vmatprep.subr.mxu0 0.0
        %v2355 = vand.u32 %v2216, 4294901760
        %v2356 = vsub.f32 %v2216, %v2355
        %v2357 = vand.u32 %v2356, 4294901760
        %v2358 = vsub.f32 %v2356, %v2357
        %v2359 = vand.u32 %v2358, 4294901760
        %2360 = vmatpush1.msra.mxu0 %v2359
        %2361 = vmatprep.subr.mxu0 0.0
        %v2362 = vand.u32 %v2217, 4294901760
        %v2363 = vsub.f32 %v2217, %v2362
        %v2364 = vand.u32 %v2363, 4294901760
        %v2365 = vsub.f32 %v2363, %v2364
        %v2366 = vand.u32 %v2365, 4294901760
        %2367 = vmatpush1.msra.mxu0 %v2366
        %2368 = vmatprep.subr.mxu0 0.0
        %v2369 = vand.u32 %v2218, 4294901760
        %v2370 = vsub.f32 %v2218, %v2369
        %v2371 = vand.u32 %v2370, 4294901760
        %v2372 = vsub.f32 %v2370, %v2371
        %v2373 = vand.u32 %v2372, 4294901760
        %2374 = vmatpush1.msra.mxu0 %v2373
        %2375 = vmatprep.subr.mxu0 0.0
        %v2376 = vand.u32 %v2219, 4294901760
        %v2377 = vsub.f32 %v2219, %v2376
        %v2378 = vand.u32 %v2377, 4294901760
        %v2379 = vsub.f32 %v2377, %v2378
        %v2380 = vand.u32 %v2379, 4294901760
        %2381 = vmatpush1.msra.mxu0 %v2380
        %2382 = vmatprep.subr.mxu0 0.0
        %v2383 = vand.u32 %v2220, 4294901760
        %v2384 = vsub.f32 %v2220, %v2383
        %v2385 = vand.u32 %v2384, 4294901760
        %v2386 = vsub.f32 %v2384, %v2385
        %v2387 = vand.u32 %v2386, 4294901760
        %2388 = vmatpush1.msra.mxu0 %v2387
        %2389 = vmatprep.subr.mxu0 0.0
        %v2390 = vand.u32 %v2221, 4294901760
        %v2391 = vsub.f32 %v2221, %v2390
        %v2392 = vand.u32 %v2391, 4294901760
        %v2393 = vsub.f32 %v2391, %v2392
        %v2394 = vand.u32 %v2393, 4294901760
        %2395 = vmatpush1.msra.mxu0 %v2394
        %2396 = vmatprep.subr.mxu0 0.0
        %v2397 = vand.u32 %v2222, 4294901760
        %v2398 = vsub.f32 %v2222, %v2397
        %v2399 = vand.u32 %v2398, 4294901760
        %v2400 = vsub.f32 %v2398, %v2399
        %v2401 = vand.u32 %v2400, 4294901760
        %2402 = vmatpush1.msra.mxu0 %v2401
        %2403 = vmatprep.subr.mxu0 0.0
        %v2404 = vand.u32 %v2223, 4294901760
        %v2405 = vsub.f32 %v2223, %v2404
        %v2406 = vand.u32 %v2405, 4294901760
        %v2407 = vsub.f32 %v2405, %v2406
        %v2408 = vand.u32 %v2407, 4294901760
        %2409 = vmatpush1.msra.mxu0 %v2408
        %2410 = vmatprep.subr.mxu0 0.0
        %v2411 = vand.u32 %v2224, 4294901760
        %v2412 = vsub.f32 %v2224, %v2411
        %v2413 = vand.u32 %v2412, 4294901760
        %v2414 = vsub.f32 %v2412, %v2413
        %v2415 = vand.u32 %v2414, 4294901760
        %2416 = vmatpush1.msra.mxu0 %v2415
        %2417 = vmatprep.subr.mxu0 0.0
        %v2418 = vand.u32 %v2225, 4294901760
        %v2419 = vsub.f32 %v2225, %v2418
        %v2420 = vand.u32 %v2419, 4294901760
        %v2421 = vsub.f32 %v2419, %v2420
        %v2422 = vand.u32 %v2421, 4294901760
        %2423 = vmatpush1.msra.mxu0 %v2422
        %2424 = vmatprep.subr.mxu0 0.0
        %v2425 = vand.u32 %v2226, 4294901760
        %v2426 = vsub.f32 %v2226, %v2425
        %v2427 = vand.u32 %v2426, 4294901760
        %v2428 = vsub.f32 %v2426, %v2427
        %v2429 = vand.u32 %v2428, 4294901760
        %2430 = vmatpush1.msra.mxu0 %v2429
        %2431 = vmatprep.subr.mxu0 0.0
        %v2432 = vand.u32 %v2227, 4294901760
        %v2433 = vsub.f32 %v2227, %v2432
        %v2434 = vand.u32 %v2433, 4294901760
        %v2435 = vsub.f32 %v2433, %v2434
        %v2436 = vand.u32 %v2435, 4294901760
        %2437 = vmatpush1.msra.mxu0 %v2436
        %2438 = vmatprep.subr.mxu0 0.0
        %2439 = vmatpush1.msra.mxu0 0.0
        %2440 = vmatprep.subr.mxu0 0.0
        %2441 = vmatpush1.msra.mxu0 0.0
        %2442 = vmatprep.subr.mxu0 0.0
        %2443 = vmatpush1.msra.mxu0 0.0
        %2444 = vmatprep.subr.mxu0 0.0
        %2445 = vmatpush1.msra.mxu0 0.0
        %2446 = vmatprep.subr.mxu0 0.0
        %2447 = vmatpush1.msra.mxu0 0.0
        %2448 = vmatprep.subr.mxu0 0.0
        %2449 = vmatpush1.msra.mxu0 0.0
        %2450 = vmatprep.subr.mxu0 0.0
        %2451 = vmatpush1.msra.mxu0 0.0
        %2452 = vmatprep.subr.mxu0 0.0
        %2453 = vmatpush1.msra.mxu0 0.0
        %2454 = vmatprep.subr.mxu0 0.0
        %2455 = vmatpush1.msra.mxu0 0.0
        %2456 = vmatprep.subr.mxu0 0.0
        %2457 = vmatpush1.msra.mxu0 0.0
        %2458 = vmatprep.subr.mxu0 0.0
        %2459 = vmatpush1.msra.mxu0 0.0
        %2460 = vmatprep.subr.mxu0 0.0
        %2461 = vmatpush1.msra.mxu0 0.0
        %2462 = vmatprep.subr.mxu0 0.0
        %2463 = vmatpush1.msra.mxu0 0.0
        %2464 = vmatprep.subr.mxu0 0.0
        %2465 = vmatpush1.msra.mxu0 0.0
        %2466 = vmatprep.subr.mxu0 0.0
        %2467 = vmatpush1.msra.mxu0 0.0
        %2468 = vmatprep.subr.mxu0 0.0
        %2469 = vmatpush1.msra.mxu0 0.0
        %2470 = vmatprep.mubr.f32.mxu0 0.0
        %v2471 = vand.u32 %v2211, 4294901760
        %2472 = vmatmul.mubr.f32.gmra.mrb[0].mxu0 %v2471
        %v2473 = vpop.f32.mrb[0].mxu0
        %v2474 = vadd.f32 %v2323, %v2473
        %v2475 = vpop.f32.mrb[0].mxu0
        %2476 = vdwg.mxu0
        %2477 = vmatprep.subr.mxu0 0.0
        %v2478 = vand.u32 %v2212, 4294901760
        %v2479 = vsub.f32 %v2212, %v2478
        %2480 = vmatpush1.msra.mxu0 %v2479
        %2481 = vmatprep.subr.mxu0 0.0
        %v2482 = vand.u32 %v2213, 4294901760
        %v2483 = vsub.f32 %v2213, %v2482
        %2484 = vmatpush1.msra.mxu0 %v2483
        %2485 = vmatprep.subr.mxu0 0.0
        %v2486 = vand.u32 %v2214, 4294901760
        %v2487 = vsub.f32 %v2214, %v2486
        %2488 = vmatpush1.msra.mxu0 %v2487
        %2489 = vmatprep.subr.mxu0 0.0
        %v2490 = vand.u32 %v2215, 4294901760
        %v2491 = vsub.f32 %v2215, %v2490
        %2492 = vmatpush1.msra.mxu0 %v2491
        %2493 = vmatprep.subr.mxu0 0.0
        %v2494 = vand.u32 %v2216, 4294901760
        %v2495 = vsub.f32 %v2216, %v2494
        %2496 = vmatpush1.msra.mxu0 %v2495
        %2497 = vmatprep.subr.mxu0 0.0
        %v2498 = vand.u32 %v2217, 4294901760
        %v2499 = vsub.f32 %v2217, %v2498
        %2500 = vmatpush1.msra.mxu0 %v2499
        %2501 = vmatprep.subr.mxu0 0.0
        %v2502 = vand.u32 %v2218, 4294901760
        %v2503 = vsub.f32 %v2218, %v2502
        %2504 = vmatpush1.msra.mxu0 %v2503
        %2505 = vmatprep.subr.mxu0 0.0
        %v2506 = vand.u32 %v2219, 4294901760
        %v2507 = vsub.f32 %v2219, %v2506
        %2508 = vmatpush1.msra.mxu0 %v2507
        %2509 = vmatprep.subr.mxu0 0.0
        %v2510 = vand.u32 %v2220, 4294901760
        %v2511 = vsub.f32 %v2220, %v2510
        %2512 = vmatpush1.msra.mxu0 %v2511
        %2513 = vmatprep.subr.mxu0 0.0
        %v2514 = vand.u32 %v2221, 4294901760
        %v2515 = vsub.f32 %v2221, %v2514
        %2516 = vmatpush1.msra.mxu0 %v2515
        %2517 = vmatprep.subr.mxu0 0.0
        %v2518 = vand.u32 %v2222, 4294901760
        %v2519 = vsub.f32 %v2222, %v2518
        %2520 = vmatpush1.msra.mxu0 %v2519
        %2521 = vmatprep.subr.mxu0 0.0
        %v2522 = vand.u32 %v2223, 4294901760
        %v2523 = vsub.f32 %v2223, %v2522
        %2524 = vmatpush1.msra.mxu0 %v2523
        %2525 = vmatprep.subr.mxu0 0.0
        %v2526 = vand.u32 %v2224, 4294901760
        %v2527 = vsub.f32 %v2224, %v2526
        %2528 = vmatpush1.msra.mxu0 %v2527
        %2529 = vmatprep.subr.mxu0 0.0
        %v2530 = vand.u32 %v2225, 4294901760
        %v2531 = vsub.f32 %v2225, %v2530
        %2532 = vmatpush1.msra.mxu0 %v2531
        %2533 = vmatprep.subr.mxu0 0.0
        %v2534 = vand.u32 %v2226, 4294901760
        %v2535 = vsub.f32 %v2226, %v2534
        %2536 = vmatpush1.msra.mxu0 %v2535
        %2537 = vmatprep.subr.mxu0 0.0
        %v2538 = vand.u32 %v2227, 4294901760
        %v2539 = vsub.f32 %v2227, %v2538
        %2540 = vmatpush1.msra.mxu0 %v2539
        %2541 = vmatprep.subr.mxu0 0.0
        %2542 = vmatpush1.msra.mxu0 0.0
        %2543 = vmatprep.subr.mxu0 0.0
        %2544 = vmatpush1.msra.mxu0 0.0
        %2545 = vmatprep.subr.mxu0 0.0
        %2546 = vmatpush1.msra.mxu0 0.0
        %2547 = vmatprep.subr.mxu0 0.0
        %2548 = vmatpush1.msra.mxu0 0.0
        %2549 = vmatprep.subr.mxu0 0.0
        %2550 = vmatpush1.msra.mxu0 0.0
        %2551 = vmatprep.subr.mxu0 0.0
        %2552 = vmatpush1.msra.mxu0 0.0
        %2553 = vmatprep.subr.mxu0 0.0
        %2554 = vmatpush1.msra.mxu0 0.0
        %2555 = vmatprep.subr.mxu0 0.0
        %2556 = vmatpush1.msra.mxu0 0.0
        %2557 = vmatprep.subr.mxu0 0.0
        %2558 = vmatpush1.msra.mxu0 0.0
        %2559 = vmatprep.subr.mxu0 0.0
        %2560 = vmatpush1.msra.mxu0 0.0
        %2561 = vmatprep.subr.mxu0 0.0
        %2562 = vmatpush1.msra.mxu0 0.0
        %2563 = vmatprep.subr.mxu0 0.0
        %2564 = vmatpush1.msra.mxu0 0.0
        %2565 = vmatprep.subr.mxu0 0.0
        %2566 = vmatpush1.msra.mxu0 0.0
        %2567 = vmatprep.subr.mxu0 0.0
        %2568 = vmatpush1.msra.mxu0 0.0
        %2569 = vmatprep.subr.mxu0 0.0
        %2570 = vmatpush1.msra.mxu0 0.0
        %2571 = vmatprep.subr.mxu0 0.0
        %2572 = vmatpush1.msra.mxu0 0.0
        %2573 = vmatprep.mubr.f32.mxu0 0.0
        %v2574 = vand.u32 %v2211, 4294901760
        %v2575 = vsub.f32 %v2211, %v2574
        %2576 = vmatmul.mubr.f32.gmra.mrb[0].mxu0 %v2575
        %v2577 = vpop.f32.mrb[0].mxu0
        %v2578 = vadd.f32 %v2474, %v2577
        %v2579 = vpop.f32.mrb[0].mxu0
        %2580 = vdwg.mxu0
        %2581 = vmatprep.subr.mxu0 0.0
        %v2582 = vand.u32 %v2212, 4294901760
        %2583 = vmatpush1.msra.mxu0 %v2582
        %2584 = vmatprep.subr.mxu0 0.0
        %v2585 = vand.u32 %v2213, 4294901760
        %2586 = vmatpush1.msra.mxu0 %v2585
        %2587 = vmatprep.subr.mxu0 0.0
        %v2588 = vand.u32 %v2214, 4294901760
        %2589 = vmatpush1.msra.mxu0 %v2588
        %2590 = vmatprep.subr.mxu0 0.0
        %v2591 = vand.u32 %v2215, 4294901760
        %2592 = vmatpush1.msra.mxu0 %v2591
        %2593 = vmatprep.subr.mxu0 0.0
        %v2594 = vand.u32 %v2216, 4294901760
        %2595 = vmatpush1.msra.mxu0 %v2594
        %2596 = vmatprep.subr.mxu0 0.0
        %v2597 = vand.u32 %v2217, 4294901760
        %2598 = vmatpush1.msra.mxu0 %v2597
        %2599 = vmatprep.subr.mxu0 0.0
        %v2600 = vand.u32 %v2218, 4294901760
        %2601 = vmatpush1.msra.mxu0 %v2600
        %2602 = vmatprep.subr.mxu0 0.0
        %v2603 = vand.u32 %v2219, 4294901760
        %2604 = vmatpush1.msra.mxu0 %v2603
        %2605 = vmatprep.subr.mxu0 0.0
        %v2606 = vand.u32 %v2220, 4294901760
        %2607 = vmatpush1.msra.mxu0 %v2606
        %2608 = vmatprep.subr.mxu0 0.0
        %v2609 = vand.u32 %v2221, 4294901760
        %2610 = vmatpush1.msra.mxu0 %v2609
        %2611 = vmatprep.subr.mxu0 0.0
        %v2612 = vand.u32 %v2222, 4294901760
        %2613 = vmatpush1.msra.mxu0 %v2612
        %2614 = vmatprep.subr.mxu0 0.0
        %v2615 = vand.u32 %v2223, 4294901760
        %2616 = vmatpush1.msra.mxu0 %v2615
        %2617 = vmatprep.subr.mxu0 0.0
        %v2618 = vand.u32 %v2224, 4294901760
        %2619 = vmatpush1.msra.mxu0 %v2618
        %2620 = vmatprep.subr.mxu0 0.0
        %v2621 = vand.u32 %v2225, 4294901760
        %2622 = vmatpush1.msra.mxu0 %v2621
        %2623 = vmatprep.subr.mxu0 0.0
        %v2624 = vand.u32 %v2226, 4294901760
        %2625 = vmatpush1.msra.mxu0 %v2624
        %2626 = vmatprep.subr.mxu0 0.0
        %v2627 = vand.u32 %v2227, 4294901760
        %2628 = vmatpush1.msra.mxu0 %v2627
        %2629 = vmatprep.subr.mxu0 0.0
        %2630 = vmatpush1.msra.mxu0 0.0
        %2631 = vmatprep.subr.mxu0 0.0
        %2632 = vmatpush1.msra.mxu0 0.0
        %2633 = vmatprep.subr.mxu0 0.0
        %2634 = vmatpush1.msra.mxu0 0.0
        %2635 = vmatprep.subr.mxu0 0.0
        %2636 = vmatpush1.msra.mxu0 0.0
        %2637 = vmatprep.subr.mxu0 0.0
        %2638 = vmatpush1.msra.mxu0 0.0
        %2639 = vmatprep.subr.mxu0 0.0
        %2640 = vmatpush1.msra.mxu0 0.0
        %2641 = vmatprep.subr.mxu0 0.0
        %2642 = vmatpush1.msra.mxu0 0.0
        %2643 = vmatprep.subr.mxu0 0.0
        %2644 = vmatpush1.msra.mxu0 0.0
        %2645 = vmatprep.subr.mxu0 0.0
        %2646 = vmatpush1.msra.mxu0 0.0
        %2647 = vmatprep.subr.mxu0 0.0
        %2648 = vmatpush1.msra.mxu0 0.0
        %2649 = vmatprep.subr.mxu0 0.0
        %2650 = vmatpush1.msra.mxu0 0.0
        %2651 = vmatprep.subr.mxu0 0.0
        %2652 = vmatpush1.msra.mxu0 0.0
        %2653 = vmatprep.subr.mxu0 0.0
        %2654 = vmatpush1.msra.mxu0 0.0
        %2655 = vmatprep.subr.mxu0 0.0
        %2656 = vmatpush1.msra.mxu0 0.0
        %2657 = vmatprep.subr.mxu0 0.0
        %2658 = vmatpush1.msra.mxu0 0.0
        %2659 = vmatprep.subr.mxu0 0.0
        %2660 = vmatpush1.msra.mxu0 0.0
        %2661 = vmatprep.mubr.f32.mxu0 0.0
        %v2662 = vand.u32 %v2211, 4294901760
        %v2663 = vsub.f32 %v2211, %v2662
        %v2664 = vand.u32 %v2663, 4294901760
        %2665 = vmatmul.mubr.f32.gmra.mrb[0].mxu0 %v2664
        %v2666 = vpop.f32.mrb[0].mxu0
        %v2667 = vadd.f32 %v2578, %v2666
        %v2668 = vpop.f32.mrb[0].mxu0
        %2669 = vdwg.mxu0
        %2670 = vmatprep.subr.mxu0 0.0
        %v2671 = vand.u32 %v2212, 4294901760
        %v2672 = vsub.f32 %v2212, %v2671
        %v2673 = vand.u32 %v2672, 4294901760
        %2674 = vmatpush1.msra.mxu0 %v2673
        %2675 = vmatprep.subr.mxu0 0.0
        %v2676 = vand.u32 %v2213, 4294901760
        %v2677 = vsub.f32 %v2213, %v2676
        %v2678 = vand.u32 %v2677, 4294901760
        %2679 = vmatpush1.msra.mxu0 %v2678
        %2680 = vmatprep.subr.mxu0 0.0
        %v2681 = vand.u32 %v2214, 4294901760
        %v2682 = vsub.f32 %v2214, %v2681
        %v2683 = vand.u32 %v2682, 4294901760
        %2684 = vmatpush1.msra.mxu0 %v2683
        %2685 = vmatprep.subr.mxu0 0.0
        %v2686 = vand.u32 %v2215, 4294901760
        %v2687 = vsub.f32 %v2215, %v2686
        %v2688 = vand.u32 %v2687, 4294901760
        %2689 = vmatpush1.msra.mxu0 %v2688
        %2690 = vmatprep.subr.mxu0 0.0
        %v2691 = vand.u32 %v2216, 4294901760
        %v2692 = vsub.f32 %v2216, %v2691
        %v2693 = vand.u32 %v2692, 4294901760
        %2694 = vmatpush1.msra.mxu0 %v2693
        %2695 = vmatprep.subr.mxu0 0.0
        %v2696 = vand.u32 %v2217, 4294901760
        %v2697 = vsub.f32 %v2217, %v2696
        %v2698 = vand.u32 %v2697, 4294901760
        %2699 = vmatpush1.msra.mxu0 %v2698
        %2700 = vmatprep.subr.mxu0 0.0
        %v2701 = vand.u32 %v2218, 4294901760
        %v2702 = vsub.f32 %v2218, %v2701
        %v2703 = vand.u32 %v2702, 4294901760
        %2704 = vmatpush1.msra.mxu0 %v2703
        %2705 = vmatprep.subr.mxu0 0.0
        %v2706 = vand.u32 %v2219, 4294901760
        %v2707 = vsub.f32 %v2219, %v2706
        %v2708 = vand.u32 %v2707, 4294901760
        %2709 = vmatpush1.msra.mxu0 %v2708
        %2710 = vmatprep.subr.mxu0 0.0
        %v2711 = vand.u32 %v2220, 4294901760
        %v2712 = vsub.f32 %v2220, %v2711
        %v2713 = vand.u32 %v2712, 4294901760
        %2714 = vmatpush1.msra.mxu0 %v2713
        %2715 = vmatprep.subr.mxu0 0.0
        %v2716 = vand.u32 %v2221, 4294901760
        %v2717 = vsub.f32 %v2221, %v2716
        %v2718 = vand.u32 %v2717, 4294901760
        %2719 = vmatpush1.msra.mxu0 %v2718
        %2720 = vmatprep.subr.mxu0 0.0
        %v2721 = vand.u32 %v2222, 4294901760
        %v2722 = vsub.f32 %v2222, %v2721
        %v2723 = vand.u32 %v2722, 4294901760
        %2724 = vmatpush1.msra.mxu0 %v2723
        %2725 = vmatprep.subr.mxu0 0.0
        %v2726 = vand.u32 %v2223, 4294901760
        %v2727 = vsub.f32 %v2223, %v2726
        %v2728 = vand.u32 %v2727, 4294901760
        %2729 = vmatpush1.msra.mxu0 %v2728
        %2730 = vmatprep.subr.mxu0 0.0
        %v2731 = vand.u32 %v2224, 4294901760
        %v2732 = vsub.f32 %v2224, %v2731
        %v2733 = vand.u32 %v2732, 4294901760
        %2734 = vmatpush1.msra.mxu0 %v2733
        %2735 = vmatprep.subr.mxu0 0.0
        %v2736 = vand.u32 %v2225, 4294901760
        %v2737 = vsub.f32 %v2225, %v2736
        %v2738 = vand.u32 %v2737, 4294901760
        %2739 = vmatpush1.msra.mxu0 %v2738
        %2740 = vmatprep.subr.mxu0 0.0
        %v2741 = vand.u32 %v2226, 4294901760
        %v2742 = vsub.f32 %v2226, %v2741
        %v2743 = vand.u32 %v2742, 4294901760
        %2744 = vmatpush1.msra.mxu0 %v2743
        %2745 = vmatprep.subr.mxu0 0.0
        %v2746 = vand.u32 %v2227, 4294901760
        %v2747 = vsub.f32 %v2227, %v2746
        %v2748 = vand.u32 %v2747, 4294901760
        %2749 = vmatpush1.msra.mxu0 %v2748
        %2750 = vmatprep.subr.mxu0 0.0
        %2751 = vmatpush1.msra.mxu0 0.0
        %2752 = vmatprep.subr.mxu0 0.0
        %2753 = vmatpush1.msra.mxu0 0.0
        %2754 = vmatprep.subr.mxu0 0.0
        %2755 = vmatpush1.msra.mxu0 0.0
        %2756 = vmatprep.subr.mxu0 0.0
        %2757 = vmatpush1.msra.mxu0 0.0
        %2758 = vmatprep.subr.mxu0 0.0
        %2759 = vmatpush1.msra.mxu0 0.0
        %2760 = vmatprep.subr.mxu0 0.0
        %2761 = vmatpush1.msra.mxu0 0.0
        %2762 = vmatprep.subr.mxu0 0.0
        %2763 = vmatpush1.msra.mxu0 0.0
        %2764 = vmatprep.subr.mxu0 0.0
        %2765 = vmatpush1.msra.mxu0 0.0
        %2766 = vmatprep.subr.mxu0 0.0
        %2767 = vmatpush1.msra.mxu0 0.0
        %2768 = vmatprep.subr.mxu0 0.0
        %2769 = vmatpush1.msra.mxu0 0.0
        %2770 = vmatprep.subr.mxu0 0.0
        %2771 = vmatpush1.msra.mxu0 0.0
        %2772 = vmatprep.subr.mxu0 0.0
        %2773 = vmatpush1.msra.mxu0 0.0
        %2774 = vmatprep.subr.mxu0 0.0
        %2775 = vmatpush1.msra.mxu0 0.0
        %2776 = vmatprep.subr.mxu0 0.0
        %2777 = vmatpush1.msra.mxu0 0.0
        %2778 = vmatprep.subr.mxu0 0.0
        %2779 = vmatpush1.msra.mxu0 0.0
        %2780 = vmatprep.subr.mxu0 0.0
        %2781 = vmatpush1.msra.mxu0 0.0
        %2782 = vmatprep.mubr.f32.mxu0 0.0
        %v2783 = vand.u32 %v2211, 4294901760
        %2784 = vmatmul.mubr.f32.gmra.mrb[0].mxu0 %v2783
        %v2785 = vpop.f32.mrb[0].mxu0
        %v2786 = vadd.f32 %v2667, %v2785
        %v2787 = vpop.f32.mrb[0].mxu0
        %2788 = vdwg.mxu0
        %2789 = vmatprep.subr.mxu0 0.0
        %v2790 = vand.u32 %v2212, 4294901760
        %2791 = vmatpush1.msra.mxu0 %v2790
        %2792 = vmatprep.subr.mxu0 0.0
        %v2793 = vand.u32 %v2213, 4294901760
        %2794 = vmatpush1.msra.mxu0 %v2793
        %2795 = vmatprep.subr.mxu0 0.0
        %v2796 = vand.u32 %v2214, 4294901760
        %2797 = vmatpush1.msra.mxu0 %v2796
        %2798 = vmatprep.subr.mxu0 0.0
        %v2799 = vand.u32 %v2215, 4294901760
        %2800 = vmatpush1.msra.mxu0 %v2799
        %2801 = vmatprep.subr.mxu0 0.0
        %v2802 = vand.u32 %v2216, 4294901760
        %2803 = vmatpush1.msra.mxu0 %v2802
        %2804 = vmatprep.subr.mxu0 0.0
        %v2805 = vand.u32 %v2217, 4294901760
        %2806 = vmatpush1.msra.mxu0 %v2805
        %2807 = vmatprep.subr.mxu0 0.0
        %v2808 = vand.u32 %v2218, 4294901760
        %2809 = vmatpush1.msra.mxu0 %v2808
        %2810 = vmatprep.subr.mxu0 0.0
        %v2811 = vand.u32 %v2219, 4294901760
        %2812 = vmatpush1.msra.mxu0 %v2811
        %2813 = vmatprep.subr.mxu0 0.0
        %v2814 = vand.u32 %v2220, 4294901760
        %2815 = vmatpush1.msra.mxu0 %v2814
        %2816 = vmatprep.subr.mxu0 0.0
        %v2817 = vand.u32 %v2221, 4294901760
        %2818 = vmatpush1.msra.mxu0 %v2817
        %2819 = vmatprep.subr.mxu0 0.0
        %v2820 = vand.u32 %v2222, 4294901760
        %2821 = vmatpush1.msra.mxu0 %v2820
        %2822 = vmatprep.subr.mxu0 0.0
        %v2823 = vand.u32 %v2223, 4294901760
        %2824 = vmatpush1.msra.mxu0 %v2823
        %2825 = vmatprep.subr.mxu0 0.0
        %v2826 = vand.u32 %v2224, 4294901760
        %2827 = vmatpush1.msra.mxu0 %v2826
        %2828 = vmatprep.subr.mxu0 0.0
        %v2829 = vand.u32 %v2225, 4294901760
        %2830 = vmatpush1.msra.mxu0 %v2829
        %2831 = vmatprep.subr.mxu0 0.0
        %v2832 = vand.u32 %v2226, 4294901760
        %2833 = vmatpush1.msra.mxu0 %v2832
        %2834 = vmatprep.subr.mxu0 0.0
        %v2835 = vand.u32 %v2227, 4294901760
        %2836 = vmatpush1.msra.mxu0 %v2835
        %2837 = vmatprep.subr.mxu0 0.0
        %2838 = vmatpush1.msra.mxu0 0.0
        %2839 = vmatprep.subr.mxu0 0.0
        %2840 = vmatpush1.msra.mxu0 0.0
        %2841 = vmatprep.subr.mxu0 0.0
        %2842 = vmatpush1.msra.mxu0 0.0
        %2843 = vmatprep.subr.mxu0 0.0
        %2844 = vmatpush1.msra.mxu0 0.0
        %2845 = vmatprep.subr.mxu0 0.0
        %2846 = vmatpush1.msra.mxu0 0.0
        %2847 = vmatprep.subr.mxu0 0.0
        %2848 = vmatpush1.msra.mxu0 0.0
        %2849 = vmatprep.subr.mxu0 0.0
        %2850 = vmatpush1.msra.mxu0 0.0
        %2851 = vmatprep.subr.mxu0 0.0
        %2852 = vmatpush1.msra.mxu0 0.0
        %2853 = vmatprep.subr.mxu0 0.0
        %2854 = vmatpush1.msra.mxu0 0.0
        %2855 = vmatprep.subr.mxu0 0.0
        %2856 = vmatpush1.msra.mxu0 0.0
        %2857 = vmatprep.subr.mxu0 0.0
        %2858 = vmatpush1.msra.mxu0 0.0
        %2859 = vmatprep.subr.mxu0 0.0
        %2860 = vmatpush1.msra.mxu0 0.0
        %2861 = vmatprep.subr.mxu0 0.0
        %2862 = vmatpush1.msra.mxu0 0.0
        %2863 = vmatprep.subr.mxu0 0.0
        %2864 = vmatpush1.msra.mxu0 0.0
        %2865 = vmatprep.subr.mxu0 0.0
        %2866 = vmatpush1.msra.mxu0 0.0
        %2867 = vmatprep.subr.mxu0 0.0
        %2868 = vmatpush1.msra.mxu0 0.0
        %2869 = vmatprep.mubr.f32.mxu0 0.0
        %v2870 = vand.u32 %v2211, 4294901760
        %2871 = vmatmul.mubr.f32.gmra.mrb[0].mxu0 %v2870
        %v2872 = vpop.f32.mrb[0].mxu0
        %v2873 = vadd.f32 %v2786, %v2872
        %v2874 = vpop.f32.mrb[0].mxu0
        %2875 = vdwg.mxu0
        %v2876 = vmax.f32 %v2873, 0.0
        %v2877 = vmul.f32 %v2876, %v2876
        %v2878 = vmul.f32 %v2877, %v2876
        %v2879 = vadd.f32 %v2878, %v1544
        %v2880 = vld [vmem:[%s9] sm:$0xff]
        %v2881 = vld [vmem:[%s9 + $0x8] sm:$0xff]
        %v2882 = vld [vmem:[%s9 + $0x10] sm:$0xff]
        %v2883 = vld [vmem:[%s9 + $0x18] sm:$0xff]
        %v2884 = vld [vmem:[%s9 + $0x20] sm:$0xff]
        %v2885 = vld [vmem:[%s9 + $0x28] sm:$0xff]
        %v2886 = vld [vmem:[%s9 + $0x30] sm:$0xff]
        %v2887 = vld [vmem:[%s9 + $0x38] sm:$0xff]
        %v2888 = vld [vmem:[%s9 + $0x40] sm:$0xff]
        %v2889 = vld [vmem:[%s9 + $0x48] sm:$0xff]
        %v2890 = vld [vmem:[%s9 + $0x50] sm:$0xff]
        %v2891 = vld [vmem:[%s9 + $0x58] sm:$0xff]
        %v2892 = vld [vmem:[%s9 + $0x60] sm:$0xff]
        %v2893 = vld [vmem:[%s9 + $0x68] sm:$0xff]
        %v2894 = vld [vmem:[%s9 + $0x70] sm:$0xff]
        %v2895 = vld [vmem:[%s9 + $0x78] sm:$0xff]
        %v2896 = vld [vmem:[%s10] sm:$0x1]
        %v2898 = vlaneseq
        %v2899 = vshrl.u32 %v2898, 7
        %v2900 = vsub.s32 0, %v2899
        %v2901 = vrot.slane %v2896, %v2900
        %2903 = vmatprep.subr.mxu0 0.0
        %v2904 = vand.u32 %v2880, 4294901760
        %2905 = vmatpush1.msra.mxu0 %v2904
        %2906 = vmatprep.subr.mxu0 0.0
        %v2907 = vand.u32 %v2881, 4294901760
        %2908 = vmatpush1.msra.mxu0 %v2907
        %2909 = vmatprep.subr.mxu0 0.0
        %v2910 = vand.u32 %v2882, 4294901760
        %2911 = vmatpush1.msra.mxu0 %v2910
        %2912 = vmatprep.subr.mxu0 0.0
        %v2913 = vand.u32 %v2883, 4294901760
        %2914 = vmatpush1.msra.mxu0 %v2913
        %2915 = vmatprep.subr.mxu0 0.0
        %v2916 = vand.u32 %v2884, 4294901760
        %2917 = vmatpush1.msra.mxu0 %v2916
        %2918 = vmatprep.subr.mxu0 0.0
        %v2919 = vand.u32 %v2885, 4294901760
        %2920 = vmatpush1.msra.mxu0 %v2919
        %2921 = vmatprep.subr.mxu0 0.0
        %v2922 = vand.u32 %v2886, 4294901760
        %2923 = vmatpush1.msra.mxu0 %v2922
        %2924 = vmatprep.subr.mxu0 0.0
        %v2925 = vand.u32 %v2887, 4294901760
        %2926 = vmatpush1.msra.mxu0 %v2925
        %2927 = vmatprep.subr.mxu0 0.0
        %v2928 = vand.u32 %v2888, 4294901760
        %2929 = vmatpush1.msra.mxu0 %v2928
        %2930 = vmatprep.subr.mxu0 0.0
        %v2931 = vand.u32 %v2889, 4294901760
        %2932 = vmatpush1.msra.mxu0 %v2931
        %2933 = vmatprep.subr.mxu0 0.0
        %v2934 = vand.u32 %v2890, 4294901760
        %2935 = vmatpush1.msra.mxu0 %v2934
        %2936 = vmatprep.subr.mxu0 0.0
        %v2937 = vand.u32 %v2891, 4294901760
        %2938 = vmatpush1.msra.mxu0 %v2937
        %2939 = vmatprep.subr.mxu0 0.0
        %v2940 = vand.u32 %v2892, 4294901760
        %2941 = vmatpush1.msra.mxu0 %v2940
        %2942 = vmatprep.subr.mxu0 0.0
        %v2943 = vand.u32 %v2893, 4294901760
        %2944 = vmatpush1.msra.mxu0 %v2943
        %2945 = vmatprep.subr.mxu0 0.0
        %v2946 = vand.u32 %v2894, 4294901760
        %2947 = vmatpush1.msra.mxu0 %v2946
        %2948 = vmatprep.subr.mxu0 0.0
        %v2949 = vand.u32 %v2895, 4294901760
        %2950 = vmatpush1.msra.mxu0 %v2949
        %2951 = vmatprep.subr.mxu0 0.0
        %2952 = vmatpush1.msra.mxu0 0.0
        %2953 = vmatprep.subr.mxu0 0.0
        %2954 = vmatpush1.msra.mxu0 0.0
        %2955 = vmatprep.subr.mxu0 0.0
        %2956 = vmatpush1.msra.mxu0 0.0
        %2957 = vmatprep.subr.mxu0 0.0
        %2958 = vmatpush1.msra.mxu0 0.0
        %2959 = vmatprep.subr.mxu0 0.0
        %2960 = vmatpush1.msra.mxu0 0.0
        %2961 = vmatprep.subr.mxu0 0.0
        %2962 = vmatpush1.msra.mxu0 0.0
        %2963 = vmatprep.subr.mxu0 0.0
        %2964 = vmatpush1.msra.mxu0 0.0
        %2965 = vmatprep.subr.mxu0 0.0
        %2966 = vmatpush1.msra.mxu0 0.0
        %2967 = vmatprep.subr.mxu0 0.0
        %2968 = vmatpush1.msra.mxu0 0.0
        %2969 = vmatprep.subr.mxu0 0.0
        %2970 = vmatpush1.msra.mxu0 0.0
        %2971 = vmatprep.subr.mxu0 0.0
        %2972 = vmatpush1.msra.mxu0 0.0
        %2973 = vmatprep.subr.mxu0 0.0
        %2974 = vmatpush1.msra.mxu0 0.0
        %2975 = vmatprep.subr.mxu0 0.0
        %2976 = vmatpush1.msra.mxu0 0.0
        %2977 = vmatprep.subr.mxu0 0.0
        %2978 = vmatpush1.msra.mxu0 0.0
        %2979 = vmatprep.subr.mxu0 0.0
        %2980 = vmatpush1.msra.mxu0 0.0
        %2981 = vmatprep.subr.mxu0 0.0
        %2982 = vmatpush1.msra.mxu0 0.0
        %2983 = vmatprep.mubr.f32.mxu0 0.0
        %v2984 = vand.u32 %v2879, 4294901760
        %v2985 = vsub.f32 %v2879, %v2984
        %v2986 = vand.u32 %v2985, 4294901760
        %v2987 = vsub.f32 %v2985, %v2986
        %v2988 = vand.u32 %v2987, 4294901760
        %2989 = vmatmul.mubr.f32.gmra.mrb[0].mxu0 %v2988
        %v2990 = vpop.f32.mrb[0].mxu0
        %v2991 = vadd.f32 %v2901, %v2990
        %v2992 = vpop.f32.mrb[0].mxu0
        %2993 = vdwg.mxu0
        %2994 = vmatprep.subr.mxu0 0.0
        %v2995 = vand.u32 %v2880, 4294901760
        %v2996 = vsub.f32 %v2880, %v2995
        %v2997 = vand.u32 %v2996, 4294901760
        %v2998 = vsub.f32 %v2996, %v2997
        %v2999 = vand.u32 %v2998, 4294901760
        %3000 = vmatpush1.msra.mxu0 %v2999
        %3001 = vmatprep.subr.mxu0 0.0
        %v3002 = vand.u32 %v2881, 4294901760
        %v3003 = vsub.f32 %v2881, %v3002
        %v3004 = vand.u32 %v3003, 4294901760
        %v3005 = vsub.f32 %v3003, %v3004
        %v3006 = vand.u32 %v3005, 4294901760
        %3007 = vmatpush1.msra.mxu0 %v3006
        %3008 = vmatprep.subr.mxu0 0.0
        %v3009 = vand.u32 %v2882, 4294901760
        %v3010 = vsub.f32 %v2882, %v3009
        %v3011 = vand.u32 %v3010, 4294901760
        %v3012 = vsub.f32 %v3010, %v3011
        %v3013 = vand.u32 %v3012, 4294901760
        %3014 = vmatpush1.msra.mxu0 %v3013
        %3015 = vmatprep.subr.mxu0 0.0
        %v3016 = vand.u32 %v2883, 4294901760
        %v3017 = vsub.f32 %v2883, %v3016
        %v3018 = vand.u32 %v3017, 4294901760
        %v3019 = vsub.f32 %v3017, %v3018
        %v3020 = vand.u32 %v3019, 4294901760
        %3021 = vmatpush1.msra.mxu0 %v3020
        %3022 = vmatprep.subr.mxu0 0.0
        %v3023 = vand.u32 %v2884, 4294901760
        %v3024 = vsub.f32 %v2884, %v3023
        %v3025 = vand.u32 %v3024, 4294901760
        %v3026 = vsub.f32 %v3024, %v3025
        %v3027 = vand.u32 %v3026, 4294901760
        %3028 = vmatpush1.msra.mxu0 %v3027
        %3029 = vmatprep.subr.mxu0 0.0
        %v3030 = vand.u32 %v2885, 4294901760
        %v3031 = vsub.f32 %v2885, %v3030
        %v3032 = vand.u32 %v3031, 4294901760
        %v3033 = vsub.f32 %v3031, %v3032
        %v3034 = vand.u32 %v3033, 4294901760
        %3035 = vmatpush1.msra.mxu0 %v3034
        %3036 = vmatprep.subr.mxu0 0.0
        %v3037 = vand.u32 %v2886, 4294901760
        %v3038 = vsub.f32 %v2886, %v3037
        %v3039 = vand.u32 %v3038, 4294901760
        %v3040 = vsub.f32 %v3038, %v3039
        %v3041 = vand.u32 %v3040, 4294901760
        %3042 = vmatpush1.msra.mxu0 %v3041
        %3043 = vmatprep.subr.mxu0 0.0
        %v3044 = vand.u32 %v2887, 4294901760
        %v3045 = vsub.f32 %v2887, %v3044
        %v3046 = vand.u32 %v3045, 4294901760
        %v3047 = vsub.f32 %v3045, %v3046
        %v3048 = vand.u32 %v3047, 4294901760
        %3049 = vmatpush1.msra.mxu0 %v3048
        %3050 = vmatprep.subr.mxu0 0.0
        %v3051 = vand.u32 %v2888, 4294901760
        %v3052 = vsub.f32 %v2888, %v3051
        %v3053 = vand.u32 %v3052, 4294901760
        %v3054 = vsub.f32 %v3052, %v3053
        %v3055 = vand.u32 %v3054, 4294901760
        %3056 = vmatpush1.msra.mxu0 %v3055
        %3057 = vmatprep.subr.mxu0 0.0
        %v3058 = vand.u32 %v2889, 4294901760
        %v3059 = vsub.f32 %v2889, %v3058
        %v3060 = vand.u32 %v3059, 4294901760
        %v3061 = vsub.f32 %v3059, %v3060
        %v3062 = vand.u32 %v3061, 4294901760
        %3063 = vmatpush1.msra.mxu0 %v3062
        %3064 = vmatprep.subr.mxu0 0.0
        %v3065 = vand.u32 %v2890, 4294901760
        %v3066 = vsub.f32 %v2890, %v3065
        %v3067 = vand.u32 %v3066, 4294901760
        %v3068 = vsub.f32 %v3066, %v3067
        %v3069 = vand.u32 %v3068, 4294901760
        %3070 = vmatpush1.msra.mxu0 %v3069
        %3071 = vmatprep.subr.mxu0 0.0
        %v3072 = vand.u32 %v2891, 4294901760
        %v3073 = vsub.f32 %v2891, %v3072
        %v3074 = vand.u32 %v3073, 4294901760
        %v3075 = vsub.f32 %v3073, %v3074
        %v3076 = vand.u32 %v3075, 4294901760
        %3077 = vmatpush1.msra.mxu0 %v3076
        %3078 = vmatprep.subr.mxu0 0.0
        %v3079 = vand.u32 %v2892, 4294901760
        %v3080 = vsub.f32 %v2892, %v3079
        %v3081 = vand.u32 %v3080, 4294901760
        %v3082 = vsub.f32 %v3080, %v3081
        %v3083 = vand.u32 %v3082, 4294901760
        %3084 = vmatpush1.msra.mxu0 %v3083
        %3085 = vmatprep.subr.mxu0 0.0
        %v3086 = vand.u32 %v2893, 4294901760
        %v3087 = vsub.f32 %v2893, %v3086
        %v3088 = vand.u32 %v3087, 4294901760
        %v3089 = vsub.f32 %v3087, %v3088
        %v3090 = vand.u32 %v3089, 4294901760
        %3091 = vmatpush1.msra.mxu0 %v3090
        %3092 = vmatprep.subr.mxu0 0.0
        %v3093 = vand.u32 %v2894, 4294901760
        %v3094 = vsub.f32 %v2894, %v3093
        %v3095 = vand.u32 %v3094, 4294901760
        %v3096 = vsub.f32 %v3094, %v3095
        %v3097 = vand.u32 %v3096, 4294901760
        %3098 = vmatpush1.msra.mxu0 %v3097
        %3099 = vmatprep.subr.mxu0 0.0
        %v3100 = vand.u32 %v2895, 4294901760
        %v3101 = vsub.f32 %v2895, %v3100
        %v3102 = vand.u32 %v3101, 4294901760
        %v3103 = vsub.f32 %v3101, %v3102
        %v3104 = vand.u32 %v3103, 4294901760
        %3105 = vmatpush1.msra.mxu0 %v3104
        %3106 = vmatprep.subr.mxu0 0.0
        %3107 = vmatpush1.msra.mxu0 0.0
        %3108 = vmatprep.subr.mxu0 0.0
        %3109 = vmatpush1.msra.mxu0 0.0
        %3110 = vmatprep.subr.mxu0 0.0
        %3111 = vmatpush1.msra.mxu0 0.0
        %3112 = vmatprep.subr.mxu0 0.0
        %3113 = vmatpush1.msra.mxu0 0.0
        %3114 = vmatprep.subr.mxu0 0.0
        %3115 = vmatpush1.msra.mxu0 0.0
        %3116 = vmatprep.subr.mxu0 0.0
        %3117 = vmatpush1.msra.mxu0 0.0
        %3118 = vmatprep.subr.mxu0 0.0
        %3119 = vmatpush1.msra.mxu0 0.0
        %3120 = vmatprep.subr.mxu0 0.0
        %3121 = vmatpush1.msra.mxu0 0.0
        %3122 = vmatprep.subr.mxu0 0.0
        %3123 = vmatpush1.msra.mxu0 0.0
        %3124 = vmatprep.subr.mxu0 0.0
        %3125 = vmatpush1.msra.mxu0 0.0
        %3126 = vmatprep.subr.mxu0 0.0
        %3127 = vmatpush1.msra.mxu0 0.0
        %3128 = vmatprep.subr.mxu0 0.0
        %3129 = vmatpush1.msra.mxu0 0.0
        %3130 = vmatprep.subr.mxu0 0.0
        %3131 = vmatpush1.msra.mxu0 0.0
        %3132 = vmatprep.subr.mxu0 0.0
        %3133 = vmatpush1.msra.mxu0 0.0
        %3134 = vmatprep.subr.mxu0 0.0
        %3135 = vmatpush1.msra.mxu0 0.0
        %3136 = vmatprep.subr.mxu0 0.0
        %3137 = vmatpush1.msra.mxu0 0.0
        %3138 = vmatprep.mubr.f32.mxu0 0.0
        %v3139 = vand.u32 %v2879, 4294901760
        %3140 = vmatmul.mubr.f32.gmra.mrb[0].mxu0 %v3139
        %v3141 = vpop.f32.mrb[0].mxu0
        %v3142 = vadd.f32 %v2991, %v3141
        %v3143 = vpop.f32.mrb[0].mxu0
        %3144 = vdwg.mxu0
        %3145 = vmatprep.subr.mxu0 0.0
        %v3146 = vand.u32 %v2880, 4294901760
        %v3147 = vsub.f32 %v2880, %v3146
        %3148 = vmatpush1.msra.mxu0 %v3147
        %3149 = vmatprep.subr.mxu0 0.0
        %v3150 = vand.u32 %v2881, 4294901760
        %v3151 = vsub.f32 %v2881, %v3150
        %3152 = vmatpush1.msra.mxu0 %v3151
        %3153 = vmatprep.subr.mxu0 0.0
        %v3154 = vand.u32 %v2882, 4294901760
        %v3155 = vsub.f32 %v2882, %v3154
        %3156 = vmatpush1.msra.mxu0 %v3155
        %3157 = vmatprep.subr.mxu0 0.0
        %v3158 = vand.u32 %v2883, 4294901760
        %v3159 = vsub.f32 %v2883, %v3158
        %3160 = vmatpush1.msra.mxu0 %v3159
        %3161 = vmatprep.subr.mxu0 0.0
        %v3162 = vand.u32 %v2884, 4294901760
        %v3163 = vsub.f32 %v2884, %v3162
        %3164 = vmatpush1.msra.mxu0 %v3163
        %3165 = vmatprep.subr.mxu0 0.0
        %v3166 = vand.u32 %v2885, 4294901760
        %v3167 = vsub.f32 %v2885, %v3166
        %3168 = vmatpush1.msra.mxu0 %v3167
        %3169 = vmatprep.subr.mxu0 0.0
        %v3170 = vand.u32 %v2886, 4294901760
        %v3171 = vsub.f32 %v2886, %v3170
        %3172 = vmatpush1.msra.mxu0 %v3171
        %3173 = vmatprep.subr.mxu0 0.0
        %v3174 = vand.u32 %v2887, 4294901760
        %v3175 = vsub.f32 %v2887, %v3174
        %3176 = vmatpush1.msra.mxu0 %v3175
        %3177 = vmatprep.subr.mxu0 0.0
        %v3178 = vand.u32 %v2888, 4294901760
        %v3179 = vsub.f32 %v2888, %v3178
        %3180 = vmatpush1.msra.mxu0 %v3179
        %3181 = vmatprep.subr.mxu0 0.0
        %v3182 = vand.u32 %v2889, 4294901760
        %v3183 = vsub.f32 %v2889, %v3182
        %3184 = vmatpush1.msra.mxu0 %v3183
        %3185 = vmatprep.subr.mxu0 0.0
        %v3186 = vand.u32 %v2890, 4294901760
        %v3187 = vsub.f32 %v2890, %v3186
        %3188 = vmatpush1.msra.mxu0 %v3187
        %3189 = vmatprep.subr.mxu0 0.0
        %v3190 = vand.u32 %v2891, 4294901760
        %v3191 = vsub.f32 %v2891, %v3190
        %3192 = vmatpush1.msra.mxu0 %v3191
        %3193 = vmatprep.subr.mxu0 0.0
        %v3194 = vand.u32 %v2892, 4294901760
        %v3195 = vsub.f32 %v2892, %v3194
        %3196 = vmatpush1.msra.mxu0 %v3195
        %3197 = vmatprep.subr.mxu0 0.0
        %v3198 = vand.u32 %v2893, 4294901760
        %v3199 = vsub.f32 %v2893, %v3198
        %3200 = vmatpush1.msra.mxu0 %v3199
        %3201 = vmatprep.subr.mxu0 0.0
        %v3202 = vand.u32 %v2894, 4294901760
        %v3203 = vsub.f32 %v2894, %v3202
        %3204 = vmatpush1.msra.mxu0 %v3203
        %3205 = vmatprep.subr.mxu0 0.0
        %v3206 = vand.u32 %v2895, 4294901760
        %v3207 = vsub.f32 %v2895, %v3206
        %3208 = vmatpush1.msra.mxu0 %v3207
        %3209 = vmatprep.subr.mxu0 0.0
        %3210 = vmatpush1.msra.mxu0 0.0
        %3211 = vmatprep.subr.mxu0 0.0
        %3212 = vmatpush1.msra.mxu0 0.0
        %3213 = vmatprep.subr.mxu0 0.0
        %3214 = vmatpush1.msra.mxu0 0.0
        %3215 = vmatprep.subr.mxu0 0.0
        %3216 = vmatpush1.msra.mxu0 0.0
        %3217 = vmatprep.subr.mxu0 0.0
        %3218 = vmatpush1.msra.mxu0 0.0
        %3219 = vmatprep.subr.mxu0 0.0
        %3220 = vmatpush1.msra.mxu0 0.0
        %3221 = vmatprep.subr.mxu0 0.0
        %3222 = vmatpush1.msra.mxu0 0.0
        %3223 = vmatprep.subr.mxu0 0.0
        %3224 = vmatpush1.msra.mxu0 0.0
        %3225 = vmatprep.subr.mxu0 0.0
        %3226 = vmatpush1.msra.mxu0 0.0
        %3227 = vmatprep.subr.mxu0 0.0
        %3228 = vmatpush1.msra.mxu0 0.0
        %3229 = vmatprep.subr.mxu0 0.0
        %3230 = vmatpush1.msra.mxu0 0.0
        %3231 = vmatprep.subr.mxu0 0.0
        %3232 = vmatpush1.msra.mxu0 0.0
        %3233 = vmatprep.subr.mxu0 0.0
        %3234 = vmatpush1.msra.mxu0 0.0
        %3235 = vmatprep.subr.mxu0 0.0
        %3236 = vmatpush1.msra.mxu0 0.0
        %3237 = vmatprep.subr.mxu0 0.0
        %3238 = vmatpush1.msra.mxu0 0.0
        %3239 = vmatprep.subr.mxu0 0.0
        %3240 = vmatpush1.msra.mxu0 0.0
        %3241 = vmatprep.mubr.f32.mxu0 0.0
        %v3242 = vand.u32 %v2879, 4294901760
        %v3243 = vsub.f32 %v2879, %v3242
        %3244 = vmatmul.mubr.f32.gmra.mrb[0].mxu0 %v3243
        %v3245 = vpop.f32.mrb[0].mxu0
        %v3246 = vadd.f32 %v3142, %v3245
        %v3247 = vpop.f32.mrb[0].mxu0
        %3248 = vdwg.mxu0
        %3249 = vmatprep.subr.mxu0 0.0
        %v3250 = vand.u32 %v2880, 4294901760
        %3251 = vmatpush1.msra.mxu0 %v3250
        %3252 = vmatprep.subr.mxu0 0.0
        %v3253 = vand.u32 %v2881, 4294901760
        %3254 = vmatpush1.msra.mxu0 %v3253
        %3255 = vmatprep.subr.mxu0 0.0
        %v3256 = vand.u32 %v2882, 4294901760
        %3257 = vmatpush1.msra.mxu0 %v3256
        %3258 = vmatprep.subr.mxu0 0.0
        %v3259 = vand.u32 %v2883, 4294901760
        %3260 = vmatpush1.msra.mxu0 %v3259
        %3261 = vmatprep.subr.mxu0 0.0
        %v3262 = vand.u32 %v2884, 4294901760
        %3263 = vmatpush1.msra.mxu0 %v3262
        %3264 = vmatprep.subr.mxu0 0.0
        %v3265 = vand.u32 %v2885, 4294901760
        %3266 = vmatpush1.msra.mxu0 %v3265
        %3267 = vmatprep.subr.mxu0 0.0
        %v3268 = vand.u32 %v2886, 4294901760
        %3269 = vmatpush1.msra.mxu0 %v3268
        %3270 = vmatprep.subr.mxu0 0.0
        %v3271 = vand.u32 %v2887, 4294901760
        %3272 = vmatpush1.msra.mxu0 %v3271
        %3273 = vmatprep.subr.mxu0 0.0
        %v3274 = vand.u32 %v2888, 4294901760
        %3275 = vmatpush1.msra.mxu0 %v3274
        %3276 = vmatprep.subr.mxu0 0.0
        %v3277 = vand.u32 %v2889, 4294901760
        %3278 = vmatpush1.msra.mxu0 %v3277
        %3279 = vmatprep.subr.mxu0 0.0
        %v3280 = vand.u32 %v2890, 4294901760
        %3281 = vmatpush1.msra.mxu0 %v3280
        %3282 = vmatprep.subr.mxu0 0.0
        %v3283 = vand.u32 %v2891, 4294901760
        %3284 = vmatpush1.msra.mxu0 %v3283
        %3285 = vmatprep.subr.mxu0 0.0
        %v3286 = vand.u32 %v2892, 4294901760
        %3287 = vmatpush1.msra.mxu0 %v3286
        %3288 = vmatprep.subr.mxu0 0.0
        %v3289 = vand.u32 %v2893, 4294901760
        %3290 = vmatpush1.msra.mxu0 %v3289
        %3291 = vmatprep.subr.mxu0 0.0
        %v3292 = vand.u32 %v2894, 4294901760
        %3293 = vmatpush1.msra.mxu0 %v3292
        %3294 = vmatprep.subr.mxu0 0.0
        %v3295 = vand.u32 %v2895, 4294901760
        %3296 = vmatpush1.msra.mxu0 %v3295
        %3297 = vmatprep.subr.mxu0 0.0
        %3298 = vmatpush1.msra.mxu0 0.0
        %3299 = vmatprep.subr.mxu0 0.0
        %3300 = vmatpush1.msra.mxu0 0.0
        %3301 = vmatprep.subr.mxu0 0.0
        %3302 = vmatpush1.msra.mxu0 0.0
        %3303 = vmatprep.subr.mxu0 0.0
        %3304 = vmatpush1.msra.mxu0 0.0
        %3305 = vmatprep.subr.mxu0 0.0
        %3306 = vmatpush1.msra.mxu0 0.0
        %3307 = vmatprep.subr.mxu0 0.0
        %3308 = vmatpush1.msra.mxu0 0.0
        %3309 = vmatprep.subr.mxu0 0.0
        %3310 = vmatpush1.msra.mxu0 0.0
        %3311 = vmatprep.subr.mxu0 0.0
        %3312 = vmatpush1.msra.mxu0 0.0
        %3313 = vmatprep.subr.mxu0 0.0
        %3314 = vmatpush1.msra.mxu0 0.0
        %3315 = vmatprep.subr.mxu0 0.0
        %3316 = vmatpush1.msra.mxu0 0.0
        %3317 = vmatprep.subr.mxu0 0.0
        %3318 = vmatpush1.msra.mxu0 0.0
        %3319 = vmatprep.subr.mxu0 0.0
        %3320 = vmatpush1.msra.mxu0 0.0
        %3321 = vmatprep.subr.mxu0 0.0
        %3322 = vmatpush1.msra.mxu0 0.0
        %3323 = vmatprep.subr.mxu0 0.0
        %3324 = vmatpush1.msra.mxu0 0.0
        %3325 = vmatprep.subr.mxu0 0.0
        %3326 = vmatpush1.msra.mxu0 0.0
        %3327 = vmatprep.subr.mxu0 0.0
        %3328 = vmatpush1.msra.mxu0 0.0
        %3329 = vmatprep.mubr.f32.mxu0 0.0
        %v3330 = vand.u32 %v2879, 4294901760
        %v3331 = vsub.f32 %v2879, %v3330
        %v3332 = vand.u32 %v3331, 4294901760
        %3333 = vmatmul.mubr.f32.gmra.mrb[0].mxu0 %v3332
        %v3334 = vpop.f32.mrb[0].mxu0
        %v3335 = vadd.f32 %v3246, %v3334
        %v3336 = vpop.f32.mrb[0].mxu0
        %3337 = vdwg.mxu0
        %3338 = vmatprep.subr.mxu0 0.0
        %v3339 = vand.u32 %v2880, 4294901760
        %v3340 = vsub.f32 %v2880, %v3339
        %v3341 = vand.u32 %v3340, 4294901760
        %3342 = vmatpush1.msra.mxu0 %v3341
        %3343 = vmatprep.subr.mxu0 0.0
        %v3344 = vand.u32 %v2881, 4294901760
        %v3345 = vsub.f32 %v2881, %v3344
        %v3346 = vand.u32 %v3345, 4294901760
        %3347 = vmatpush1.msra.mxu0 %v3346
        %3348 = vmatprep.subr.mxu0 0.0
        %v3349 = vand.u32 %v2882, 4294901760
        %v3350 = vsub.f32 %v2882, %v3349
        %v3351 = vand.u32 %v3350, 4294901760
        %3352 = vmatpush1.msra.mxu0 %v3351
        %3353 = vmatprep.subr.mxu0 0.0
        %v3354 = vand.u32 %v2883, 4294901760
        %v3355 = vsub.f32 %v2883, %v3354
        %v3356 = vand.u32 %v3355, 4294901760
        %3357 = vmatpush1.msra.mxu0 %v3356
        %3358 = vmatprep.subr.mxu0 0.0
        %v3359 = vand.u32 %v2884, 4294901760
        %v3360 = vsub.f32 %v2884, %v3359
        %v3361 = vand.u32 %v3360, 4294901760
        %3362 = vmatpush1.msra.mxu0 %v3361
        %3363 = vmatprep.subr.mxu0 0.0
        %v3364 = vand.u32 %v2885, 4294901760
        %v3365 = vsub.f32 %v2885, %v3364
        %v3366 = vand.u32 %v3365, 4294901760
        %3367 = vmatpush1.msra.mxu0 %v3366
        %3368 = vmatprep.subr.mxu0 0.0
        %v3369 = vand.u32 %v2886, 4294901760
        %v3370 = vsub.f32 %v2886, %v3369
        %v3371 = vand.u32 %v3370, 4294901760
        %3372 = vmatpush1.msra.mxu0 %v3371
        %3373 = vmatprep.subr.mxu0 0.0
        %v3374 = vand.u32 %v2887, 4294901760
        %v3375 = vsub.f32 %v2887, %v3374
        %v3376 = vand.u32 %v3375, 4294901760
        %3377 = vmatpush1.msra.mxu0 %v3376
        %3378 = vmatprep.subr.mxu0 0.0
        %v3379 = vand.u32 %v2888, 4294901760
        %v3380 = vsub.f32 %v2888, %v3379
        %v3381 = vand.u32 %v3380, 4294901760
        %3382 = vmatpush1.msra.mxu0 %v3381
        %3383 = vmatprep.subr.mxu0 0.0
        %v3384 = vand.u32 %v2889, 4294901760
        %v3385 = vsub.f32 %v2889, %v3384
        %v3386 = vand.u32 %v3385, 4294901760
        %3387 = vmatpush1.msra.mxu0 %v3386
        %3388 = vmatprep.subr.mxu0 0.0
        %v3389 = vand.u32 %v2890, 4294901760
        %v3390 = vsub.f32 %v2890, %v3389
        %v3391 = vand.u32 %v3390, 4294901760
        %3392 = vmatpush1.msra.mxu0 %v3391
        %3393 = vmatprep.subr.mxu0 0.0
        %v3394 = vand.u32 %v2891, 4294901760
        %v3395 = vsub.f32 %v2891, %v3394
        %v3396 = vand.u32 %v3395, 4294901760
        %3397 = vmatpush1.msra.mxu0 %v3396
        %3398 = vmatprep.subr.mxu0 0.0
        %v3399 = vand.u32 %v2892, 4294901760
        %v3400 = vsub.f32 %v2892, %v3399
        %v3401 = vand.u32 %v3400, 4294901760
        %3402 = vmatpush1.msra.mxu0 %v3401
        %3403 = vmatprep.subr.mxu0 0.0
        %v3404 = vand.u32 %v2893, 4294901760
        %v3405 = vsub.f32 %v2893, %v3404
        %v3406 = vand.u32 %v3405, 4294901760
        %3407 = vmatpush1.msra.mxu0 %v3406
        %3408 = vmatprep.subr.mxu0 0.0
        %v3409 = vand.u32 %v2894, 4294901760
        %v3410 = vsub.f32 %v2894, %v3409
        %v3411 = vand.u32 %v3410, 4294901760
        %3412 = vmatpush1.msra.mxu0 %v3411
        %3413 = vmatprep.subr.mxu0 0.0
        %v3414 = vand.u32 %v2895, 4294901760
        %v3415 = vsub.f32 %v2895, %v3414
        %v3416 = vand.u32 %v3415, 4294901760
        %3417 = vmatpush1.msra.mxu0 %v3416
        %3418 = vmatprep.subr.mxu0 0.0
        %3419 = vmatpush1.msra.mxu0 0.0
        %3420 = vmatprep.subr.mxu0 0.0
        %3421 = vmatpush1.msra.mxu0 0.0
        %3422 = vmatprep.subr.mxu0 0.0
        %3423 = vmatpush1.msra.mxu0 0.0
        %3424 = vmatprep.subr.mxu0 0.0
        %3425 = vmatpush1.msra.mxu0 0.0
        %3426 = vmatprep.subr.mxu0 0.0
        %3427 = vmatpush1.msra.mxu0 0.0
        %3428 = vmatprep.subr.mxu0 0.0
        %3429 = vmatpush1.msra.mxu0 0.0
        %3430 = vmatprep.subr.mxu0 0.0
        %3431 = vmatpush1.msra.mxu0 0.0
        %3432 = vmatprep.subr.mxu0 0.0
        %3433 = vmatpush1.msra.mxu0 0.0
        %3434 = vmatprep.subr.mxu0 0.0
        %3435 = vmatpush1.msra.mxu0 0.0
        %3436 = vmatprep.subr.mxu0 0.0
        %3437 = vmatpush1.msra.mxu0 0.0
        %3438 = vmatprep.subr.mxu0 0.0
        %3439 = vmatpush1.msra.mxu0 0.0
        %3440 = vmatprep.subr.mxu0 0.0
        %3441 = vmatpush1.msra.mxu0 0.0
        %3442 = vmatprep.subr.mxu0 0.0
        %3443 = vmatpush1.msra.mxu0 0.0
        %3444 = vmatprep.subr.mxu0 0.0
        %3445 = vmatpush1.msra.mxu0 0.0
        %3446 = vmatprep.subr.mxu0 0.0
        %3447 = vmatpush1.msra.mxu0 0.0
        %3448 = vmatprep.subr.mxu0 0.0
        %3449 = vmatpush1.msra.mxu0 0.0
        %3450 = vmatprep.mubr.f32.mxu0 0.0
        %v3451 = vand.u32 %v2879, 4294901760
        %3452 = vmatmul.mubr.f32.gmra.mrb[0].mxu0 %v3451
        %v3453 = vpop.f32.mrb[0].mxu0
        %v3454 = vadd.f32 %v3335, %v3453
        %v3455 = vpop.f32.mrb[0].mxu0
        %3456 = vdwg.mxu0
        %3457 = vmatprep.subr.mxu0 0.0
        %v3458 = vand.u32 %v2880, 4294901760
        %3459 = vmatpush1.msra.mxu0 %v3458
        %3460 = vmatprep.subr.mxu0 0.0
        %v3461 = vand.u32 %v2881, 4294901760
        %3462 = vmatpush1.msra.mxu0 %v3461
        %3463 = vmatprep.subr.mxu0 0.0
        %v3464 = vand.u32 %v2882, 4294901760
        %3465 = vmatpush1.msra.mxu0 %v3464
        %3466 = vmatprep.subr.mxu0 0.0
        %v3467 = vand.u32 %v2883, 4294901760
        %3468 = vmatpush1.msra.mxu0 %v3467
        %3469 = vmatprep.subr.mxu0 0.0
        %v3470 = vand.u32 %v2884, 4294901760
        %3471 = vmatpush1.msra.mxu0 %v3470
        %3472 = vmatprep.subr.mxu0 0.0
        %v3473 = vand.u32 %v2885, 4294901760
        %3474 = vmatpush1.msra.mxu0 %v3473
        %3475 = vmatprep.subr.mxu0 0.0
        %v3476 = vand.u32 %v2886, 4294901760
        %3477 = vmatpush1.msra.mxu0 %v3476
        %3478 = vmatprep.subr.mxu0 0.0
        %v3479 = vand.u32 %v2887, 4294901760
        %3480 = vmatpush1.msra.mxu0 %v3479
        %3481 = vmatprep.subr.mxu0 0.0
        %v3482 = vand.u32 %v2888, 4294901760
        %3483 = vmatpush1.msra.mxu0 %v3482
        %3484 = vmatprep.subr.mxu0 0.0
        %v3485 = vand.u32 %v2889, 4294901760
        %3486 = vmatpush1.msra.mxu0 %v3485
        %3487 = vmatprep.subr.mxu0 0.0
        %v3488 = vand.u32 %v2890, 4294901760
        %3489 = vmatpush1.msra.mxu0 %v3488
        %3490 = vmatprep.subr.mxu0 0.0
        %v3491 = vand.u32 %v2891, 4294901760
        %3492 = vmatpush1.msra.mxu0 %v3491
        %3493 = vmatprep.subr.mxu0 0.0
        %v3494 = vand.u32 %v2892, 4294901760
        %3495 = vmatpush1.msra.mxu0 %v3494
        %3496 = vmatprep.subr.mxu0 0.0
        %v3497 = vand.u32 %v2893, 4294901760
        %3498 = vmatpush1.msra.mxu0 %v3497
        %3499 = vmatprep.subr.mxu0 0.0
        %v3500 = vand.u32 %v2894, 4294901760
        %3501 = vmatpush1.msra.mxu0 %v3500
        %3502 = vmatprep.subr.mxu0 0.0
        %v3503 = vand.u32 %v2895, 4294901760
        %3504 = vmatpush1.msra.mxu0 %v3503
        %3505 = vmatprep.subr.mxu0 0.0
        %3506 = vmatpush1.msra.mxu0 0.0
        %3507 = vmatprep.subr.mxu0 0.0
        %3508 = vmatpush1.msra.mxu0 0.0
        %3509 = vmatprep.subr.mxu0 0.0
        %3510 = vmatpush1.msra.mxu0 0.0
        %3511 = vmatprep.subr.mxu0 0.0
        %3512 = vmatpush1.msra.mxu0 0.0
        %3513 = vmatprep.subr.mxu0 0.0
        %3514 = vmatpush1.msra.mxu0 0.0
        %3515 = vmatprep.subr.mxu0 0.0
        %3516 = vmatpush1.msra.mxu0 0.0
        %3517 = vmatprep.subr.mxu0 0.0
        %3518 = vmatpush1.msra.mxu0 0.0
        %3519 = vmatprep.subr.mxu0 0.0
        %3520 = vmatpush1.msra.mxu0 0.0
        %3521 = vmatprep.subr.mxu0 0.0
        %3522 = vmatpush1.msra.mxu0 0.0
        %3523 = vmatprep.subr.mxu0 0.0
        %3524 = vmatpush1.msra.mxu0 0.0
        %3525 = vmatprep.subr.mxu0 0.0
        %3526 = vmatpush1.msra.mxu0 0.0
        %3527 = vmatprep.subr.mxu0 0.0
        %3528 = vmatpush1.msra.mxu0 0.0
        %3529 = vmatprep.subr.mxu0 0.0
        %3530 = vmatpush1.msra.mxu0 0.0
        %3531 = vmatprep.subr.mxu0 0.0
        %3532 = vmatpush1.msra.mxu0 0.0
        %3533 = vmatprep.subr.mxu0 0.0
        %3534 = vmatpush1.msra.mxu0 0.0
        %3535 = vmatprep.subr.mxu0 0.0
        %3536 = vmatpush1.msra.mxu0 0.0
        %3537 = vmatprep.mubr.f32.mxu0 0.0
        %v3538 = vand.u32 %v2879, 4294901760
        %3539 = vmatmul.mubr.f32.gmra.mrb[0].mxu0 %v3538
        %v3540 = vpop.f32.mrb[0].mxu0
        %v3541 = vadd.f32 %v3454, %v3540
        %v3542 = vpop.f32.mrb[0].mxu0
        %3543 = vdwg.mxu0
        %vm3544 = vcmask 31744
        %3545 = vst.msk [vmem:[%s411] sm:$0xff] %vm3544, %v3541
        %p3546 = scmp.lt.s32.totalorder %s24, 1
        %s3547 = scalar_select %p3546, %s24, 1
        %s3548 = smul.addr %s3547, 8
        %s3549 = scalar_lea.vmem %s11, %s3548
        // Predicated region
        $region73: #{deep_ritz_forward.1} parent=63 // pred_check
          %p3550 = pneg %p278
        $region74: #{deep_ritz_forward.1} parent=63 // pred_check_branch
          %3552 = sbr.rel (%p3550) target = $region76
        $region75: #{deep_ritz_forward.1} parent=63 // pred_region
          _
        $region76: #{deep_ritz_forward.1} parent=63 // pred_fallthru
          _
      $region64: #{deep_ritz_forward.1} parent=5 // pred_fallthru
        _
      %p3553 = scmp.le.s32.totalorder 2, %s19
      // Predicated region
      $region77: #{deep_ritz_forward.1} parent=5 // pred_check
        %p3554 = pneg %p3553
      $region78: #{deep_ritz_forward.1} parent=5 // pred_check_branch
        %3556 = sbr.rel (%p3554) target = $region80
      $region79: #{deep_ritz_forward.1} parent=5 // pred_region
        %s3557 = ssub.s32 %s19, 2
        // Predicated region
        $region81: #{deep_ritz_forward.1} parent=79 // pred_check
          %p3558 = pneg %p284
        $region82: #{deep_ritz_forward.1} parent=79 // pred_check_branch
          %3560 = sbr.rel (%p3558) target = $region84
        $region83: #{deep_ritz_forward.1} parent=79 // pred_region
          %p3561 = scmp.lt.s32.totalorder %s25, 1
          %s3562 = scalar_select %p3561, %s25, 1
          %s3563 = smul.addr %s3562, 8
          %s3564 = scalar_lea.vmem %s11, %s3563
        $region84: #{deep_ritz_forward.1} parent=79 // pred_fallthru
          _
      $region80: #{deep_ritz_forward.1} parent=5 // pred_fallthru
        _
    $region6: #{deep_ritz_forward.1} parent=1 // loop_footer
      %s23 = sadd.s32 1, %s19
    $region7: #{deep_ritz_forward.1} parent=1 // loop_footer_branch
      %18 = sbr.rel target = $region3
    $region8: #{deep_ritz_forward.1} parent=1 // loop_exit
      _
    %3565 = vsyncpa [#allocation4], 1
    %s3566 = scalar_lea.sflag [#allocation4], 1
    %3567 = vsyncpa %s3566, 1
    %3568 = vsyncpa [#allocation6], 1

</llo_original>
